<compile_context>
chip_gen: v6e
topology: v6e:2x2x1
jax: 0.10.0
libtpu: 0.0.40
codegen_flags: <defaults>
</compile_context>

<pallas_src>
import numpy as np
import jax
import jax.numpy as jnp
from jax.experimental import pallas as pl
from jax.experimental.pallas import tpu as pltpu

EPS = 1e-5
VMEM_LIMIT = 32 * 1024 * 1024       # explicit scoped-VMEM budget (fits v5e/v6e/v7x)
_ROW_TILE_TARGET = 256              # rows per block for the row-tiled passes


# ------------------------------ small helpers ------------------------------ #

def _compiler_params(n_axes):
    return pltpu.CompilerParams(
        dimension_semantics=("parallel",) * n_axes,
        vmem_limit_bytes=VMEM_LIMIT)


def _row_tile(m, target=_ROW_TILE_TARGET):
    """Largest power-of-two divisor of m that is <= target (>= 8), else m."""
    t = 1
    while t * 2 <= min(target, m) and m % (t * 2) == 0:
        t *= 2
    return t if t >= 8 else m


def _row_spec(tile, c):
    return pl.BlockSpec((tile, c), lambda i: (i, 0))


def _const_spec(shape):
    zeros = (0,) * len(shape)
    return pl.BlockSpec(shape, lambda i: zeros)


def _stats_spec(c):
    return pl.BlockSpec((None, 2, c), lambda i: (i, 0, 0))


# ----------------------------- Pallas kernels ------------------------------ #

def _sum_sumsq(z):
    # (rows, C) f32 -> (2, C) single-pass partial statistics for this tile.
    return jnp.concatenate([jnp.sum(z, axis=0, keepdims=True),
                            jnp.sum(z * z, axis=0, keepdims=True)], axis=0)


def _conv1x1_stats_kernel(x_ref, w_ref, st_ref):
    # Stats pass for conv1: per-tile sum / sumsq of (x @ w), f32 accumulation.
    z = jnp.dot(x_ref[...], w_ref[...], preferred_element_type=jnp.float32)
    st_ref[...] = _sum_sumsq(z)


def _conv1x1_affine_relu_kernel(x_ref, w_ref, s_ref, h_ref, o_ref):
    # Apply pass: r = relu((x @ w) * scale + shift)   (BN folded into an affine).
    z = jnp.dot(x_ref[...], w_ref[...], preferred_element_type=jnp.float32)
    o_ref[...] = jnp.maximum(z * s_ref[...] + h_ref[...], 0.0).astype(o_ref.dtype)


def _make_conv2_kernel(Fr, Fc, Sc, G, n_groups, Wo):
    """Grouped (Fr, Fc) conv over one padded input row window -> one output row.

    Inputs:  Fr refs of shape (Sc, Wph, Ni)  (W-polyphase padded rows, bf16),
             w_ref of shape (Fr, Fc, n_groups, G, G)  (bf16).
    Outputs: z_ref (Wo, Ni) bf16 conv output row, st_ref (2, Ni) f32 partial stats.
    """
    def kernel(*refs):
        row_refs = refs[:Fr]
        w_ref = refs[Fr]
        z_ref, st_ref = refs[Fr + 1], refs[Fr + 2]
        accs = [jnp.zeros((Wo, G), jnp.float32) for _ in range(n_groups)]
        for fr in range(Fr):
            for fc in range(Fc):
                # Tap (fr, fc): contiguous slice of the W-polyphase padded row.
                tap = row_refs[fr][fc % Sc, fc // Sc:fc // Sc + Wo, :]   # (Wo, Ni)
                for g in range(n_groups):
                    accs[g] = accs[g] + jnp.dot(
                        tap[:, g * G:(g + 1) * G], w_ref[fr, fc, g],
                        preferred_element_type=jnp.float32)
        acc = jnp.concatenate(accs, axis=-1)                 # (Wo, Ni) f32
        z2 = acc.astype(z_ref.dtype)
        z_ref[...] = z2
        st_ref[...] = _sum_sumsq(z2.astype(jnp.float32))
    return kernel


def _stage3_ds_kernel(z2_ref, s2_ref, h2_ref, w3_ref, xs_ref, w0_ref,
                      z3_ref, z0_ref, st3_ref, st0_ref):
    # relu(bn2-affine(z2)) -> conv3 (1x1) + stats; shortcut conv0 (1x1) + stats.
    r2 = jnp.maximum(z2_ref[...].astype(jnp.float32) * s2_ref[...] + h2_ref[...],
                     0.0)
    z3 = jnp.dot(r2.astype(jnp.bfloat16), w3_ref[...],
                 preferred_element_type=jnp.float32).astype(z3_ref.dtype)
    z3_ref[...] = z3
    st3_ref[...] = _sum_sumsq(z3.astype(jnp.float32))
    z0 = jnp.dot(xs_ref[...], w0_ref[...],
                 preferred_element_type=jnp.float32).astype(z0_ref.dtype)
    z0_ref[...] = z0
    st0_ref[...] = _sum_sumsq(z0.astype(jnp.float32))


def _stage3_id_kernel(z2_ref, s2_ref, h2_ref, w3_ref, z3_ref, st3_ref):
    r2 = jnp.maximum(z2_ref[...].astype(jnp.float32) * s2_ref[...] + h2_ref[...],
                     0.0)
    z3 = jnp.dot(r2.astype(jnp.bfloat16), w3_ref[...],
                 preferred_element_type=jnp.float32).astype(z3_ref.dtype)
    z3_ref[...] = z3
    st3_ref[...] = _sum_sumsq(z3.astype(jnp.float32))


def _final_ds_kernel(z3_ref, s3_ref, h3_ref, z0_ref, s0_ref, h0_ref, y_ref):
    r = z3_ref[...].astype(jnp.float32) * s3_ref[...] + h3_ref[...]
    sc = z0_ref[...].astype(jnp.float32) * s0_ref[...] + h0_ref[...]
    y_ref[...] = jnp.maximum(r + sc, 0.0)


def _final_id_kernel(z3_ref, s3_ref, h3_ref, x_ref, y_ref):
    r = z3_ref[...].astype(jnp.float32) * s3_ref[...] + h3_ref[...]
    y_ref[...] = jnp.maximum(r + x_ref[...].astype(jnp.float32), 0.0)


# ------------------------------- wrapper ----------------------------------- #

def _bn_affine(partials, count, gamma, beta):
    # Tiny O(C) finalize: reduce per-tile partials, fold gamma/beta + batch
    # statistics (biased variance, eps=1e-5) into one (scale, shift) per channel.
    p = partials.reshape(-1, 2, partials.shape[-1]).astype(jnp.float32)
    total = jnp.sum(p[:, 0, :], axis=0)
    total_sq = jnp.sum(p[:, 1, :], axis=0)
    mean = total / count
    var = total_sq / count - mean * mean
    scale = gamma.astype(jnp.float32) * jax.lax.rsqrt(var + EPS)
    shift = beta.astype(jnp.float32) - mean * scale
    return scale.reshape(1, -1), shift.reshape(1, -1)


def xblock_forward(x_nchw, params, Ni, No, Fr, Fc, Sr, Sc, G):
    downsample = (Sr != 1) or (Ni != No)
    N, C, H, W = x_nchw.shape
    assert C == Ni
    n_groups = Ni // G

    x_nhwc = jnp.transpose(x_nchw, (0, 2, 3, 1)).astype(jnp.float32)
    M1 = N * H * W
    x_bf = x_nhwc.reshape(M1, Ni).astype(jnp.bfloat16)

    # 1x1 conv weights as (Cin, Cout) matrices, bf16 for the MXU.
    w1m = jnp.transpose(params['w1'][:, :, 0, 0]).astype(jnp.bfloat16)
    w3m = jnp.transpose(params['w3'][:, :, 0, 0]).astype(jnp.bfloat16)

    T1 = _row_tile(M1)
    n_t1 = M1 // T1

    # ---- pass 1: conv1 batch statistics (tiled, parallel) ----
    st1 = pl.pallas_call(
        _conv1x1_stats_kernel,
        grid=(n_t1,),
        in_specs=[_row_spec(T1, Ni), _const_spec((Ni, Ni))],
        out_specs=_stats_spec(Ni),
        out_shape=jax.ShapeDtypeStruct((n_t1, 2, Ni), jnp.float32),
        compiler_params=_compiler_params(1),
    )(x_bf, w1m)
    s1, h1 = _bn_affine(st1, M1, params['g1'], params['b1'])

    # ---- pass 1b: r1 = relu(bn1(conv1(x)))  (conv recomputed, BN as affine) ----
    r1 = pl.pallas_call(
        _conv1x1_affine_relu_kernel,
        grid=(n_t1,),
        in_specs=[_row_spec(T1, Ni), _const_spec((Ni, Ni)),
                  _const_spec((1, Ni)), _const_spec((1, Ni))],
        out_specs=_row_spec(T1, Ni),
        out_shape=jax.ShapeDtypeStruct((M1, Ni), jnp.bfloat16),
        compiler_params=_compiler_params(1),
    )(x_bf, w1m, s1, h1)

    # ---- glue: zero-pad + W-polyphase re-layout (1x data movement, no im2col) ----
    Ho = (H + 2 - Fr) // Sr + 1
    Wo = (W + 2 - Fc) // Sc + 1
    M = N * Ho * Wo
    Hpad, Wpad = H + 2, W + 2
    Wph = -(-Wpad // Sc)                      # ceil(Wpad / Sc)
    pad_right = 1 + (Wph * Sc - Wpad)
    r1p = jnp.pad(r1.reshape(N, H, W, Ni),
                  ((0, 0), (1, 1), (1, pad_right), (0, 0)))
    # r1p[n, h, p, q, c] == padded_r1[n, h, q*Sc + p, c]
    r1p = jnp.transpose(r1p.reshape(N, Hpad, Wph, Sc, Ni), (0, 1, 3, 2, 4))

    # grouped conv weights: (Fr, Fc, n_groups, G_in, G_out), bf16, no zero blocks.
    w2k = jnp.transpose(params['w2'].reshape(n_groups, G, G, Fr, Fc),
                        (3, 4, 0, 2, 1)).astype(jnp.bfloat16)

    # ---- pass 2: conv2 (grouped KxK, stride (Sr,Sc), pad 1) + bn2 statistics ----
    row_specs = [
        pl.BlockSpec((None, None, Sc, Wph, Ni),
                     lambda n, h, fr=fr: (n, h * Sr + fr, 0, 0, 0))
        for fr in range(Fr)]
    z2, st2 = pl.pallas_call(
        _make_conv2_kernel(Fr, Fc, Sc, G, n_groups, Wo),
        grid=(N, Ho),
        in_specs=row_specs + [
            pl.BlockSpec((Fr, Fc, n_groups, G, G),
                         lambda n, h: (0, 0, 0, 0, 0))],
        out_specs=(pl.BlockSpec((None, None, Wo, Ni), lambda n, h: (n, h, 0, 0)),
                   pl.BlockSpec((None, None, 2, Ni), lambda n, h: (n, h, 0, 0))),
        out_shape=(jax.ShapeDtypeStruct((N, Ho, Wo, Ni), jnp.bfloat16),
                   jax.ShapeDtypeStruct((N, Ho, 2, Ni), jnp.float32)),
        compiler_params=_compiler_params(2),
    )(*([r1p] * Fr), w2k)
    s2, h2 = _bn_affine(st2, M, params['g2'], params['b2'])

    z2f = z2.reshape(M, Ni)
    T = _row_tile(M)
    n_t = M // T

    if downsample:
        # ---- pass 3 (downsample): bn2+relu2+conv3+stats3 and conv0+stats0 ----
        x_sub = x_nhwc[:, ::Sr, ::Sc, :][:, :Ho, :Wo, :]
        x_sub = x_sub.reshape(M, Ni).astype(jnp.bfloat16)
        w0m = jnp.transpose(params['w0'][:, :, 0, 0]).astype(jnp.bfloat16)
        z3, z0, st3, st0 = pl.pallas_call(
            _stage3_ds_kernel,
            grid=(n_t,),
            in_specs=[_row_spec(T, Ni), _const_spec((1, Ni)), _const_spec((1, Ni)),
                      _const_spec((Ni, No)), _row_spec(T, Ni),
                      _const_spec((Ni, No))],
            out_specs=(_row_spec(T, No), _row_spec(T, No),
                       _stats_spec(No), _stats_spec(No)),
            out_shape=(jax.ShapeDtypeStruct((M, No), jnp.bfloat16),
                       jax.ShapeDtypeStruct((M, No), jnp.bfloat16),
                       jax.ShapeDtypeStruct((n_t, 2, No), jnp.float32),
                       jax.ShapeDtypeStruct((n_t, 2, No), jnp.float32)),
            compiler_params=_compiler_params(1),
        )(z2f, s2, h2, w3m, x_sub, w0m)
        s3, h3 = _bn_affine(st3, M, params['g3'], params['b3'])
        s0, h0 = _bn_affine(st0, M, params['g0'], params['b0'])
        # ---- pass 4: bn3-affine + bn0-affine + residual add + relu3 ----
        y = pl.pallas_call(
            _final_ds_kernel,
            grid=(n_t,),
            in_specs=[_row_spec(T, No), _const_spec((1, No)), _const_spec((1, No)),
                      _row_spec(T, No), _const_spec((1, No)), _const_spec((1, No))],
            out_specs=_row_spec(T, No),
            out_shape=jax.ShapeDtypeStruct((M, No), jnp.float32),
            compiler_params=_compiler_params(1),
        )(z3, s3, h3, z0, s0, h0)
    else:
        # ---- pass 3 (identity): bn2+relu2+conv3+stats3 ----
        z3, st3 = pl.pallas_call(
            _stage3_id_kernel,
            grid=(n_t,),
            in_specs=[_row_spec(T, Ni), _const_spec((1, Ni)), _const_spec((1, Ni)),
                      _const_spec((Ni, No))],
            out_specs=(_row_spec(T, No), _stats_spec(No)),
            out_shape=(jax.ShapeDtypeStruct((M, No), jnp.bfloat16),
                       jax.ShapeDtypeStruct((n_t, 2, No), jnp.float32)),
            compiler_params=_compiler_params(1),
        )(z2f, s2, h2, w3m)
        s3, h3 = _bn_affine(st3, M, params['g3'], params['b3'])
        x_id = x_nhwc.reshape(M, No)          # identity shortcut (f32)
        # ---- pass 4: bn3-affine + identity add + relu3 ----
        y = pl.pallas_call(
            _final_id_kernel,
            grid=(n_t,),
            in_specs=[_row_spec(T, No), _const_spec((1, No)), _const_spec((1, No)),
                      _row_spec(T, No)],
            out_specs=_row_spec(T, No),
            out_shape=jax.ShapeDtypeStruct((M, No), jnp.float32),
            compiler_params=_compiler_params(1),
        )(z3, s3, h3, x_id)

    return jnp.transpose(y.reshape(N, Ho, Wo, No), (0, 3, 1, 2))   # back to NCHW


# -------------------------- params & reference ----------------------------- #

def init_params(key, Ni, No, Fr, Fc, Sr, Sc, G):
    downsample = (Sr != 1) or (Ni != No)
    k0, k1, k2, k3 = jax.random.split(key, 4)
    p = {
        'w1': 0.1 * jax.random.normal(k0, (Ni, Ni, 1, 1), jnp.float32),
        'g1': jnp.ones((Ni,), jnp.float32), 'b1': jnp.zeros((Ni,), jnp.float32),
        'w2': 0.1 * jax.random.normal(k1, (Ni, G, Fr, Fc), jnp.float32),
        'g2': jnp.ones((Ni,), jnp.float32), 'b2': jnp.zeros((Ni,), jnp.float32),
        'w3': 0.1 * jax.random.normal(k2, (No, Ni, 1, 1), jnp.float32),
        'g3': jnp.ones((No,), jnp.float32), 'b3': jnp.zeros((No,), jnp.float32),
    }
    if downsample:
        p['w0'] = 0.1 * jax.random.normal(k3, (No, Ni, 1, 1), jnp.float32)
        p['g0'] = jnp.ones((No,), jnp.float32)
        p['b0'] = jnp.zeros((No,), jnp.float32)
    return p


def xblock_reference(x, p, Ni, No, Fr, Fc, Sr, Sc, G):
    downsample = (Sr != 1) or (Ni != No)

    def conv(x, w, stride=(1, 1), padding='VALID', groups=1):
        return jax.lax.conv_general_dilated(
            x, w, window_strides=stride, padding=padding,
            dimension_numbers=('NCHW', 'OIHW', 'NCHW'),
            feature_group_count=groups)

    def bn(x, g, b):
        mean = jnp.mean(x, axis=(0, 2, 3), keepdims=True)
        var = jnp.mean(jnp.square(x - mean), axis=(0, 2, 3), keepdims=True)
        return ((x - mean) * jax.lax.rsqrt(var + EPS)
                * g.reshape(1, -1, 1, 1) + b.reshape(1, -1, 1, 1))

    r = jax.nn.relu(bn(conv(x, p['w1']), p['g1'], p['b1']))
    r = conv(r, p['w2'], stride=(Sr, Sc), padding=[(1, 1), (1, 1)],
             groups=Ni // G)
    r = jax.nn.relu(bn(r, p['g2'], p['b2']))
    r = bn(conv(r, p['w3']), p['g3'], p['b3'])
    if downsample:
        sc = bn(conv(x, p['w0'], stride=(Sr, Sc)), p['g0'], p['b0'])
    else:
        sc = x
    return jax.nn.relu(r + sc)


# --------------------------------- main ------------------------------------ #

if __name__ == "__main__":
    key = jax.random.PRNGKey(0)
    fwd = jax.jit(xblock_forward, static_argnums=(2, 3, 4, 5, 6, 7, 8))

    # Tolerances: reference is pure f32; the kernels use bf16 MXU operands and
    # bf16-stored intermediates (f32 accumulation / BN math), so allow a bit of
    # absolute slack for near-zero post-ReLU values.
    RTOL, ATOL = 2e-2, 5e-2

    # Case 1: downsample path (stride 2, channel expansion), grouped 3x3 conv.
    Ni, No, Fr, Fc, Sr, Sc, G = 4, 8, 3, 3, 2, 2, 2
    kx, kp = jax.random.split(key)
    x = jax.random.normal(kx, (2, Ni, 16, 16), jnp.float32)
    params = init_params(kp, Ni, No, Fr, Fc, Sr, Sc, G)
    y = jax.block_until_ready(fwd(x, params, Ni, No, Fr, Fc, Sr, Sc, G))
    y_ref = xblock_reference(x, params, Ni, No, Fr, Fc, Sr, Sc, G)
    np.testing.assert_allclose(np.asarray(y), np.asarray(y_ref),
                               rtol=RTOL, atol=ATOL)

    # Case 2: identity shortcut (stride 1, Ni == No).
    Ni2, No2, Sr2, Sc2 = 4, 4, 1, 1
    kx2, kp2 = jax.random.split(kp)
    x2 = jax.random.normal(kx2, (2, Ni2, 16, 16), jnp.float32)
    params2 = init_params(kp2, Ni2, No2, Fr, Fc, Sr2, Sc2, G)
    y2 = jax.block_until_ready(fwd(x2, params2, Ni2, No2, Fr, Fc, Sr2, Sc2, G))
    y2_ref = xblock_reference(x2, params2, Ni2, No2, Fr, Fc, Sr2, Sc2, G)
    np.testing.assert_allclose(np.asarray(y2), np.asarray(y2_ref),
                               rtol=RTOL, atol=ATOL)

    print("KERNEL_OK")
</pallas_src>

<mosaic_0001>
module attributes {stable_mosaic.version = 11 : i64} {
  func.func @_conv1x1_stats_kernel(%arg0: i32, %arg1: memref<256x4xbf16, #tpu.memory_space<vmem>>, %arg2: memref<4x4xbf16, #tpu.memory_space<vmem>>, %arg3: memref<1x2x4xf32, #tpu.memory_space<vmem>>) attributes {dimension_semantics = [#tpu.dimension_semantics<parallel>], iteration_bounds = array<i64: 2>, scalar_prefetch = 0 : i64, scratch_operands = 0 : i64, tpu.core_type = #tpu.core_type<tc>, window_params = [{transform_indices = @transform_0, window_bounds = array<i64: 256, 4>}, {pipeline_mode = #tpu.pipeline_mode<synchronous>, transform_indices = @transform_1, window_bounds = array<i64: 4, 4>}, {transform_indices = @transform_2, window_bounds = array<i64: 1, 2, 4>}]} {
    %c0 = arith.constant 0 : index
    %c0_0 = arith.constant 0 : index
    %0 = vector.load %arg1[%c0, %c0_0] : memref<256x4xbf16, #tpu.memory_space<vmem>>, vector<256x4xbf16>
    %c0_1 = arith.constant 0 : index
    %c0_2 = arith.constant 0 : index
    %1 = vector.load %arg2[%c0_1, %c0_2] : memref<4x4xbf16, #tpu.memory_space<vmem>>, vector<4x4xbf16>
    %cst = arith.constant dense<0.000000e+00> : vector<256x4xf32>
    %2 = tpu.matmul %0, %1, %cst {dimension_numbers = #tpu.dot_dimension_numbers<[1], [0], [0], [1], [0, 0, 1, 1], [], []>} : vector<256x4xbf16>, vector<4x4xbf16>, vector<256x4xf32> -> vector<256x4xf32>
    %cst_3 = arith.constant dense<0.000000e+00> : vector<4xf32>
    %3 = vector.multi_reduction <add>, %2, %cst_3 [0] : vector<256x4xf32> to vector<4xf32>
    %4 = vector.shape_cast %3 : vector<4xf32> to vector<1x4xf32>
    %5 = arith.mulf %2, %2 : vector<256x4xf32>
    %cst_4 = arith.constant dense<0.000000e+00> : vector<4xf32>
    %6 = vector.multi_reduction <add>, %5, %cst_4 [0] : vector<256x4xf32> to vector<4xf32>
    %7 = vector.shape_cast %6 : vector<4xf32> to vector<1x4xf32>
    %8 = tpu.concatenate %4, %7 in 0 : vector<1x4xf32>, vector<1x4xf32> -> vector<2x4xf32>
    %c0_5 = arith.constant 0 : index
    %c0_6 = arith.constant 0 : index
    %c0_7 = arith.constant 0 : index
    %9 = vector.load %arg3[%c0_5, %c0_6, %c0_7] : memref<1x2x4xf32, #tpu.memory_space<vmem>>, vector<1x2x4xf32>
    %10 = vector.shape_cast %9 : vector<1x2x4xf32> to vector<2x4xf32>
    %11 = vector.shape_cast %8 : vector<2x4xf32> to vector<1x2x4xf32>
    tpu.vector_store %arg3[%c0_5, %c0_6, %c0_7], %11 {strides = array<i32>} : memref<1x2x4xf32, #tpu.memory_space<vmem>>, vector<1x2x4xf32>,
    return
  }
  func.func @transform_0(%arg0: i32) -> (i32, i32) {
    %c0_i32 = arith.constant 0 : i32
    %c0_i32_0 = arith.constant 0 : i32
    return %arg0, %c0_i32 : i32, i32
  }
  func.func @transform_1(%arg0: i32) -> (i32, i32) {
    %c0_i32 = arith.constant 0 : i32
    %c0_i32_0 = arith.constant 0 : i32
    %c0_i32_1 = arith.constant 0 : i32
    return %c0_i32, %c0_i32_0 : i32, i32
  }
  func.func @transform_2(%arg0: i32) -> (i32, i32, i32) {
    %c0_i32 = arith.constant 0 : i32
    %c0_i32_0 = arith.constant 0 : i32
    %c0_i32_1 = arith.constant 0 : i32
    return %arg0, %c0_i32, %c0_i32_0 : i32, i32, i32
  }
}

module attributes {stable_mosaic.version = 11 : i64} {
  func.func @_conv1x1_affine_relu_kernel(%arg0: i32, %arg1: memref<256x4xbf16, #tpu.memory_space<vmem>>, %arg2: memref<4x4xbf16, #tpu.memory_space<vmem>>, %arg3: memref<1x4xf32, #tpu.memory_space<vmem>>, %arg4: memref<1x4xf32, #tpu.memory_space<vmem>>, %arg5: memref<256x4xbf16, #tpu.memory_space<vmem>>) attributes {dimension_semantics = [#tpu.dimension_semantics<parallel>], iteration_bounds = array<i64: 2>, scalar_prefetch = 0 : i64, scratch_operands = 0 : i64, tpu.core_type = #tpu.core_type<tc>, window_params = [{transform_indices = @transform_0, window_bounds = array<i64: 256, 4>}, {pipeline_mode = #tpu.pipeline_mode<synchronous>, transform_indices = @transform_1, window_bounds = array<i64: 4, 4>}, {pipeline_mode = #tpu.pipeline_mode<synchronous>, transform_indices = @transform_2, window_bounds = array<i64: 1, 4>}, {pipeline_mode = #tpu.pipeline_mode<synchronous>, transform_indices = @transform_3, window_bounds = array<i64: 1, 4>}, {transform_indices = @transform_4, window_bounds = array<i64: 256, 4>}]} {
    %c0 = arith.constant 0 : index
    %c0_0 = arith.constant 0 : index
    %0 = vector.load %arg1[%c0, %c0_0] : memref<256x4xbf16, #tpu.memory_space<vmem>>, vector<256x4xbf16>
    %c0_1 = arith.constant 0 : index
    %c0_2 = arith.constant 0 : index
    %1 = vector.load %arg2[%c0_1, %c0_2] : memref<4x4xbf16, #tpu.memory_space<vmem>>, vector<4x4xbf16>
    %cst = arith.constant dense<0.000000e+00> : vector<256x4xf32>
    %2 = tpu.matmul %0, %1, %cst {dimension_numbers = #tpu.dot_dimension_numbers<[1], [0], [0], [1], [0, 0, 1, 1], [], []>} : vector<256x4xbf16>, vector<4x4xbf16>, vector<256x4xf32> -> vector<256x4xf32>
    %c0_3 = arith.constant 0 : index
    %c0_4 = arith.constant 0 : index
    %3 = vector.load %arg3[%c0_3, %c0_4] : memref<1x4xf32, #tpu.memory_space<vmem>>, vector<1x4xf32>
    %4 = vector.broadcast %3 : vector<1x4xf32> to vector<256x4xf32>
    %5 = arith.mulf %2, %4 : vector<256x4xf32>
    %c0_5 = arith.constant 0 : index
    %c0_6 = arith.constant 0 : index
    %6 = vector.load %arg4[%c0_5, %c0_6] : memref<1x4xf32, #tpu.memory_space<vmem>>, vector<1x4xf32>
    %7 = vector.broadcast %6 : vector<1x4xf32> to vector<256x4xf32>
    %8 = arith.addf %5, %7 : vector<256x4xf32>
    %cst_7 = arith.constant 0.000000e+00 : f32
    %9 = vector.broadcast %cst_7 : f32 to vector<256x4xf32>
    %10 = arith.maximumf %8, %9 : vector<256x4xf32>
    %11 = arith.truncf %10 : vector<256x4xf32> to vector<256x4xbf16>
    %c0_8 = arith.constant 0 : index
    %c0_9 = arith.constant 0 : index
    %12 = vector.load %arg5[%c0_8, %c0_9] : memref<256x4xbf16, #tpu.memory_space<vmem>>, vector<256x4xbf16>
    tpu.vector_store %arg5[%c0_8, %c0_9], %11 {strides = array<i32>} : memref<256x4xbf16, #tpu.memory_space<vmem>>, vector<256x4xbf16>,
    return
  }
  func.func @transform_0(%arg0: i32) -> (i32, i32) {
    %c0_i32 = arith.constant 0 : i32
    %c0_i32_0 = arith.constant 0 : i32
    return %arg0, %c0_i32 : i32, i32
  }
  func.func @transform_1(%arg0: i32) -> (i32, i32) {
    %c0_i32 = arith.constant 0 : i32
    %c0_i32_0 = arith.constant 0 : i32
    %c0_i32_1 = arith.constant 0 : i32
    return %c0_i32, %c0_i32_0 : i32, i32
  }
  func.func @transform_2(%arg0: i32) -> (i32, i32) {
    %c0_i32 = arith.constant 0 : i32
    %c0_i32_0 = arith.constant 0 : i32
    %c0_i32_1 = arith.constant 0 : i32
    return %c0_i32, %c0_i32_0 : i32, i32
  }
  func.func @transform_3(%arg0: i32) -> (i32, i32) {
    %c0_i32 = arith.constant 0 : i32
    %c0_i32_0 = arith.constant 0 : i32
    %c0_i32_1 = arith.constant 0 : i32
    return %c0_i32, %c0_i32_0 : i32, i32
  }
  func.func @transform_4(%arg0: i32) -> (i32, i32) {
    %c0_i32 = arith.constant 0 : i32
    %c0_i32_0 = arith.constant 0 : i32
    return %arg0, %c0_i32 : i32, i32
  }
}

module attributes {stable_mosaic.version = 11 : i64} {
  func.func @kernel(%arg0: i32, %arg1: i32, %arg2: memref<1x1x2x9x4xbf16, #tpu.memory_space<vmem>>, %arg3: memref<1x1x2x9x4xbf16, #tpu.memory_space<vmem>>, %arg4: memref<1x1x2x9x4xbf16, #tpu.memory_space<vmem>>, %arg5: memref<3x3x2x2x2xbf16, #tpu.memory_space<vmem>>, %arg6: memref<1x1x8x4xbf16, #tpu.memory_space<vmem>>, %arg7: memref<1x1x2x4xf32, #tpu.memory_space<vmem>>) attributes {dimension_semantics = [#tpu.dimension_semantics<parallel>, #tpu.dimension_semantics<parallel>], iteration_bounds = array<i64: 2, 8>, scalar_prefetch = 0 : i64, scratch_operands = 0 : i64, tpu.core_type = #tpu.core_type<tc>, window_params = [{transform_indices = @transform_0, window_bounds = array<i64: 1, 1, 2, 9, 4>}, {transform_indices = @transform_1, window_bounds = array<i64: 1, 1, 2, 9, 4>}, {transform_indices = @transform_2, window_bounds = array<i64: 1, 1, 2, 9, 4>}, {pipeline_mode = #tpu.pipeline_mode<synchronous>, transform_indices = @transform_3, window_bounds = array<i64: 3, 3, 2, 2, 2>}, {transform_indices = @transform_4, window_bounds = array<i64: 1, 1, 8, 4>}, {transform_indices = @transform_5, window_bounds = array<i64: 1, 1, 2, 4>}]} {
    %cst = arith.constant 0.000000e+00 : f32
    %0 = vector.broadcast %cst : f32 to vector<8x2xf32>
    %cst_0 = arith.constant 0.000000e+00 : f32
    %1 = vector.broadcast %cst_0 : f32 to vector<8x2xf32>
    %c0 = arith.constant 0 : index
    %c0_1 = arith.constant 0 : index
    %c0_2 = arith.constant 0 : index
    %c0_3 = arith.constant 0 : index
    %c0_4 = arith.constant 0 : index
    %2 = vector.load %arg2[%c0, %c0_1, %c0_2, %c0_3, %c0_4] : memref<1x1x2x9x4xbf16, #tpu.memory_space<vmem>>, vector<1x1x1x8x4xbf16>
    %3 = vector.shape_cast %2 : vector<1x1x1x8x4xbf16> to vector<8x4xbf16>
    %4 = vector.extract_strided_slice %3 {offsets = [0, 0], sizes = [8, 2], strides = [1, 1]} : vector<8x4xbf16> to vector<8x2xbf16>
    %c0_5 = arith.constant 0 : index
    %c0_6 = arith.constant 0 : index
    %c0_7 = arith.constant 0 : index
    %c0_8 = arith.constant 0 : index
    %c0_9 = arith.constant 0 : index
    %5 = vector.load %arg5[%c0_5, %c0_6, %c0_7, %c0_8, %c0_9] : memref<3x3x2x2x2xbf16, #tpu.memory_space<vmem>>, vector<1x1x1x2x2xbf16>
    %6 = vector.shape_cast %5 : vector<1x1x1x2x2xbf16> to vector<2x2xbf16>
    %cst_10 = arith.constant dense<0.000000e+00> : vector<8x2xf32>
    %7 = tpu.matmul %4, %6, %cst_10 {dimension_numbers = #tpu.dot_dimension_numbers<[1], [0], [0], [1], [0, 0, 1, 1], [], []>} : vector<8x2xbf16>, vector<2x2xbf16>, vector<8x2xf32> -> vector<8x2xf32>
    %8 = arith.addf %0, %7 : vector<8x2xf32>
    %9 = vector.extract_strided_slice %3 {offsets = [0, 2], sizes = [8, 2], strides = [1, 1]} : vector<8x4xbf16> to vector<8x2xbf16>
    %c0_11 = arith.constant 0 : index
    %c0_12 = arith.constant 0 : index
    %c1 = arith.constant 1 : index
    %c0_13 = arith.constant 0 : index
    %c0_14 = arith.constant 0 : index
    %10 = vector.load %arg5[%c0_11, %c0_12, %c1, %c0_13, %c0_14] : memref<3x3x2x2x2xbf16, #tpu.memory_space<vmem>>, vector<1x1x1x2x2xbf16>
    %11 = vector.shape_cast %10 : vector<1x1x1x2x2xbf16> to vector<2x2xbf16>
    %cst_15 = arith.constant dense<0.000000e+00> : vector<8x2xf32>
    %12 = tpu.matmul %9, %11, %cst_15 {dimension_numbers = #tpu.dot_dimension_numbers<[1], [0], [0], [1], [0, 0, 1, 1], [], []>} : vector<8x2xbf16>, vector<2x2xbf16>, vector<8x2xf32> -> vector<8x2xf32>
    %13 = arith.addf %1, %12 : vector<8x2xf32>
    %c0_16 = arith.constant 0 : index
    %c0_17 = arith.constant 0 : index
    %c1_18 = arith.constant 1 : index
    %c0_19 = arith.constant 0 : index
    %c0_20 = arith.constant 0 : index
    %14 = vector.load %arg2[%c0_16, %c0_17, %c1_18, %c0_19, %c0_20] : memref<1x1x2x9x4xbf16, #tpu.memory_space<vmem>>, vector<1x1x1x8x4xbf16>
    %15 = vector.shape_cast %14 : vector<1x1x1x8x4xbf16> to vector<8x4xbf16>
    %16 = vector.extract_strided_slice %15 {offsets = [0, 0], sizes = [8, 2], strides = [1, 1]} : vector<8x4xbf16> to vector<8x2xbf16>
    %c0_21 = arith.constant 0 : index
    %c1_22 = arith.constant 1 : index
    %c0_23 = arith.constant 0 : index
    %c0_24 = arith.constant 0 : index
    %c0_25 = arith.constant 0 : index
    %17 = vector.load %arg5[%c0_21, %c1_22, %c0_23, %c0_24, %c0_25] : memref<3x3x2x2x2xbf16, #tpu.memory_space<vmem>>, vector<1x1x1x2x2xbf16>
    %18 = vector.shape_cast %17 : vector<1x1x1x2x2xbf16> to vector<2x2xbf16>
    %cst_26 = arith.constant dense<0.000000e+00> : vector<8x2xf32>
    %19 = tpu.matmul %16, %18, %cst_26 {dimension_numbers = #tpu.dot_dimension_numbers<[1], [0], [0], [1], [0, 0, 1, 1], [], []>} : vector<8x2xbf16>, vector<2x2xbf16>, vector<8x2xf32> -> vector<8x2xf32>
    %20 = arith.addf %8, %19 : vector<8x2xf32>
    %21 = vector.extract_strided_slice %15 {offsets = [0, 2], sizes = [8, 2], strides = [1, 1]} : vector<8x4xbf16> to vector<8x2xbf16>
    %c0_27 = arith.constant 0 : index
    %c1_28 = arith.constant 1 : index
    %c1_29 = arith.constant 1 : index
    %c0_30 = arith.constant 0 : index
    %c0_31 = arith.constant 0 : index
    %22 = vector.load %arg5[%c0_27, %c1_28, %c1_29, %c0_30, %c0_31] : memref<3x3x2x2x2xbf16, #tpu.memory_space<vmem>>, vector<1x1x1x2x2xbf16>
    %23 = vector.shape_cast %22 : vector<1x1x1x2x2xbf16> to vector<2x2xbf16>
    %cst_32 = arith.constant dense<0.000000e+00> : vector<8x2xf32>
    %24 = tpu.matmul %21, %23, %cst_32 {dimension_numbers = #tpu.dot_dimension_numbers<[1], [0], [0], [1], [0, 0, 1, 1], [], []>} : vector<8x2xbf16>, vector<2x2xbf16>, vector<8x2xf32> -> vector<8x2xf32>
    %25 = arith.addf %13, %24 : vector<8x2xf32>
    %c0_33 = arith.constant 0 : index
    %c0_34 = arith.constant 0 : index
    %c0_35 = arith.constant 0 : index
    %c1_36 = arith.constant 1 : index
    %c0_37 = arith.constant 0 : index
    %26 = vector.load %arg2[%c0_33, %c0_34, %c0_35, %c1_36, %c0_37] : memref<1x1x2x9x4xbf16, #tpu.memory_space<vmem>>, vector<1x1x1x8x4xbf16>
    %27 = vector.shape_cast %26 : vector<1x1x1x8x4xbf16> to vector<8x4xbf16>
    %28 = vector.extract_strided_slice %27 {offsets = [0, 0], sizes = [8, 2], strides = [1, 1]} : vector<8x4xbf16> to vector<8x2xbf16>
    %c0_38 = arith.constant 0 : index
    %c2 = arith.constant 2 : index
    %c0_39 = arith.constant 0 : index
    %c0_40 = arith.constant 0 : index
    %c0_41 = arith.constant 0 : index
    %29 = vector.load %arg5[%c0_38, %c2, %c0_39, %c0_40, %c0_41] : memref<3x3x2x2x2xbf16, #tpu.memory_space<vmem>>, vector<1x1x1x2x2xbf16>
    %30 = vector.shape_cast %29 : vector<1x1x1x2x2xbf16> to vector<2x2xbf16>
    %cst_42 = arith.constant dense<0.000000e+00> : vector<8x2xf32>
    %31 = tpu.matmul %28, %30, %cst_42 {dimension_numbers = #tpu.dot_dimension_numbers<[1], [0], [0], [1], [0, 0, 1, 1], [], []>} : vector<8x2xbf16>, vector<2x2xbf16>, vector<8x2xf32> -> vector<8x2xf32>
    %32 = arith.addf %20, %31 : vector<8x2xf32>
    %33 = vector.extract_strided_slice %27 {offsets = [0, 2], sizes = [8, 2], strides = [1, 1]} : vector<8x4xbf16> to vector<8x2xbf16>
    %c0_43 = arith.constant 0 : index
    %c2_44 = arith.constant 2 : index
    %c1_45 = arith.constant 1 : index
    %c0_46 = arith.constant 0 : index
    %c0_47 = arith.constant 0 : index
    %34 = vector.load %arg5[%c0_43, %c2_44, %c1_45, %c0_46, %c0_47] : memref<3x3x2x2x2xbf16, #tpu.memory_space<vmem>>, vector<1x1x1x2x2xbf16>
    %35 = vector.shape_cast %34 : vector<1x1x1x2x2xbf16> to vector<2x2xbf16>
    %cst_48 = arith.constant dense<0.000000e+00> : vector<8x2xf32>
    %36 = tpu.matmul %33, %35, %cst_48 {dimension_numbers = #tpu.dot_dimension_numbers<[1], [0], [0], [1], [0, 0, 1, 1], [], []>} : vector<8x2xbf16>, vector<2x2xbf16>, vector<8x2xf32> -> vector<8x2xf32>
    %37 = arith.addf %25, %36 : vector<8x2xf32>
    %c0_49 = arith.constant 0 : index
    %c0_50 = arith.constant 0 : index
    %c0_51 = arith.constant 0 : index
    %c0_52 = arith.constant 0 : index
    %c0_53 = arith.constant 0 : index
    %38 = vector.load %arg3[%c0_49, %c0_50, %c0_51, %c0_52, %c0_53] : memref<1x1x2x9x4xbf16, #tpu.memory_space<vmem>>, vector<1x1x1x8x4xbf16>
    %39 = vector.shape_cast %38 : vector<1x1x1x8x4xbf16> to vector<8x4xbf16>
    %40 = vector.extract_strided_slice %39 {offsets = [0, 0], sizes = [8, 2], strides = [1, 1]} : vector<8x4xbf16> to vector<8x2xbf16>
    %c1_54 = arith.constant 1 : index
    %c0_55 = arith.constant 0 : index
    %c0_56 = arith.constant 0 : index
    %c0_57 = arith.constant 0 : index
    %c0_58 = arith.constant 0 : index
    %41 = vector.load %arg5[%c1_54, %c0_55, %c0_56, %c0_57, %c0_58] : memref<3x3x2x2x2xbf16, #tpu.memory_space<vmem>>, vector<1x1x1x2x2xbf16>
    %42 = vector.shape_cast %41 : vector<1x1x1x2x2xbf16> to vector<2x2xbf16>
    %cst_59 = arith.constant dense<0.000000e+00> : vector<8x2xf32>
    %43 = tpu.matmul %40, %42, %cst_59 {dimension_numbers = #tpu.dot_dimension_numbers<[1], [0], [0], [1], [0, 0, 1, 1], [], []>} : vector<8x2xbf16>, vector<2x2xbf16>, vector<8x2xf32> -> vector<8x2xf32>
    %44 = arith.addf %32, %43 : vector<8x2xf32>
    %45 = vector.extract_strided_slice %39 {offsets = [0, 2], sizes = [8, 2], strides = [1, 1]} : vector<8x4xbf16> to vector<8x2xbf16>
    %c1_60 = arith.constant 1 : index
    %c0_61 = arith.constant 0 : index
    %c1_62 = arith.constant 1 : index
    %c0_63 = arith.constant 0 : index
    %c0_64 = arith.constant 0 : index
    %46 = vector.load %arg5[%c1_60, %c0_61, %c1_62, %c0_63, %c0_64] : memref<3x3x2x2x2xbf16, #tpu.memory_space<vmem>>, vector<1x1x1x2x2xbf16>
    %47 = vector.shape_cast %46 : vector<1x1x1x2x2xbf16> to vector<2x2xbf16>
    %cst_65 = arith.constant dense<0.000000e+00> : vector<8x2xf32>
    %48 = tpu.matmul %45, %47, %cst_65 {dimension_numbers = #tpu.dot_dimension_numbers<[1], [0], [0], [1], [0, 0, 1, 1], [], []>} : vector<8x2xbf16>, vector<2x2xbf16>, vector<8x2xf32> -> vector<8x2xf32>
    %49 = arith.addf %37, %48 : vector<8x2xf32>
    %c0_66 = arith.constant 0 : index
    %c0_67 = arith.constant 0 : index
    %c1_68 = arith.constant 1 : index
    %c0_69 = arith.constant 0 : index
    %c0_70 = arith.constant 0 : index
    %50 = vector.load %arg3[%c0_66, %c0_67, %c1_68, %c0_69, %c0_70] : memref<1x1x2x9x4xbf16, #tpu.memory_space<vmem>>, vector<1x1x1x8x4xbf16>
    %51 = vector.shape_cast %50 : vector<1x1x1x8x4xbf16> to vector<8x4xbf16>
    %52 = vector.extract_strided_slice %51 {offsets = [0, 0], sizes = [8, 2], strides = [1, 1]} : vector<8x4xbf16> to vector<8x2xbf16>
    %c1_71 = arith.constant 1 : index
    %c1_72 = arith.constant 1 : index
    %c0_73 = arith.constant 0 : index
    %c0_74 = arith.constant 0 : index
    %c0_75 = arith.constant 0 : index
    %53 = vector.load %arg5[%c1_71, %c1_72, %c0_73, %c0_74, %c0_75] : memref<3x3x2x2x2xbf16, #tpu.memory_space<vmem>>, vector<1x1x1x2x2xbf16>
    %54 = vector.shape_cast %53 : vector<1x1x1x2x2xbf16> to vector<2x2xbf16>
    %cst_76 = arith.constant dense<0.000000e+00> : vector<8x2xf32>
    %55 = tpu.matmul %52, %54, %cst_76 {dimension_numbers = #tpu.dot_dimension_numbers<[1], [0], [0], [1], [0, 0, 1, 1], [], []>} : vector<8x2xbf16>, vector<2x2xbf16>, vector<8x2xf32> -> vector<8x2xf32>
    %56 = arith.addf %44, %55 : vector<8x2xf32>
    %57 = vector.extract_strided_slice %51 {offsets = [0, 2], sizes = [8, 2], strides = [1, 1]} : vector<8x4xbf16> to vector<8x2xbf16>
    %c1_77 = arith.constant 1 : index
    %c1_78 = arith.constant 1 : index
    %c1_79 = arith.constant 1 : index
    %c0_80 = arith.constant 0 : index
    %c0_81 = arith.constant 0 : index
    %58 = vector.load %arg5[%c1_77, %c1_78, %c1_79, %c0_80, %c0_81] : memref<3x3x2x2x2xbf16, #tpu.memory_space<vmem>>, vector<1x1x1x2x2xbf16>
    %59 = vector.shape_cast %58 : vector<1x1x1x2x2xbf16> to vector<2x2xbf16>
    %cst_82 = arith.constant dense<0.000000e+00> : vector<8x2xf32>
    %60 = tpu.matmul %57, %59, %cst_82 {dimension_numbers = #tpu.dot_dimension_numbers<[1], [0], [0], [1], [0, 0, 1, 1], [], []>} : vector<8x2xbf16>, vector<2x2xbf16>, vector<8x2xf32> -> vector<8x2xf32>
    %61 = arith.addf %49, %60 : vector<8x2xf32>
    %c0_83 = arith.constant 0 : index
    %c0_84 = arith.constant 0 : index
    %c0_85 = arith.constant 0 : index
    %c1_86 = arith.constant 1 : index
    %c0_87 = arith.constant 0 : index
    %62 = vector.load %arg3[%c0_83, %c0_84, %c0_85, %c1_86, %c0_87] : memref<1x1x2x9x4xbf16, #tpu.memory_space<vmem>>, vector<1x1x1x8x4xbf16>
    %63 = vector.shape_cast %62 : vector<1x1x1x8x4xbf16> to vector<8x4xbf16>
    %64 = vector.extract_strided_slice %63 {offsets = [0, 0], sizes = [8, 2], strides = [1, 1]} : vector<8x4xbf16> to vector<8x2xbf16>
    %c1_88 = arith.constant 1 : index
    %c2_89 = arith.constant 2 : index
    %c0_90 = arith.constant 0 : index
    %c0_91 = arith.constant 0 : index
    %c0_92 = arith.constant 0 : index
    %65 = vector.load %arg5[%c1_88, %c2_89, %c0_90, %c0_91, %c0_92] : memref<3x3x2x2x2xbf16, #tpu.memory_space<vmem>>, vector<1x1x1x2x2xbf16>
    %66 = vector.shape_cast %65 : vector<1x1x1x2x2xbf16> to vector<2x2xbf16>
    %cst_93 = arith.constant dense<0.000000e+00> : vector<8x2xf32>
    %67 = tpu.matmul %64, %66, %cst_93 {dimension_numbers = #tpu.dot_dimension_numbers<[1], [0], [0], [1], [0, 0, 1, 1], [], []>} : vector<8x2xbf16>, vector<2x2xbf16>, vector<8x2xf32> -> vector<8x2xf32>
    %68 = arith.addf %56, %67 : vector<8x2xf32>
    %69 = vector.extract_strided_slice %63 {offsets = [0, 2], sizes = [8, 2], strides = [1, 1]} : vector<8x4xbf16> to vector<8x2xbf16>
    %c1_94 = arith.constant 1 : index
    %c2_95 = arith.constant 2 : index
    %c1_96 = arith.constant 1 : index
    %c0_97 = arith.constant 0 : index
    %c0_98 = arith.constant 0 : index
    %70 = vector.load %arg5[%c1_94, %c2_95, %c1_96, %c0_97, %c0_98] : memref<3x3x2x2x2xbf16, #tpu.memory_space<vmem>>, vector<1x1x1x2x2xbf16>
    %71 = vector.shape_cast %70 : vector<1x1x1x2x2xbf16> to vector<2x2xbf16>
    %cst_99 = arith.constant dense<0.000000e+00> : vector<8x2xf32>
    %72 = tpu.matmul %69, %71, %cst_99 {dimension_numbers = #tpu.dot_dimension_numbers<[1], [0], [0], [1], [0, 0, 1, 1], [], []>} : vector<8x2xbf16>, vector<2x2xbf16>, vector<8x2xf32> -> vector<8x2xf32>
    %73 = arith.addf %61, %72 : vector<8x2xf32>
    %c0_100 = arith.constant 0 : index
    %c0_101 = arith.constant 0 : index
    %c0_102 = arith.constant 0 : index
    %c0_103 = arith.constant 0 : index
    %c0_104 = arith.constant 0 : index
    %74 = vector.load %arg4[%c0_100, %c0_101, %c0_102, %c0_103, %c0_104] : memref<1x1x2x9x4xbf16, #tpu.memory_space<vmem>>, vector<1x1x1x8x4xbf16>
    %75 = vector.shape_cast %74 : vector<1x1x1x8x4xbf16> to vector<8x4xbf16>
    %76 = vector.extract_strided_slice %75 {offsets = [0, 0], sizes = [8, 2], strides = [1, 1]} : vector<8x4xbf16> to vector<8x2xbf16>
    %c2_105 = arith.constant 2 : index
    %c0_106 = arith.constant 0 : index
    %c0_107 = arith.constant 0 : index
    %c0_108 = arith.constant 0 : index
    %c0_109 = arith.constant 0 : index
    %77 = vector.load %arg5[%c2_105, %c0_106, %c0_107, %c0_108, %c0_109] : memref<3x3x2x2x2xbf16, #tpu.memory_space<vmem>>, vector<1x1x1x2x2xbf16>
    %78 = vector.shape_cast %77 : vector<1x1x1x2x2xbf16> to vector<2x2xbf16>
    %cst_110 = arith.constant dense<0.000000e+00> : vector<8x2xf32>
    %79 = tpu.matmul %76, %78, %cst_110 {dimension_numbers = #tpu.dot_dimension_numbers<[1], [0], [0], [1], [0, 0, 1, 1], [], []>} : vector<8x2xbf16>, vector<2x2xbf16>, vector<8x2xf32> -> vector<8x2xf32>
    %80 = arith.addf %68, %79 : vector<8x2xf32>
    %81 = vector.extract_strided_slice %75 {offsets = [0, 2], sizes = [8, 2], strides = [1, 1]} : vector<8x4xbf16> to vector<8x2xbf16>
    %c2_111 = arith.constant 2 : index
    %c0_112 = arith.constant 0 : index
    %c1_113 = arith.constant 1 : index
    %c0_114 = arith.constant 0 : index
    %c0_115 = arith.constant 0 : index
    %82 = vector.load %arg5[%c2_111, %c0_112, %c1_113, %c0_114, %c0_115] : memref<3x3x2x2x2xbf16, #tpu.memory_space<vmem>>, vector<1x1x1x2x2xbf16>
    %83 = vector.shape_cast %82 : vector<1x1x1x2x2xbf16> to vector<2x2xbf16>
    %cst_116 = arith.constant dense<0.000000e+00> : vector<8x2xf32>
    %84 = tpu.matmul %81, %83, %cst_116 {dimension_numbers = #tpu.dot_dimension_numbers<[1], [0], [0], [1], [0, 0, 1, 1], [], []>} : vector<8x2xbf16>, vector<2x2xbf16>, vector<8x2xf32> -> vector<8x2xf32>
    %85 = arith.addf %73, %84 : vector<8x2xf32>
    %c0_117 = arith.constant 0 : index
    %c0_118 = arith.constant 0 : index
    %c1_119 = arith.constant 1 : index
    %c0_120 = arith.constant 0 : index
    %c0_121 = arith.constant 0 : index
    %86 = vector.load %arg4[%c0_117, %c0_118, %c1_119, %c0_120, %c0_121] : memref<1x1x2x9x4xbf16, #tpu.memory_space<vmem>>, vector<1x1x1x8x4xbf16>
    %87 = vector.shape_cast %86 : vector<1x1x1x8x4xbf16> to vector<8x4xbf16>
    %88 = vector.extract_strided_slice %87 {offsets = [0, 0], sizes = [8, 2], strides = [1, 1]} : vector<8x4xbf16> to vector<8x2xbf16>
    %c2_122 = arith.constant 2 : index
    %c1_123 = arith.constant 1 : index
    %c0_124 = arith.constant 0 : index
    %c0_125 = arith.constant 0 : index
    %c0_126 = arith.constant 0 : index
    %89 = vector.load %arg5[%c2_122, %c1_123, %c0_124, %c0_125, %c0_126] : memref<3x3x2x2x2xbf16, #tpu.memory_space<vmem>>, vector<1x1x1x2x2xbf16>
    %90 = vector.shape_cast %89 : vector<1x1x1x2x2xbf16> to vector<2x2xbf16>
    %cst_127 = arith.constant dense<0.000000e+00> : vector<8x2xf32>
    %91 = tpu.matmul %88, %90, %cst_127 {dimension_numbers = #tpu.dot_dimension_numbers<[1], [0], [0], [1], [0, 0, 1, 1], [], []>} : vector<8x2xbf16>, vector<2x2xbf16>, vector<8x2xf32> -> vector<8x2xf32>
    %92 = arith.addf %80, %91 : vector<8x2xf32>
    %93 = vector.extract_strided_slice %87 {offsets = [0, 2], sizes = [8, 2], strides = [1, 1]} : vector<8x4xbf16> to vector<8x2xbf16>
    %c2_128 = arith.constant 2 : index
    %c1_129 = arith.constant 1 : index
    %c1_130 = arith.constant 1 : index
    %c0_131 = arith.constant 0 : index
    %c0_132 = arith.constant 0 : index
    %94 = vector.load %arg5[%c2_128, %c1_129, %c1_130, %c0_131, %c0_132] : memref<3x3x2x2x2xbf16, #tpu.memory_space<vmem>>, vector<1x1x1x2x2xbf16>
    %95 = vector.shape_cast %94 : vector<1x1x1x2x2xbf16> to vector<2x2xbf16>
    %cst_133 = arith.constant dense<0.000000e+00> : vector<8x2xf32>
    %96 = tpu.matmul %93, %95, %cst_133 {dimension_numbers = #tpu.dot_dimension_numbers<[1], [0], [0], [1], [0, 0, 1, 1], [], []>} : vector<8x2xbf16>, vector<2x2xbf16>, vector<8x2xf32> -> vector<8x2xf32>
    %97 = arith.addf %85, %96 : vector<8x2xf32>
    %c0_134 = arith.constant 0 : index
    %c0_135 = arith.constant 0 : index
    %c0_136 = arith.constant 0 : index
    %c1_137 = arith.constant 1 : index
    %c0_138 = arith.constant 0 : index
    %98 = vector.load %arg4[%c0_134, %c0_135, %c0_136, %c1_137, %c0_138] : memref<1x1x2x9x4xbf16, #tpu.memory_space<vmem>>, vector<1x1x1x8x4xbf16>
    %99 = vector.shape_cast %98 : vector<1x1x1x8x4xbf16> to vector<8x4xbf16>
    %100 = vector.extract_strided_slice %99 {offsets = [0, 0], sizes = [8, 2], strides = [1, 1]} : vector<8x4xbf16> to vector<8x2xbf16>
    %c2_139 = arith.constant 2 : index
    %c2_140 = arith.constant 2 : index
    %c0_141 = arith.constant 0 : index
    %c0_142 = arith.constant 0 : index
    %c0_143 = arith.constant 0 : index
    %101 = vector.load %arg5[%c2_139, %c2_140, %c0_141, %c0_142, %c0_143] : memref<3x3x2x2x2xbf16, #tpu.memory_space<vmem>>, vector<1x1x1x2x2xbf16>
    %102 = vector.shape_cast %101 : vector<1x1x1x2x2xbf16> to vector<2x2xbf16>
    %cst_144 = arith.constant dense<0.000000e+00> : vector<8x2xf32>
    %103 = tpu.matmul %100, %102, %cst_144 {dimension_numbers = #tpu.dot_dimension_numbers<[1], [0], [0], [1], [0, 0, 1, 1], [], []>} : vector<8x2xbf16>, vector<2x2xbf16>, vector<8x2xf32> -> vector<8x2xf32>
    %104 = arith.addf %92, %103 : vector<8x2xf32>
    %105 = vector.extract_strided_slice %99 {offsets = [0, 2], sizes = [8, 2], strides = [1, 1]} : vector<8x4xbf16> to vector<8x2xbf16>
    %c2_145 = arith.constant 2 : index
    %c2_146 = arith.constant 2 : index
    %c1_147 = arith.constant 1 : index
    %c0_148 = arith.constant 0 : index
    %c0_149 = arith.constant 0 : index
    %106 = vector.load %arg5[%c2_145, %c2_146, %c1_147, %c0_148, %c0_149] : memref<3x3x2x2x2xbf16, #tpu.memory_space<vmem>>, vector<1x1x1x2x2xbf16>
    %107 = vector.shape_cast %106 : vector<1x1x1x2x2xbf16> to vector<2x2xbf16>
    %cst_150 = arith.constant dense<0.000000e+00> : vector<8x2xf32>
    %108 = tpu.matmul %105, %107, %cst_150 {dimension_numbers = #tpu.dot_dimension_numbers<[1], [0], [0], [1], [0, 0, 1, 1], [], []>} : vector<8x2xbf16>, vector<2x2xbf16>, vector<8x2xf32> -> vector<8x2xf32>
    %109 = arith.addf %97, %108 : vector<8x2xf32>
    %110 = tpu.concatenate %104, %109 in 1 : vector<8x2xf32>, vector<8x2xf32> -> vector<8x4xf32>
    %111 = arith.truncf %110 : vector<8x4xf32> to vector<8x4xbf16>
    %c0_151 = arith.constant 0 : index
    %c0_152 = arith.constant 0 : index
    %c0_153 = arith.constant 0 : index
    %c0_154 = arith.constant 0 : index
    %112 = vector.load %arg6[%c0_151, %c0_152, %c0_153, %c0_154] : memref<1x1x8x4xbf16, #tpu.memory_space<vmem>>, vector<1x1x8x4xbf16>
    %113 = vector.shape_cast %112 : vector<1x1x8x4xbf16> to vector<8x4xbf16>
    %114 = vector.shape_cast %111 : vector<8x4xbf16> to vector<1x1x8x4xbf16>
    tpu.vector_store %arg6[%c0_151, %c0_152, %c0_153, %c0_154], %114 {strides = array<i32>} : memref<1x1x8x4xbf16, #tpu.memory_space<vmem>>, vector<1x1x8x4xbf16>,
    %115 = arith.extf %111 : vector<8x4xbf16> to vector<8x4xf32>
    %cst_155 = arith.constant dense<0.000000e+00> : vector<4xf32>
    %116 = vector.multi_reduction <add>, %115, %cst_155 [0] : vector<8x4xf32> to vector<4xf32>
    %117 = vector.shape_cast %116 : vector<4xf32> to vector<1x4xf32>
    %118 = arith.mulf %115, %115 : vector<8x4xf32>
    %cst_156 = arith.constant dense<0.000000e+00> : vector<4xf32>
    %119 = vector.multi_reduction <add>, %118, %cst_156 [0] : vector<8x4xf32> to vector<4xf32>
    %120 = vector.shape_cast %119 : vector<4xf32> to vector<1x4xf32>
    %121 = tpu.concatenate %117, %120 in 0 : vector<1x4xf32>, vector<1x4xf32> -> vector<2x4xf32>
    %c0_157 = arith.constant 0 : index
    %c0_158 = arith.constant 0 : index
    %c0_159 = arith.constant 0 : index
    %c0_160 = arith.constant 0 : index
    %122 = vector.load %arg7[%c0_157, %c0_158, %c0_159, %c0_160] : memref<1x1x2x4xf32, #tpu.memory_space<vmem>>, vector<1x1x2x4xf32>
    %123 = vector.shape_cast %122 : vector<1x1x2x4xf32> to vector<2x4xf32>
    %124 = vector.shape_cast %121 : vector<2x4xf32> to vector<1x1x2x4xf32>
    tpu.vector_store %arg7[%c0_157, %c0_158, %c0_159, %c0_160], %124 {strides = array<i32>} : memref<1x1x2x4xf32, #tpu.memory_space<vmem>>, vector<1x1x2x4xf32>,
    return
  }
  func.func @transform_0(%arg0: i32, %arg1: i32) -> (i32, i32, i32, i32, i32) {
    %c2_i32 = arith.constant 2 : i32
    %0 = arith.muli %arg1, %c2_i32 : i32
    %c0_i32 = arith.constant 0 : i32
    %1 = arith.addi %0, %c0_i32 : i32
    %c0_i32_0 = arith.constant 0 : i32
    %c0_i32_1 = arith.constant 0 : i32
    %c0_i32_2 = arith.constant 0 : i32
    %c0_i32_3 = arith.constant 0 : i32
    return %arg0, %1, %c0_i32_0, %c0_i32_1, %c0_i32_2 : i32, i32, i32, i32, i32
  }
  func.func @transform_1(%arg0: i32, %arg1: i32) -> (i32, i32, i32, i32, i32) {
    %c2_i32 = arith.constant 2 : i32
    %0 = arith.muli %arg1, %c2_i32 : i32
    %c1_i32 = arith.constant 1 : i32
    %1 = arith.addi %0, %c1_i32 : i32
    %c0_i32 = arith.constant 0 : i32
    %c0_i32_0 = arith.constant 0 : i32
    %c0_i32_1 = arith.constant 0 : i32
    %c0_i32_2 = arith.constant 0 : i32
    return %arg0, %1, %c0_i32, %c0_i32_0, %c0_i32_1 : i32, i32, i32, i32, i32
  }
  func.func @transform_2(%arg0: i32, %arg1: i32) -> (i32, i32, i32, i32, i32) {
    %c2_i32 = arith.constant 2 : i32
    %0 = arith.muli %arg1, %c2_i32 : i32
    %c2_i32_0 = arith.constant 2 : i32
    %1 = arith.addi %0, %c2_i32_0 : i32
    %c0_i32 = arith.constant 0 : i32
    %c0_i32_1 = arith.constant 0 : i32
    %c0_i32_2 = arith.constant 0 : i32
    %c0_i32_3 = arith.constant 0 : i32
    return %arg0, %1, %c0_i32, %c0_i32_1, %c0_i32_2 : i32, i32, i32, i32, i32
  }
  func.func @transform_3(%arg0: i32, %arg1: i32) -> (i32, i32, i32, i32, i32) {
    %c0_i32 = arith.constant 0 : i32
    %c0_i32_0 = arith.constant 0 : i32
    %c0_i32_1 = arith.constant 0 : i32
    %c0_i32_2 = arith.constant 0 : i32
    %c0_i32_3 = arith.constant 0 : i32
    %c0_i32_4 = arith.constant 0 : i32
    return %c0_i32, %c0_i32_0, %c0_i32_1, %c0_i32_2, %c0_i32_3 : i32, i32, i32, i32, i32
  }
  func.func @transform_4(%arg0: i32, %arg1: i32) -> (i32, i32, i32, i32) {
    %c0_i32 = arith.constant 0 : i32
    %c0_i32_0 = arith.constant 0 : i32
    %c0_i32_1 = arith.constant 0 : i32
    return %arg0, %arg1, %c0_i32, %c0_i32_0 : i32, i32, i32, i32
  }
  func.func @transform_5(%arg0: i32, %arg1: i32) -> (i32, i32, i32, i32) {
    %c0_i32 = arith.constant 0 : i32
    %c0_i32_0 = arith.constant 0 : i32
    %c0_i32_1 = arith.constant 0 : i32
    return %arg0, %arg1, %c0_i32, %c0_i32_0 : i32, i32, i32, i32
  }
}

module attributes {stable_mosaic.version = 11 : i64} {
  func.func @_stage3_ds_kernel(%arg0: i32, %arg1: memref<128x4xbf16, #tpu.memory_space<vmem>>, %arg2: memref<1x4xf32, #tpu.memory_space<vmem>>, %arg3: memref<1x4xf32, #tpu.memory_space<vmem>>, %arg4: memref<4x8xbf16, #tpu.memory_space<vmem>>, %arg5: memref<128x4xbf16, #tpu.memory_space<vmem>>, %arg6: memref<4x8xbf16, #tpu.memory_space<vmem>>, %arg7: memref<128x8xbf16, #tpu.memory_space<vmem>>, %arg8: memref<128x8xbf16, #tpu.memory_space<vmem>>, %arg9: memref<1x2x8xf32, #tpu.memory_space<vmem>>, %arg10: memref<1x2x8xf32, #tpu.memory_space<vmem>>) attributes {dimension_semantics = [#tpu.dimension_semantics<parallel>], iteration_bounds = array<i64: 1>, scalar_prefetch = 0 : i64, scratch_operands = 0 : i64, tpu.core_type = #tpu.core_type<tc>, window_params = [{transform_indices = @transform_0, window_bounds = array<i64: 128, 4>}, {pipeline_mode = #tpu.pipeline_mode<synchronous>, transform_indices = @transform_1, window_bounds = array<i64: 1, 4>}, {pipeline_mode = #tpu.pipeline_mode<synchronous>, transform_indices = @transform_2, window_bounds = array<i64: 1, 4>}, {pipeline_mode = #tpu.pipeline_mode<synchronous>, transform_indices = @transform_3, window_bounds = array<i64: 4, 8>}, {transform_indices = @transform_4, window_bounds = array<i64: 128, 4>}, {pipeline_mode = #tpu.pipeline_mode<synchronous>, transform_indices = @transform_5, window_bounds = array<i64: 4, 8>}, {transform_indices = @transform_6, window_bounds = array<i64: 128, 8>}, {transform_indices = @transform_7, window_bounds = array<i64: 128, 8>}, {transform_indices = @transform_8, window_bounds = array<i64: 1, 2, 8>}, {transform_indices = @transform_9, window_bounds = array<i64: 1, 2, 8>}]} {
    %c0 = arith.constant 0 : index
    %c0_0 = arith.constant 0 : index
    %0 = vector.load %arg1[%c0, %c0_0] : memref<128x4xbf16, #tpu.memory_space<vmem>>, vector<128x4xbf16>
    %1 = arith.extf %0 : vector<128x4xbf16> to vector<128x4xf32>
    %c0_1 = arith.constant 0 : index
    %c0_2 = arith.constant 0 : index
    %2 = vector.load %arg2[%c0_1, %c0_2] : memref<1x4xf32, #tpu.memory_space<vmem>>, vector<1x4xf32>
    %3 = vector.broadcast %2 : vector<1x4xf32> to vector<128x4xf32>
    %4 = arith.mulf %1, %3 : vector<128x4xf32>
    %c0_3 = arith.constant 0 : index
    %c0_4 = arith.constant 0 : index
    %5 = vector.load %arg3[%c0_3, %c0_4] : memref<1x4xf32, #tpu.memory_space<vmem>>, vector<1x4xf32>
    %6 = vector.broadcast %5 : vector<1x4xf32> to vector<128x4xf32>
    %7 = arith.addf %4, %6 : vector<128x4xf32>
    %cst = arith.constant 0.000000e+00 : f32
    %8 = vector.broadcast %cst : f32 to vector<128x4xf32>
    %9 = arith.maximumf %7, %8 : vector<128x4xf32>
    %10 = arith.truncf %9 : vector<128x4xf32> to vector<128x4xbf16>
    %c0_5 = arith.constant 0 : index
    %c0_6 = arith.constant 0 : index
    %11 = vector.load %arg4[%c0_5, %c0_6] : memref<4x8xbf16, #tpu.memory_space<vmem>>, vector<4x8xbf16>
    %cst_7 = arith.constant dense<0.000000e+00> : vector<128x8xf32>
    %12 = tpu.matmul %10, %11, %cst_7 {dimension_numbers = #tpu.dot_dimension_numbers<[1], [0], [0], [1], [0, 0, 1, 1], [], []>} : vector<128x4xbf16>, vector<4x8xbf16>, vector<128x8xf32> -> vector<128x8xf32>
    %13 = arith.truncf %12 : vector<128x8xf32> to vector<128x8xbf16>
    %c0_8 = arith.constant 0 : index
    %c0_9 = arith.constant 0 : index
    %14 = vector.load %arg7[%c0_8, %c0_9] : memref<128x8xbf16, #tpu.memory_space<vmem>>, vector<128x8xbf16>
    tpu.vector_store %arg7[%c0_8, %c0_9], %13 {strides = array<i32>} : memref<128x8xbf16, #tpu.memory_space<vmem>>, vector<128x8xbf16>,
    %15 = arith.extf %13 : vector<128x8xbf16> to vector<128x8xf32>
    %cst_10 = arith.constant dense<0.000000e+00> : vector<8xf32>
    %16 = vector.multi_reduction <add>, %15, %cst_10 [0] : vector<128x8xf32> to vector<8xf32>
    %17 = vector.shape_cast %16 : vector<8xf32> to vector<1x8xf32>
    %18 = arith.mulf %15, %15 : vector<128x8xf32>
    %cst_11 = arith.constant dense<0.000000e+00> : vector<8xf32>
    %19 = vector.multi_reduction <add>, %18, %cst_11 [0] : vector<128x8xf32> to vector<8xf32>
    %20 = vector.shape_cast %19 : vector<8xf32> to vector<1x8xf32>
    %21 = tpu.concatenate %17, %20 in 0 : vector<1x8xf32>, vector<1x8xf32> -> vector<2x8xf32>
    %c0_12 = arith.constant 0 : index
    %c0_13 = arith.constant 0 : index
    %c0_14 = arith.constant 0 : index
    %22 = vector.load %arg9[%c0_12, %c0_13, %c0_14] : memref<1x2x8xf32, #tpu.memory_space<vmem>>, vector<1x2x8xf32>
    %23 = vector.shape_cast %22 : vector<1x2x8xf32> to vector<2x8xf32>
    %24 = vector.shape_cast %21 : vector<2x8xf32> to vector<1x2x8xf32>
    tpu.vector_store %arg9[%c0_12, %c0_13, %c0_14], %24 {strides = array<i32>} : memref<1x2x8xf32, #tpu.memory_space<vmem>>, vector<1x2x8xf32>,
    %c0_15 = arith.constant 0 : index
    %c0_16 = arith.constant 0 : index
    %25 = vector.load %arg5[%c0_15, %c0_16] : memref<128x4xbf16, #tpu.memory_space<vmem>>, vector<128x4xbf16>
    %c0_17 = arith.constant 0 : index
    %c0_18 = arith.constant 0 : index
    %26 = vector.load %arg6[%c0_17, %c0_18] : memref<4x8xbf16, #tpu.memory_space<vmem>>, vector<4x8xbf16>
    %cst_19 = arith.constant dense<0.000000e+00> : vector<128x8xf32>
    %27 = tpu.matmul %25, %26, %cst_19 {dimension_numbers = #tpu.dot_dimension_numbers<[1], [0], [0], [1], [0, 0, 1, 1], [], []>} : vector<128x4xbf16>, vector<4x8xbf16>, vector<128x8xf32> -> vector<128x8xf32>
    %28 = arith.truncf %27 : vector<128x8xf32> to vector<128x8xbf16>
    %c0_20 = arith.constant 0 : index
    %c0_21 = arith.constant 0 : index
    %29 = vector.load %arg8[%c0_20, %c0_21] : memref<128x8xbf16, #tpu.memory_space<vmem>>, vector<128x8xbf16>
    tpu.vector_store %arg8[%c0_20, %c0_21], %28 {strides = array<i32>} : memref<128x8xbf16, #tpu.memory_space<vmem>>, vector<128x8xbf16>,
    %30 = arith.extf %28 : vector<128x8xbf16> to vector<128x8xf32>
    %cst_22 = arith.constant dense<0.000000e+00> : vector<8xf32>
    %31 = vector.multi_reduction <add>, %30, %cst_22 [0] : vector<128x8xf32> to vector<8xf32>
    %32 = vector.shape_cast %31 : vector<8xf32> to vector<1x8xf32>
    %33 = arith.mulf %30, %30 : vector<128x8xf32>
    %cst_23 = arith.constant dense<0.000000e+00> : vector<8xf32>
    %34 = vector.multi_reduction <add>, %33, %cst_23 [0] : vector<128x8xf32> to vector<8xf32>
    %35 = vector.shape_cast %34 : vector<8xf32> to vector<1x8xf32>
    %36 = tpu.concatenate %32, %35 in 0 : vector<1x8xf32>, vector<1x8xf32> -> vector<2x8xf32>
    %c0_24 = arith.constant 0 : index
    %c0_25 = arith.constant 0 : index
    %c0_26 = arith.constant 0 : index
    %37 = vector.load %arg10[%c0_24, %c0_25, %c0_26] : memref<1x2x8xf32, #tpu.memory_space<vmem>>, vector<1x2x8xf32>
    %38 = vector.shape_cast %37 : vector<1x2x8xf32> to vector<2x8xf32>
    %39 = vector.shape_cast %36 : vector<2x8xf32> to vector<1x2x8xf32>
    tpu.vector_store %arg10[%c0_24, %c0_25, %c0_26], %39 {strides = array<i32>} : memref<1x2x8xf32, #tpu.memory_space<vmem>>, vector<1x2x8xf32>,
    return
  }
  func.func @transform_0(%arg0: i32) -> (i32, i32) {
    %c0_i32 = arith.constant 0 : i32
    %c0_i32_0 = arith.constant 0 : i32
    return %arg0, %c0_i32 : i32, i32
  }
  func.func @transform_1(%arg0: i32) -> (i32, i32) {
    %c0_i32 = arith.constant 0 : i32
    %c0_i32_0 = arith.constant 0 : i32
    %c0_i32_1 = arith.constant 0 : i32
    return %c0_i32, %c0_i32_0 : i32, i32
  }
  func.func @transform_2(%arg0: i32) -> (i32, i32) {
    %c0_i32 = arith.constant 0 : i32
    %c0_i32_0 = arith.constant 0 : i32
    %c0_i32_1 = arith.constant 0 : i32
    return %c0_i32, %c0_i32_0 : i32, i32
  }
  func.func @transform_3(%arg0: i32) -> (i32, i32) {
    %c0_i32 = arith.constant 0 : i32
    %c0_i32_0 = arith.constant 0 : i32
    %c0_i32_1 = arith.constant 0 : i32
    return %c0_i32, %c0_i32_0 : i32, i32
  }
  func.func @transform_4(%arg0: i32) -> (i32, i32) {
    %c0_i32 = arith.constant 0 : i32
    %c0_i32_0 = arith.constant 0 : i32
    return %arg0, %c0_i32 : i32, i32
  }
  func.func @transform_5(%arg0: i32) -> (i32, i32) {
    %c0_i32 = arith.constant 0 : i32
    %c0_i32_0 = arith.constant 0 : i32
    %c0_i32_1 = arith.constant 0 : i32
    return %c0_i32, %c0_i32_0 : i32, i32
  }
  func.func @transform_6(%arg0: i32) -> (i32, i32) {
    %c0_i32 = arith.constant 0 : i32
    %c0_i32_0 = arith.constant 0 : i32
    return %arg0, %c0_i32 : i32, i32
  }
  func.func @transform_7(%arg0: i32) -> (i32, i32) {
    %c0_i32 = arith.constant 0 : i32
    %c0_i32_0 = arith.constant 0 : i32
    return %arg0, %c0_i32 : i32, i32
  }
  func.func @transform_8(%arg0: i32) -> (i32, i32, i32) {
    %c0_i32 = arith.constant 0 : i32
    %c0_i32_0 = arith.constant 0 : i32
    %c0_i32_1 = arith.constant 0 : i32
    return %arg0, %c0_i32, %c0_i32_0 : i32, i32, i32
  }
  func.func @transform_9(%arg0: i32) -> (i32, i32, i32) {
    %c0_i32 = arith.constant 0 : i32
    %c0_i32_0 = arith.constant 0 : i32
    %c0_i32_1 = arith.constant 0 : i32
    return %arg0, %c0_i32, %c0_i32_0 : i32, i32, i32
  }
}

module attributes {stable_mosaic.version = 11 : i64} {
  func.func @_final_ds_kernel(%arg0: i32, %arg1: memref<128x8xbf16, #tpu.memory_space<vmem>>, %arg2: memref<1x8xf32, #tpu.memory_space<vmem>>, %arg3: memref<1x8xf32, #tpu.memory_space<vmem>>, %arg4: memref<128x8xbf16, #tpu.memory_space<vmem>>, %arg5: memref<1x8xf32, #tpu.memory_space<vmem>>, %arg6: memref<1x8xf32, #tpu.memory_space<vmem>>, %arg7: memref<128x8xf32, #tpu.memory_space<vmem>>) attributes {dimension_semantics = [#tpu.dimension_semantics<parallel>], iteration_bounds = array<i64: 1>, scalar_prefetch = 0 : i64, scratch_operands = 0 : i64, tpu.core_type = #tpu.core_type<tc>, window_params = [{transform_indices = @transform_0, window_bounds = array<i64: 128, 8>}, {pipeline_mode = #tpu.pipeline_mode<synchronous>, transform_indices = @transform_1, window_bounds = array<i64: 1, 8>}, {pipeline_mode = #tpu.pipeline_mode<synchronous>, transform_indices = @transform_2, window_bounds = array<i64: 1, 8>}, {transform_indices = @transform_3, window_bounds = array<i64: 128, 8>}, {pipeline_mode = #tpu.pipeline_mode<synchronous>, transform_indices = @transform_4, window_bounds = array<i64: 1, 8>}, {pipeline_mode = #tpu.pipeline_mode<synchronous>, transform_indices = @transform_5, window_bounds = array<i64: 1, 8>}, {transform_indices = @transform_6, window_bounds = array<i64: 128, 8>}]} {
    %c0 = arith.constant 0 : index
    %c0_0 = arith.constant 0 : index
    %0 = vector.load %arg1[%c0, %c0_0] : memref<128x8xbf16, #tpu.memory_space<vmem>>, vector<128x8xbf16>
    %1 = arith.extf %0 : vector<128x8xbf16> to vector<128x8xf32>
    %c0_1 = arith.constant 0 : index
    %c0_2 = arith.constant 0 : index
    %2 = vector.load %arg2[%c0_1, %c0_2] : memref<1x8xf32, #tpu.memory_space<vmem>>, vector<1x8xf32>
    %3 = vector.broadcast %2 : vector<1x8xf32> to vector<128x8xf32>
    %4 = arith.mulf %1, %3 : vector<128x8xf32>
    %c0_3 = arith.constant 0 : index
    %c0_4 = arith.constant 0 : index
    %5 = vector.load %arg3[%c0_3, %c0_4] : memref<1x8xf32, #tpu.memory_space<vmem>>, vector<1x8xf32>
    %6 = vector.broadcast %5 : vector<1x8xf32> to vector<128x8xf32>
    %7 = arith.addf %4, %6 : vector<128x8xf32>
    %c0_5 = arith.constant 0 : index
    %c0_6 = arith.constant 0 : index
    %8 = vector.load %arg4[%c0_5, %c0_6] : memref<128x8xbf16, #tpu.memory_space<vmem>>, vector<128x8xbf16>
    %9 = arith.extf %8 : vector<128x8xbf16> to vector<128x8xf32>
    %c0_7 = arith.constant 0 : index
    %c0_8 = arith.constant 0 : index
    %10 = vector.load %arg5[%c0_7, %c0_8] : memref<1x8xf32, #tpu.memory_space<vmem>>, vector<1x8xf32>
    %11 = vector.broadcast %10 : vector<1x8xf32> to vector<128x8xf32>
    %12 = arith.mulf %9, %11 : vector<128x8xf32>
    %c0_9 = arith.constant 0 : index
    %c0_10 = arith.constant 0 : index
    %13 = vector.load %arg6[%c0_9, %c0_10] : memref<1x8xf32, #tpu.memory_space<vmem>>, vector<1x8xf32>
    %14 = vector.broadcast %13 : vector<1x8xf32> to vector<128x8xf32>
    %15 = arith.addf %12, %14 : vector<128x8xf32>
    %16 = arith.addf %7, %15 : vector<128x8xf32>
    %cst = arith.constant 0.000000e+00 : f32
    %17 = vector.broadcast %cst : f32 to vector<128x8xf32>
    %18 = arith.maximumf %16, %17 : vector<128x8xf32>
    %c0_11 = arith.constant 0 : index
    %c0_12 = arith.constant 0 : index
    %19 = vector.load %arg7[%c0_11, %c0_12] : memref<128x8xf32, #tpu.memory_space<vmem>>, vector<128x8xf32>
    tpu.vector_store %arg7[%c0_11, %c0_12], %18 {strides = array<i32>} : memref<128x8xf32, #tpu.memory_space<vmem>>, vector<128x8xf32>,
    return
  }
  func.func @transform_0(%arg0: i32) -> (i32, i32) {
    %c0_i32 = arith.constant 0 : i32
    %c0_i32_0 = arith.constant 0 : i32
    return %arg0, %c0_i32 : i32, i32
  }
  func.func @transform_1(%arg0: i32) -> (i32, i32) {
    %c0_i32 = arith.constant 0 : i32
    %c0_i32_0 = arith.constant 0 : i32
    %c0_i32_1 = arith.constant 0 : i32
    return %c0_i32, %c0_i32_0 : i32, i32
  }
  func.func @transform_2(%arg0: i32) -> (i32, i32) {
    %c0_i32 = arith.constant 0 : i32
    %c0_i32_0 = arith.constant 0 : i32
    %c0_i32_1 = arith.constant 0 : i32
    return %c0_i32, %c0_i32_0 : i32, i32
  }
  func.func @transform_3(%arg0: i32) -> (i32, i32) {
    %c0_i32 = arith.constant 0 : i32
    %c0_i32_0 = arith.constant 0 : i32
    return %arg0, %c0_i32 : i32, i32
  }
  func.func @transform_4(%arg0: i32) -> (i32, i32) {
    %c0_i32 = arith.constant 0 : i32
    %c0_i32_0 = arith.constant 0 : i32
    %c0_i32_1 = arith.constant 0 : i32
    return %c0_i32, %c0_i32_0 : i32, i32
  }
  func.func @transform_5(%arg0: i32) -> (i32, i32) {
    %c0_i32 = arith.constant 0 : i32
    %c0_i32_0 = arith.constant 0 : i32
    %c0_i32_1 = arith.constant 0 : i32
    return %c0_i32, %c0_i32_0 : i32, i32
  }
  func.func @transform_6(%arg0: i32) -> (i32, i32) {
    %c0_i32 = arith.constant 0 : i32
    %c0_i32_0 = arith.constant 0 : i32
    return %arg0, %c0_i32 : i32, i32
  }
}

</mosaic_0001>

<llo_original>
// kernel: xblock_forward.5
$region0: #{xblock_forward.5}
  #allocation0 [shape = 'u32[]', space=smem, size = 0x4, offset = 0x4, fixed_abs, tag = 'smem constant byte address 0x4 - core index']
  #allocation1 [shape = 'u32[144,128]{1,0:T(1,128)}', space=vmem, size = 0x12000, scoped, tag = 'internal scratch']
  %s0 = inlined_call_operand.vmem [shape: bf16[512,4], index: 0, kind: input, shape index: {}]
  %s1 = inlined_call_operand.vmem [shape: bf16[4,4], index: 1, kind: input, shape index: {}]
  %s2 = inlined_call_operand.vmem [shape: f32[2,2,4], index: 2, kind: output, shape index: {}]
  %s3 = sld [smem:[#allocation0]]
  $region41: #{xblock_forward.5} parent=0
    _
  %s5 = ssub.s32 1, %s3
  %s6 = scalar_select 0, %s5, %s3
  loop: start=0, step=1, limit=4
  $region2: #{xblock_forward.5} parent=0 // loop_pre_header
    _
  $region3: #{xblock_forward.5} parent=0 // loop_header
    %s8 = sphi 0, %s12
    %p9 = scmp.ge.s32.totalorder %s8, 4
    %s18 = sphi 0, %s20
    %s21 = sphi 0, %s18
    %s22 = sphi 0, %s21
    %s38 = sphi 0, %s22
    %s42 = sphi 0, %s42
    %s44 = sphi 0, %s42
    %s45 = sphi 0, %s44
    %s59 = sphi 0, %s45
    %s65 = sphi 0, %s67
    %s68 = sphi 0, %s65
    %s69 = sphi 0, %s68
    %s85 = sphi 0, %s69
  $region4: #{xblock_forward.5} parent=0 // loop_header_branch
    %11 = sbr.rel (%p9) target = $region8
  $region5: #{xblock_forward.5} parent=0 // loop_body
    %s13 = ssub.s32 %s8, 1
    %s14 = ssub.s32 %s8, 2
    %s15 = sadd.s32 %s8, 1
    %s16 = ssub.s32 %s8, %s15
    %p17 = scmp.eq.s32.totalorder %s16, 0
    %s19 = sadd.s32 %s18, 1
    %s20 = scalar_select %p17, %s18, %s19
    %p23 = pneg %p17
    %p24 = scmp.eq.s32.totalorder %s8, 1
    %p25 = por %p23, %p24
    %p26 = scmp.ne.s32.totalorder %s18, %s21
    %p27 = scmp.eq.s32.totalorder %s8, 0
    %p28 = por %p26, %p27
    %p29 = scmp.ne.s32.totalorder %s18, %s21
    %p30 = scmp.eq.s32.totalorder %s13, 1
    %p31 = por %p29, %p30
    %p32 = scmp.ne.s32.totalorder %s21, %s22
    %p33 = scmp.eq.s32.totalorder %s13, 0
    %p34 = por %p32, %p33
    %p35 = scmp.ne.s32.totalorder %s21, %s22
    %p36 = scmp.eq.s32.totalorder %s14, 1
    %p37 = por %p35, %p36
    %p39 = scmp.ne.s32.totalorder %s22, %s38
    %p40 = scmp.eq.s32.totalorder %s14, 0
    %p41 = por %p39, %p40
    %s43 = sadd.s32 %s42, 1
    %p46 = scmp.eq.s32.totalorder %s8, 1
    %p47 = scmp.ne.s32.totalorder %s42, %s44
    %p48 = scmp.eq.s32.totalorder %s8, 0
    %p49 = por %p47, %p48
    %p50 = scmp.ne.s32.totalorder %s42, %s44
    %p51 = scmp.eq.s32.totalorder %s13, 1
    %p52 = por %p50, %p51
    %p53 = scmp.ne.s32.totalorder %s44, %s45
    %p54 = scmp.eq.s32.totalorder %s13, 0
    %p55 = por %p53, %p54
    %p56 = scmp.ne.s32.totalorder %s44, %s45
    %p57 = scmp.eq.s32.totalorder %s14, 1
    %p58 = por %p56, %p57
    %p60 = scmp.ne.s32.totalorder %s45, %s59
    %p61 = scmp.eq.s32.totalorder %s14, 0
    %p62 = por %p60, %p61
    %s63 = ssub.s32 %s8, %s15
    %p64 = scmp.eq.s32.totalorder %s63, 0
    %s66 = sadd.s32 %s65, 1
    %s67 = scalar_select %p64, %s65, %s66
    %p70 = pneg %p64
    %p71 = scmp.eq.s32.totalorder %s8, 1
    %p72 = por %p70, %p71
    %p73 = scmp.ne.s32.totalorder %s65, %s68
    %p74 = scmp.eq.s32.totalorder %s8, 0
    %p75 = por %p73, %p74
    %p76 = scmp.ne.s32.totalorder %s65, %s68
    %p77 = scmp.eq.s32.totalorder %s13, 1
    %p78 = por %p76, %p77
    %p79 = scmp.ne.s32.totalorder %s68, %s69
    %p80 = scmp.eq.s32.totalorder %s13, 0
    %p81 = por %p79, %p80
    %p82 = scmp.ne.s32.totalorder %s68, %s69
    %p83 = scmp.eq.s32.totalorder %s14, 1
    %p84 = por %p82, %p83
    %p86 = scmp.ne.s32.totalorder %s69, %s85
    %p87 = scmp.eq.s32.totalorder %s14, 0
    %p88 = por %p86, %p87
    %p89 = scmp.le.s32.totalorder 1, %s8
    %p90 = scmp.lt.s32.totalorder %s8, 3
    %p91 = pnand %p89, %p90
    %p92 = pneg %p91
    // Predicated region
    $region9: #{xblock_forward.5} parent=5 // pred_check
      _
    $region10: #{xblock_forward.5} parent=5 // pred_check_branch
      %94 = sbr.rel (%p91) target = $region12
    $region11: #{xblock_forward.5} parent=5 // pred_region
      %s95 = ssub.s32 %s8, 1
      // Predicated region
      $region13: #{xblock_forward.5} parent=11 // pred_check
        %p96 = pneg %p55
      $region14: #{xblock_forward.5} parent=11 // pred_check_branch
        %98 = sbr.rel (%p96) target = $region16
      $region15: #{xblock_forward.5} parent=11 // pred_region
        _
      $region16: #{xblock_forward.5} parent=11 // pred_fallthru
        _
    $region12: #{xblock_forward.5} parent=5 // pred_fallthru
      _
    %p99 = scmp.lt.s32.totalorder %s8, 2
    // Predicated region
    $region17: #{xblock_forward.5} parent=5 // pred_check
      %p100 = pneg %p99
    $region18: #{xblock_forward.5} parent=5 // pred_check_branch
      %102 = sbr.rel (%p100) target = $region20
    $region19: #{xblock_forward.5} parent=5 // pred_region
      // Predicated region
      $region21: #{xblock_forward.5} parent=19 // pred_check
        %p103 = pneg %p28
      $region22: #{xblock_forward.5} parent=19 // pred_check_branch
        %105 = sbr.rel (%p103) target = $region24
      $region23: #{xblock_forward.5} parent=19 // pred_region
        %s106 = smul.u32 32, %s8
        %p107 = scmp.lt.s32.totalorder %s106, 63
        %s108 = scalar_select %p107, %s106, 63
        %s109 = smul.addr %s108, 4
        %s110 = scalar_lea.vmem %s0, %s109
        %s111 = smul.u32 32, %s8
      $region24: #{xblock_forward.5} parent=19 // pred_fallthru
        _
    $region20: #{xblock_forward.5} parent=5 // pred_fallthru
      _
    %p112 = scmp.le.s32.totalorder 1, %s8
    %p113 = scmp.lt.s32.totalorder %s8, 3
    %p114 = pnand %p112, %p113
    %p115 = pneg %p114
    // Predicated region
    $region25: #{xblock_forward.5} parent=5 // pred_check
      _
    $region26: #{xblock_forward.5} parent=5 // pred_check_branch
      %117 = sbr.rel (%p114) target = $region28
    $region27: #{xblock_forward.5} parent=5 // pred_region
      %s118 = ssub.s32 %s8, 1
      %s119 = smul.u32 32, %s13
      %p120 = scmp.lt.s32.totalorder %s119, 63
      %s121 = scalar_select %p120, %s119, 63
      %s122 = smul.addr %s121, 4
      %s123 = scalar_lea.vmem %s0, %s122
      %p124 = pneg %p34
      %p125 = pneg %p31
      %p126 = pneg %p55
      %p127 = pneg %p52
      %p128 = pneg %p81
      %p129 = pneg %p78
      %p130 = scmp.lt.s32.totalorder %s13, 1
      %s131 = scalar_select %p130, %s13, 1
      %s132 = smul.addr %s131, 2
      %s133 = scalar_lea.vmem %s2, %s132
      %s134 = smul.u32 32, %s13
      %p135 = scmp.lt.s32.totalorder %s134, 63
      %s136 = scalar_select %p135, %s134, 63
      %s137 = smul.addr %s136, 4
      %s138 = scalar_lea.vmem %s0, %s137
      %s139 = smul.u32 32, %s13
      %p140 = scmp.lt.s32.totalorder %s13, 1
      %s141 = scalar_select %p140, %s13, 1
      %s142 = smul.addr %s141, 2
      %s143 = scalar_lea.vmem %s2, %s142
      %v145 = vld [vmem:[%s138] sm:$0xf]
      %v146 = vld [vmem:[%s138 + $0x4] sm:$0xf]
      %v147 = vld [vmem:[%s138 + $0x8] sm:$0xf]
      %v148 = vld [vmem:[%s138 + $0xc] sm:$0xf]
      %v149 = vld [vmem:[%s138 + $0x10] sm:$0xf]
      %v150 = vld [vmem:[%s138 + $0x14] sm:$0xf]
      %v151 = vld [vmem:[%s138 + $0x18] sm:$0xf]
      %v152 = vld [vmem:[%s138 + $0x1c] sm:$0xf]
      %v153 = vld [vmem:[%s138 + $0x20] sm:$0xf]
      %v154 = vld [vmem:[%s138 + $0x24] sm:$0xf]
      %v155 = vld [vmem:[%s138 + $0x28] sm:$0xf]
      %v156 = vld [vmem:[%s138 + $0x2c] sm:$0xf]
      %v157 = vld [vmem:[%s138 + $0x30] sm:$0xf]
      %v158 = vld [vmem:[%s138 + $0x34] sm:$0xf]
      %v159 = vld [vmem:[%s138 + $0x38] sm:$0xf]
      %v160 = vld [vmem:[%s138 + $0x3c] sm:$0xf]
      %v161 = vld [vmem:[%s138 + $0x40] sm:$0xf]
      %v162 = vld [vmem:[%s138 + $0x44] sm:$0xf]
      %v163 = vld [vmem:[%s138 + $0x48] sm:$0xf]
      %v164 = vld [vmem:[%s138 + $0x4c] sm:$0xf]
      %v165 = vld [vmem:[%s138 + $0x50] sm:$0xf]
      %v166 = vld [vmem:[%s138 + $0x54] sm:$0xf]
      %v167 = vld [vmem:[%s138 + $0x58] sm:$0xf]
      %v168 = vld [vmem:[%s138 + $0x5c] sm:$0xf]
      %v169 = vld [vmem:[%s138 + $0x60] sm:$0xf]
      %v170 = vld [vmem:[%s138 + $0x64] sm:$0xf]
      %v171 = vld [vmem:[%s138 + $0x68] sm:$0xf]
      %v172 = vld [vmem:[%s138 + $0x6c] sm:$0xf]
      %v173 = vld [vmem:[%s138 + $0x70] sm:$0xf]
      %v174 = vld [vmem:[%s138 + $0x74] sm:$0xf]
      %v175 = vld [vmem:[%s138 + $0x78] sm:$0xf]
      %v176 = vld [vmem:[%s138 + $0x7c] sm:$0xf]
      %v177 = vld [vmem:[%s1] sm:$0x3]
      %v210 = vunpack.c.l.b16 %v145
      %v211 = vunpack.c.l.b16 %v146
      %v212 = vunpack.c.l.b16 %v147
      %v213 = vunpack.c.l.b16 %v148
      %v214 = vunpack.c.l.b16 %v149
      %v215 = vunpack.c.l.b16 %v150
      %v216 = vunpack.c.l.b16 %v151
      %v217 = vunpack.c.l.b16 %v152
      %v218 = vunpack.c.l.b16 %v153
      %v219 = vunpack.c.l.b16 %v154
      %v220 = vunpack.c.l.b16 %v155
      %v221 = vunpack.c.l.b16 %v156
      %v222 = vunpack.c.l.b16 %v157
      %v223 = vunpack.c.l.b16 %v158
      %v224 = vunpack.c.l.b16 %v159
      %v225 = vunpack.c.l.b16 %v160
      %v226 = vunpack.c.l.b16 %v161
      %v227 = vunpack.c.l.b16 %v162
      %v228 = vunpack.c.l.b16 %v163
      %v229 = vunpack.c.l.b16 %v164
      %v230 = vunpack.c.l.b16 %v165
      %v231 = vunpack.c.l.b16 %v166
      %v232 = vunpack.c.l.b16 %v167
      %v233 = vunpack.c.l.b16 %v168
      %v234 = vunpack.c.l.b16 %v169
      %v235 = vunpack.c.l.b16 %v170
      %v236 = vunpack.c.l.b16 %v171
      %v237 = vunpack.c.l.b16 %v172
      %v238 = vunpack.c.l.b16 %v173
      %v239 = vunpack.c.l.b16 %v174
      %v240 = vunpack.c.l.b16 %v175
      %v241 = vunpack.c.l.b16 %v176
      %v242 = vpack.c.b16 %v211, %v210
      %v243 = vpack.c.b16 %v213, %v212
      %v244 = vpack.c.b16 %v215, %v214
      %v245 = vpack.c.b16 %v217, %v216
      %v246 = vpack.c.b16 %v219, %v218
      %v247 = vpack.c.b16 %v221, %v220
      %v248 = vpack.c.b16 %v223, %v222
      %v249 = vpack.c.b16 %v225, %v224
      %v250 = vpack.c.b16 %v227, %v226
      %v251 = vpack.c.b16 %v229, %v228
      %v252 = vpack.c.b16 %v231, %v230
      %v253 = vpack.c.b16 %v233, %v232
      %v254 = vpack.c.b16 %v235, %v234
      %v255 = vpack.c.b16 %v237, %v236
      %v256 = vpack.c.b16 %v239, %v238
      %v257 = vpack.c.b16 %v241, %v240
      %vm258 = vcmask 31744
      %v260 = vsel %vm258, %v242, 0
      %v263 = vsel %vm258, %v243, 0
      %v266 = vsel %vm258, %v244, 0
      %v269 = vsel %vm258, %v245, 0
      %v272 = vsel %vm258, %v246, 0
      %v275 = vsel %vm258, %v247, 0
      %v278 = vsel %vm258, %v248, 0
      %v281 = vsel %vm258, %v249, 0
      %v284 = vsel %vm258, %v250, 0
      %v287 = vsel %vm258, %v251, 0
      %v290 = vsel %vm258, %v252, 0
      %v293 = vsel %vm258, %v253, 0
      %v296 = vsel %vm258, %v254, 0
      %v299 = vsel %vm258, %v255, 0
      %v302 = vsel %vm258, %v256, 0
      %v305 = vsel %vm258, %v257, 0
      %vm307 = vcmask 1041408
      %v309 = vsel %vm307, %v177, 0
      %311 = vmatprep.subr.bf16.mxu0 0
      %312 = vmatpush1.bf16.msra.mxu0 0
      %313 = vmatprep.subr.bf16.mxu0 0
      %314 = vmatpush1.bf16.msra.mxu0 0
      %315 = vmatprep.subr.bf16.mxu0 0
      %316 = vmatpush1.bf16.msra.mxu0 0
      %317 = vmatprep.subr.bf16.mxu0 0
      %318 = vmatpush1.bf16.msra.mxu0 0
      %319 = vmatprep.subr.bf16.mxu0 0
      %320 = vmatpush1.bf16.msra.mxu0 0
      %321 = vmatprep.subr.bf16.mxu0 0
      %322 = vmatpush1.bf16.msra.mxu0 0
      %323 = vmatprep.subr.bf16.mxu0 0
      %324 = vmatpush1.bf16.msra.mxu0 0
      %325 = vmatprep.subr.bf16.mxu0 0
      %326 = vmatpush1.bf16.msra.mxu0 %v309
      %327 = vmatprep.subr.bf16.mxu0 0
      %328 = vmatpush2.bf16.msra.mxu0 0
      %329 = vmatprep.subr.bf16.mxu0 0
      %330 = vmatpush2.bf16.msra.mxu0 0
      %331 = vmatprep.subr.bf16.mxu0 0
      %332 = vmatpush2.bf16.msra.mxu0 0
      %333 = vmatprep.subr.bf16.mxu0 0
      %334 = vmatpush2.bf16.msra.mxu0 0
      %335 = vmatprep.subr.bf16.mxu0 0
      %336 = vmatpush2.bf16.msra.mxu0 0
      %337 = vmatprep.subr.bf16.mxu0 0
      %338 = vmatpush2.bf16.msra.mxu0 0
      %339 = vmatprep.subr.bf16.mxu0 0
      %340 = vmatpush2.bf16.msra.mxu0 0
      %341 = vmatprep.subr.bf16.mxu0 0
      %342 = vmatpush2.bf16.msra.mxu0 0
      %343 = vmatprep.mubr.bf16.mxu0 0
      %344 = vmatmul.mubr.bf16.gmra.mxu0 %v260
      %v345 = vpop.f32.mrf.mxu0
      %v346 = vadd.f32 0.0, %v345
      %v347 = vpop.f32.mrf.mxu0
      %v348 = vpop.f32.mrf.mxu0
      %v349 = vadd.f32 0.0, %v348
      %v350 = vpop.f32.mrf.mxu0
      %351 = vmatprep.mubr.bf16.mxu0 0
      %352 = vmatmul.mubr.bf16.gmra.mxu0 %v263
      %v353 = vpop.f32.mrf.mxu0
      %v354 = vadd.f32 0.0, %v353
      %v355 = vpop.f32.mrf.mxu0
      %v356 = vpop.f32.mrf.mxu0
      %v357 = vadd.f32 0.0, %v356
      %v358 = vpop.f32.mrf.mxu0
      %359 = vmatprep.mubr.bf16.mxu0 0
      %360 = vmatmul.mubr.bf16.gmra.mxu0 %v266
      %v361 = vpop.f32.mrf.mxu0
      %v362 = vadd.f32 0.0, %v361
      %v363 = vpop.f32.mrf.mxu0
      %v364 = vpop.f32.mrf.mxu0
      %v365 = vadd.f32 0.0, %v364
      %v366 = vpop.f32.mrf.mxu0
      %367 = vmatprep.mubr.bf16.mxu0 0
      %368 = vmatmul.mubr.bf16.gmra.mxu0 %v269
      %v369 = vpop.f32.mrf.mxu0
      %v370 = vadd.f32 0.0, %v369
      %v371 = vpop.f32.mrf.mxu0
      %v372 = vpop.f32.mrf.mxu0
      %v373 = vadd.f32 0.0, %v372
      %v374 = vpop.f32.mrf.mxu0
      %375 = vmatprep.mubr.bf16.mxu0 0
      %376 = vmatmul.mubr.bf16.gmra.mxu0 %v272
      %v377 = vpop.f32.mrf.mxu0
      %v378 = vadd.f32 0.0, %v377
      %v379 = vpop.f32.mrf.mxu0
      %v380 = vpop.f32.mrf.mxu0
      %v381 = vadd.f32 0.0, %v380
      %v382 = vpop.f32.mrf.mxu0
      %383 = vmatprep.mubr.bf16.mxu0 0
      %384 = vmatmul.mubr.bf16.gmra.mxu0 %v275
      %v385 = vpop.f32.mrf.mxu0
      %v386 = vadd.f32 0.0, %v385
      %v387 = vpop.f32.mrf.mxu0
      %v388 = vpop.f32.mrf.mxu0
      %v389 = vadd.f32 0.0, %v388
      %v390 = vpop.f32.mrf.mxu0
      %391 = vmatprep.mubr.bf16.mxu0 0
      %392 = vmatmul.mubr.bf16.gmra.mxu0 %v278
      %v393 = vpop.f32.mrf.mxu0
      %v394 = vadd.f32 0.0, %v393
      %v395 = vpop.f32.mrf.mxu0
      %v396 = vpop.f32.mrf.mxu0
      %v397 = vadd.f32 0.0, %v396
      %v398 = vpop.f32.mrf.mxu0
      %399 = vmatprep.mubr.bf16.mxu0 0
      %400 = vmatmul.mubr.bf16.gmra.mxu0 %v281
      %v401 = vpop.f32.mrf.mxu0
      %v402 = vadd.f32 0.0, %v401
      %v403 = vpop.f32.mrf.mxu0
      %v404 = vpop.f32.mrf.mxu0
      %v405 = vadd.f32 0.0, %v404
      %v406 = vpop.f32.mrf.mxu0
      %407 = vmatprep.mubr.bf16.mxu0 0
      %408 = vmatmul.mubr.bf16.gmra.mxu0 %v284
      %v409 = vpop.f32.mrf.mxu0
      %v410 = vadd.f32 0.0, %v409
      %v411 = vpop.f32.mrf.mxu0
      %v412 = vpop.f32.mrf.mxu0
      %v413 = vadd.f32 0.0, %v412
      %v414 = vpop.f32.mrf.mxu0
      %415 = vmatprep.mubr.bf16.mxu0 0
      %416 = vmatmul.mubr.bf16.gmra.mxu0 %v287
      %v417 = vpop.f32.mrf.mxu0
      %v418 = vadd.f32 0.0, %v417
      %v419 = vpop.f32.mrf.mxu0
      %v420 = vpop.f32.mrf.mxu0
      %v421 = vadd.f32 0.0, %v420
      %v422 = vpop.f32.mrf.mxu0
      %423 = vmatprep.mubr.bf16.mxu0 0
      %424 = vmatmul.mubr.bf16.gmra.mxu0 %v290
      %v425 = vpop.f32.mrf.mxu0
      %v426 = vadd.f32 0.0, %v425
      %v427 = vpop.f32.mrf.mxu0
      %v428 = vpop.f32.mrf.mxu0
      %v429 = vadd.f32 0.0, %v428
      %v430 = vpop.f32.mrf.mxu0
      %431 = vmatprep.mubr.bf16.mxu0 0
      %432 = vmatmul.mubr.bf16.gmra.mxu0 %v293
      %v433 = vpop.f32.mrf.mxu0
      %v434 = vadd.f32 0.0, %v433
      %v435 = vpop.f32.mrf.mxu0
      %v436 = vpop.f32.mrf.mxu0
      %v437 = vadd.f32 0.0, %v436
      %v438 = vpop.f32.mrf.mxu0
      %439 = vmatprep.mubr.bf16.mxu0 0
      %440 = vmatmul.mubr.bf16.gmra.mxu0 %v296
      %v441 = vpop.f32.mrf.mxu0
      %v442 = vadd.f32 0.0, %v441
      %v443 = vpop.f32.mrf.mxu0
      %v444 = vpop.f32.mrf.mxu0
      %v445 = vadd.f32 0.0, %v444
      %v446 = vpop.f32.mrf.mxu0
      %447 = vmatprep.mubr.bf16.mxu0 0
      %448 = vmatmul.mubr.bf16.gmra.mxu0 %v299
      %v449 = vpop.f32.mrf.mxu0
      %v450 = vadd.f32 0.0, %v449
      %v451 = vpop.f32.mrf.mxu0
      %v452 = vpop.f32.mrf.mxu0
      %v453 = vadd.f32 0.0, %v452
      %v454 = vpop.f32.mrf.mxu0
      %455 = vmatprep.mubr.bf16.mxu0 0
      %456 = vmatmul.mubr.bf16.gmra.mxu0 %v302
      %v457 = vpop.f32.mrf.mxu0
      %v458 = vadd.f32 0.0, %v457
      %v459 = vpop.f32.mrf.mxu0
      %v460 = vpop.f32.mrf.mxu0
      %v461 = vadd.f32 0.0, %v460
      %v462 = vpop.f32.mrf.mxu0
      %463 = vmatprep.mubr.bf16.mxu0 0
      %464 = vmatmul.mubr.bf16.gmra.mxu0 %v305
      %v465 = vpop.f32.mrf.mxu0
      %v466 = vadd.f32 0.0, %v465
      %v467 = vpop.f32.mrf.mxu0
      %v468 = vpop.f32.mrf.mxu0
      %v469 = vadd.f32 0.0, %v468
      %v470 = vpop.f32.mrf.mxu0
      %471 = vdwg.mxu0
      %v472 = vsel %vm258, %v346, 0.0
      %v473 = vsel %vm258, %v349, 0.0
      %v474 = vadd.f32 %v472, %v473
      %v475 = vsel %vm258, %v354, 0.0
      %v476 = vadd.f32 %v474, %v475
      %v477 = vsel %vm258, %v357, 0.0
      %v478 = vadd.f32 %v476, %v477
      %v479 = vsel %vm258, %v362, 0.0
      %v480 = vadd.f32 %v478, %v479
      %v481 = vsel %vm258, %v365, 0.0
      %v482 = vadd.f32 %v480, %v481
      %v483 = vsel %vm258, %v370, 0.0
      %v484 = vadd.f32 %v482, %v483
      %v485 = vsel %vm258, %v373, 0.0
      %v486 = vadd.f32 %v484, %v485
      %v487 = vsel %vm258, %v378, 0.0
      %v488 = vadd.f32 %v486, %v487
      %v489 = vsel %vm258, %v381, 0.0
      %v490 = vadd.f32 %v488, %v489
      %v491 = vsel %vm258, %v386, 0.0
      %v492 = vadd.f32 %v490, %v491
      %v493 = vsel %vm258, %v389, 0.0
      %v494 = vadd.f32 %v492, %v493
      %v495 = vsel %vm258, %v394, 0.0
      %v496 = vadd.f32 %v494, %v495
      %v497 = vsel %vm258, %v397, 0.0
      %v498 = vadd.f32 %v496, %v497
      %v499 = vsel %vm258, %v402, 0.0
      %v500 = vadd.f32 %v498, %v499
      %v501 = vsel %vm258, %v405, 0.0
      %v502 = vadd.f32 %v500, %v501
      %v503 = vsel %vm258, %v410, 0.0
      %v504 = vadd.f32 %v502, %v503
      %v505 = vsel %vm258, %v413, 0.0
      %v506 = vadd.f32 %v504, %v505
      %v507 = vsel %vm258, %v418, 0.0
      %v508 = vadd.f32 %v506, %v507
      %v509 = vsel %vm258, %v421, 0.0
      %v510 = vadd.f32 %v508, %v509
      %v511 = vsel %vm258, %v426, 0.0
      %v512 = vadd.f32 %v510, %v511
      %v513 = vsel %vm258, %v429, 0.0
      %v514 = vadd.f32 %v512, %v513
      %v515 = vsel %vm258, %v434, 0.0
      %v516 = vadd.f32 %v514, %v515
      %v517 = vsel %vm258, %v437, 0.0
      %v518 = vadd.f32 %v516, %v517
      %v519 = vsel %vm258, %v442, 0.0
      %v520 = vadd.f32 %v518, %v519
      %v521 = vsel %vm258, %v445, 0.0
      %v522 = vadd.f32 %v520, %v521
      %v523 = vsel %vm258, %v450, 0.0
      %v524 = vadd.f32 %v522, %v523
      %v525 = vsel %vm258, %v453, 0.0
      %v526 = vadd.f32 %v524, %v525
      %v527 = vsel %vm258, %v458, 0.0
      %v528 = vadd.f32 %v526, %v527
      %v529 = vsel %vm258, %v461, 0.0
      %v530 = vadd.f32 %v528, %v529
      %v531 = vsel %vm258, %v466, 0.0
      %v532 = vadd.f32 %v530, %v531
      %v533 = vsel %vm258, %v469, 0.0
      %v534 = vadd.f32 %v532, %v533
      %v535 = vrot.slane %v534, 4
      %v536 = vadd.f32 %v534, %v535
      %v537 = vrot.slane %v536, 2
      %v538 = vadd.f32 %v536, %v537
      %v539 = vrot.slane %v538, 1
      %v540 = vadd.f32 %v538, %v539
      %v541 = vmul.f32 %v346, %v346
      %v542 = vmul.f32 %v349, %v349
      %v543 = vmul.f32 %v354, %v354
      %v544 = vmul.f32 %v357, %v357
      %v545 = vmul.f32 %v362, %v362
      %v546 = vmul.f32 %v365, %v365
      %v547 = vmul.f32 %v370, %v370
      %v548 = vmul.f32 %v373, %v373
      %v549 = vmul.f32 %v378, %v378
      %v550 = vmul.f32 %v381, %v381
      %v551 = vmul.f32 %v386, %v386
      %v552 = vmul.f32 %v389, %v389
      %v553 = vmul.f32 %v394, %v394
      %v554 = vmul.f32 %v397, %v397
      %v555 = vmul.f32 %v402, %v402
      %v556 = vmul.f32 %v405, %v405
      %v557 = vmul.f32 %v410, %v410
      %v558 = vmul.f32 %v413, %v413
      %v559 = vmul.f32 %v418, %v418
      %v560 = vmul.f32 %v421, %v421
      %v561 = vmul.f32 %v426, %v426
      %v562 = vmul.f32 %v429, %v429
      %v563 = vmul.f32 %v434, %v434
      %v564 = vmul.f32 %v437, %v437
      %v565 = vmul.f32 %v442, %v442
      %v566 = vmul.f32 %v445, %v445
      %v567 = vmul.f32 %v450, %v450
      %v568 = vmul.f32 %v453, %v453
      %v569 = vmul.f32 %v458, %v458
      %v570 = vmul.f32 %v461, %v461
      %v571 = vmul.f32 %v466, %v466
      %v572 = vmul.f32 %v469, %v469
      %v573 = vsel %vm258, %v541, 0.0
      %v574 = vsel %vm258, %v542, 0.0
      %v575 = vadd.f32 %v573, %v574
      %v576 = vsel %vm258, %v543, 0.0
      %v577 = vadd.f32 %v575, %v576
      %v578 = vsel %vm258, %v544, 0.0
      %v579 = vadd.f32 %v577, %v578
      %v580 = vsel %vm258, %v545, 0.0
      %v581 = vadd.f32 %v579, %v580
      %v582 = vsel %vm258, %v546, 0.0
      %v583 = vadd.f32 %v581, %v582
      %v584 = vsel %vm258, %v547, 0.0
      %v585 = vadd.f32 %v583, %v584
      %v586 = vsel %vm258, %v548, 0.0
      %v587 = vadd.f32 %v585, %v586
      %v588 = vsel %vm258, %v549, 0.0
      %v589 = vadd.f32 %v587, %v588
      %v590 = vsel %vm258, %v550, 0.0
      %v591 = vadd.f32 %v589, %v590
      %v592 = vsel %vm258, %v551, 0.0
      %v593 = vadd.f32 %v591, %v592
      %v594 = vsel %vm258, %v552, 0.0
      %v595 = vadd.f32 %v593, %v594
      %v596 = vsel %vm258, %v553, 0.0
      %v597 = vadd.f32 %v595, %v596
      %v598 = vsel %vm258, %v554, 0.0
      %v599 = vadd.f32 %v597, %v598
      %v600 = vsel %vm258, %v555, 0.0
      %v601 = vadd.f32 %v599, %v600
      %v602 = vsel %vm258, %v556, 0.0
      %v603 = vadd.f32 %v601, %v602
      %v604 = vsel %vm258, %v557, 0.0
      %v605 = vadd.f32 %v603, %v604
      %v606 = vsel %vm258, %v558, 0.0
      %v607 = vadd.f32 %v605, %v606
      %v608 = vsel %vm258, %v559, 0.0
      %v609 = vadd.f32 %v607, %v608
      %v610 = vsel %vm258, %v560, 0.0
      %v611 = vadd.f32 %v609, %v610
      %v612 = vsel %vm258, %v561, 0.0
      %v613 = vadd.f32 %v611, %v612
      %v614 = vsel %vm258, %v562, 0.0
      %v615 = vadd.f32 %v613, %v614
      %v616 = vsel %vm258, %v563, 0.0
      %v617 = vadd.f32 %v615, %v616
      %v618 = vsel %vm258, %v564, 0.0
      %v619 = vadd.f32 %v617, %v618
      %v620 = vsel %vm258, %v565, 0.0
      %v621 = vadd.f32 %v619, %v620
      %v622 = vsel %vm258, %v566, 0.0
      %v623 = vadd.f32 %v621, %v622
      %v624 = vsel %vm258, %v567, 0.0
      %v625 = vadd.f32 %v623, %v624
      %v626 = vsel %vm258, %v568, 0.0
      %v627 = vadd.f32 %v625, %v626
      %v628 = vsel %vm258, %v569, 0.0
      %v629 = vadd.f32 %v627, %v628
      %v630 = vsel %vm258, %v570, 0.0
      %v631 = vadd.f32 %v629, %v630
      %v632 = vsel %vm258, %v571, 0.0
      %v633 = vadd.f32 %v631, %v632
      %v634 = vsel %vm258, %v572, 0.0
      %v635 = vadd.f32 %v633, %v634
      %v636 = vrot.slane %v635, 4
      %v637 = vadd.f32 %v635, %v636
      %v638 = vrot.slane %v637, 2
      %v639 = vadd.f32 %v637, %v638
      %v640 = vrot.slane %v639, 1
      %v641 = vadd.f32 %v639, %v640
      %vm642 = vcmask 1040384
      %v643 = vsel %vm642, %v540, %v641
      %vm644 = vcmask 25600
      %645 = vst.msk [vmem:[%s143] sm:$0x3] %vm644, %v643
      %p646 = scmp.lt.s32.totalorder %s13, 1
      %s647 = scalar_select %p646, %s13, 1
      %s648 = smul.addr %s647, 2
      %s649 = scalar_lea.vmem %s2, %s648
      // Predicated region
      $region29: #{xblock_forward.5} parent=27 // pred_check
        %p650 = pneg %p78
      $region30: #{xblock_forward.5} parent=27 // pred_check_branch
        %652 = sbr.rel (%p650) target = $region32
      $region31: #{xblock_forward.5} parent=27 // pred_region
        _
      $region32: #{xblock_forward.5} parent=27 // pred_fallthru
        _
    $region28: #{xblock_forward.5} parent=5 // pred_fallthru
      _
    %p653 = scmp.le.s32.totalorder 2, %s8
    // Predicated region
    $region33: #{xblock_forward.5} parent=5 // pred_check
      %p654 = pneg %p653
    $region34: #{xblock_forward.5} parent=5 // pred_check_branch
      %656 = sbr.rel (%p654) target = $region36
    $region35: #{xblock_forward.5} parent=5 // pred_region
      %s657 = ssub.s32 %s8, 2
      // Predicated region
      $region37: #{xblock_forward.5} parent=35 // pred_check
        %p658 = pneg %p84
      $region38: #{xblock_forward.5} parent=35 // pred_check_branch
        %660 = sbr.rel (%p658) target = $region40
      $region39: #{xblock_forward.5} parent=35 // pred_region
        %p661 = scmp.lt.s32.totalorder %s14, 1
        %s662 = scalar_select %p661, %s14, 1
        %s663 = smul.addr %s662, 2
        %s664 = scalar_lea.vmem %s2, %s663
      $region40: #{xblock_forward.5} parent=35 // pred_fallthru
        _
    $region36: #{xblock_forward.5} parent=5 // pred_fallthru
      _
  $region6: #{xblock_forward.5} parent=0 // loop_footer
    %s12 = sadd.s32 1, %s8
  $region7: #{xblock_forward.5} parent=0 // loop_footer_branch
    %7 = sbr.rel target = $region3
  $region8: #{xblock_forward.5} parent=0 // loop_exit
    _

// kernel: xblock_forward.6
$region0: #{xblock_forward.6}
  #allocation0 [shape = 'u32[]', space=smem, size = 0x4, offset = 0x4, fixed_abs, tag = 'smem constant byte address 0x4 - core index']
  #allocation1 [shape = 'u32[144,128]{1,0:T(1,128)}', space=vmem, size = 0x12000, scoped, tag = 'internal scratch']
  %s0 = inlined_call_operand.vmem [shape: bf16[512,4], index: 0, kind: input, shape index: {}]
  %s1 = inlined_call_operand.vmem [shape: bf16[4,4], index: 1, kind: input, shape index: {}]
  %s2 = inlined_call_operand.vmem [shape: f32[1,4], index: 2, kind: input, shape index: {}]
  %s3 = inlined_call_operand.vmem [shape: f32[1,4], index: 3, kind: input, shape index: {}]
  %s4 = inlined_call_operand.vmem [shape: bf16[512,4], index: 4, kind: output, shape index: {}]
  %s5 = sld [smem:[#allocation0]]
  $region49: #{xblock_forward.6} parent=0
    _
  %s7 = ssub.s32 1, %s5
  %s8 = scalar_select 0, %s7, %s5
  loop: start=0, step=1, limit=4
  $region2: #{xblock_forward.6} parent=0 // loop_pre_header
    _
  $region3: #{xblock_forward.6} parent=0 // loop_header
    %s10 = sphi 0, %s14
    %p11 = scmp.ge.s32.totalorder %s10, 4
    %s20 = sphi 0, %s22
    %s23 = sphi 0, %s20
    %s24 = sphi 0, %s23
    %s40 = sphi 0, %s24
    %s44 = sphi 0, %s44
    %s46 = sphi 0, %s44
    %s47 = sphi 0, %s46
    %s61 = sphi 0, %s47
    %s65 = sphi 0, %s65
    %s67 = sphi 0, %s65
    %s68 = sphi 0, %s67
    %s82 = sphi 0, %s68
    %s86 = sphi 0, %s86
    %s88 = sphi 0, %s86
    %s89 = sphi 0, %s88
    %s103 = sphi 0, %s89
    %s109 = sphi 0, %s111
    %s112 = sphi 0, %s109
    %s113 = sphi 0, %s112
    %s129 = sphi 0, %s113
  $region4: #{xblock_forward.6} parent=0 // loop_header_branch
    %13 = sbr.rel (%p11) target = $region8
  $region5: #{xblock_forward.6} parent=0 // loop_body
    %s15 = ssub.s32 %s10, 1
    %s16 = ssub.s32 %s10, 2
    %s17 = sadd.s32 %s10, 1
    %s18 = ssub.s32 %s10, %s17
    %p19 = scmp.eq.s32.totalorder %s18, 0
    %s21 = sadd.s32 %s20, 1
    %s22 = scalar_select %p19, %s20, %s21
    %p25 = pneg %p19
    %p26 = scmp.eq.s32.totalorder %s10, 1
    %p27 = por %p25, %p26
    %p28 = scmp.ne.s32.totalorder %s20, %s23
    %p29 = scmp.eq.s32.totalorder %s10, 0
    %p30 = por %p28, %p29
    %p31 = scmp.ne.s32.totalorder %s20, %s23
    %p32 = scmp.eq.s32.totalorder %s15, 1
    %p33 = por %p31, %p32
    %p34 = scmp.ne.s32.totalorder %s23, %s24
    %p35 = scmp.eq.s32.totalorder %s15, 0
    %p36 = por %p34, %p35
    %p37 = scmp.ne.s32.totalorder %s23, %s24
    %p38 = scmp.eq.s32.totalorder %s16, 1
    %p39 = por %p37, %p38
    %p41 = scmp.ne.s32.totalorder %s24, %s40
    %p42 = scmp.eq.s32.totalorder %s16, 0
    %p43 = por %p41, %p42
    %s45 = sadd.s32 %s44, 1
    %p48 = scmp.eq.s32.totalorder %s10, 1
    %p49 = scmp.ne.s32.totalorder %s44, %s46
    %p50 = scmp.eq.s32.totalorder %s10, 0
    %p51 = por %p49, %p50
    %p52 = scmp.ne.s32.totalorder %s44, %s46
    %p53 = scmp.eq.s32.totalorder %s15, 1
    %p54 = por %p52, %p53
    %p55 = scmp.ne.s32.totalorder %s46, %s47
    %p56 = scmp.eq.s32.totalorder %s15, 0
    %p57 = por %p55, %p56
    %p58 = scmp.ne.s32.totalorder %s46, %s47
    %p59 = scmp.eq.s32.totalorder %s16, 1
    %p60 = por %p58, %p59
    %p62 = scmp.ne.s32.totalorder %s47, %s61
    %p63 = scmp.eq.s32.totalorder %s16, 0
    %p64 = por %p62, %p63
    %s66 = sadd.s32 %s65, 1
    %p69 = scmp.eq.s32.totalorder %s10, 1
    %p70 = scmp.ne.s32.totalorder %s65, %s67
    %p71 = scmp.eq.s32.totalorder %s10, 0
    %p72 = por %p70, %p71
    %p73 = scmp.ne.s32.totalorder %s65, %s67
    %p74 = scmp.eq.s32.totalorder %s15, 1
    %p75 = por %p73, %p74
    %p76 = scmp.ne.s32.totalorder %s67, %s68
    %p77 = scmp.eq.s32.totalorder %s15, 0
    %p78 = por %p76, %p77
    %p79 = scmp.ne.s32.totalorder %s67, %s68
    %p80 = scmp.eq.s32.totalorder %s16, 1
    %p81 = por %p79, %p80
    %p83 = scmp.ne.s32.totalorder %s68, %s82
    %p84 = scmp.eq.s32.totalorder %s16, 0
    %p85 = por %p83, %p84
    %s87 = sadd.s32 %s86, 1
    %p90 = scmp.eq.s32.totalorder %s10, 1
    %p91 = scmp.ne.s32.totalorder %s86, %s88
    %p92 = scmp.eq.s32.totalorder %s10, 0
    %p93 = por %p91, %p92
    %p94 = scmp.ne.s32.totalorder %s86, %s88
    %p95 = scmp.eq.s32.totalorder %s15, 1
    %p96 = por %p94, %p95
    %p97 = scmp.ne.s32.totalorder %s88, %s89
    %p98 = scmp.eq.s32.totalorder %s15, 0
    %p99 = por %p97, %p98
    %p100 = scmp.ne.s32.totalorder %s88, %s89
    %p101 = scmp.eq.s32.totalorder %s16, 1
    %p102 = por %p100, %p101
    %p104 = scmp.ne.s32.totalorder %s89, %s103
    %p105 = scmp.eq.s32.totalorder %s16, 0
    %p106 = por %p104, %p105
    %s107 = ssub.s32 %s10, %s17
    %p108 = scmp.eq.s32.totalorder %s107, 0
    %s110 = sadd.s32 %s109, 1
    %s111 = scalar_select %p108, %s109, %s110
    %p114 = pneg %p108
    %p115 = scmp.eq.s32.totalorder %s10, 1
    %p116 = por %p114, %p115
    %p117 = scmp.ne.s32.totalorder %s109, %s112
    %p118 = scmp.eq.s32.totalorder %s10, 0
    %p119 = por %p117, %p118
    %p120 = scmp.ne.s32.totalorder %s109, %s112
    %p121 = scmp.eq.s32.totalorder %s15, 1
    %p122 = por %p120, %p121
    %p123 = scmp.ne.s32.totalorder %s112, %s113
    %p124 = scmp.eq.s32.totalorder %s15, 0
    %p125 = por %p123, %p124
    %p126 = scmp.ne.s32.totalorder %s112, %s113
    %p127 = scmp.eq.s32.totalorder %s16, 1
    %p128 = por %p126, %p127
    %p130 = scmp.ne.s32.totalorder %s113, %s129
    %p131 = scmp.eq.s32.totalorder %s16, 0
    %p132 = por %p130, %p131
    %p133 = scmp.le.s32.totalorder 1, %s10
    %p134 = scmp.lt.s32.totalorder %s10, 3
    %p135 = pnand %p133, %p134
    %p136 = pneg %p135
    // Predicated region
    $region9: #{xblock_forward.6} parent=5 // pred_check
      _
    $region10: #{xblock_forward.6} parent=5 // pred_check_branch
      %138 = sbr.rel (%p135) target = $region12
    $region11: #{xblock_forward.6} parent=5 // pred_region
      %s139 = ssub.s32 %s10, 1
      // Predicated region
      $region13: #{xblock_forward.6} parent=11 // pred_check
        %p140 = pneg %p57
      $region14: #{xblock_forward.6} parent=11 // pred_check_branch
        %142 = sbr.rel (%p140) target = $region16
      $region15: #{xblock_forward.6} parent=11 // pred_region
        _
      $region16: #{xblock_forward.6} parent=11 // pred_fallthru
        _
      // Predicated region
      $region17: #{xblock_forward.6} parent=11 // pred_check
        %p143 = pneg %p78
      $region18: #{xblock_forward.6} parent=11 // pred_check_branch
        %145 = sbr.rel (%p143) target = $region20
      $region19: #{xblock_forward.6} parent=11 // pred_region
        _
      $region20: #{xblock_forward.6} parent=11 // pred_fallthru
        _
      // Predicated region
      $region21: #{xblock_forward.6} parent=11 // pred_check
        %p146 = pneg %p99
      $region22: #{xblock_forward.6} parent=11 // pred_check_branch
        %148 = sbr.rel (%p146) target = $region24
      $region23: #{xblock_forward.6} parent=11 // pred_region
        _
      $region24: #{xblock_forward.6} parent=11 // pred_fallthru
        _
    $region12: #{xblock_forward.6} parent=5 // pred_fallthru
      _
    %p149 = scmp.lt.s32.totalorder %s10, 2
    // Predicated region
    $region25: #{xblock_forward.6} parent=5 // pred_check
      %p150 = pneg %p149
    $region26: #{xblock_forward.6} parent=5 // pred_check_branch
      %152 = sbr.rel (%p150) target = $region28
    $region27: #{xblock_forward.6} parent=5 // pred_region
      // Predicated region
      $region29: #{xblock_forward.6} parent=27 // pred_check
        %p153 = pneg %p30
      $region30: #{xblock_forward.6} parent=27 // pred_check_branch
        %155 = sbr.rel (%p153) target = $region32
      $region31: #{xblock_forward.6} parent=27 // pred_region
        %s156 = smul.u32 32, %s10
        %p157 = scmp.lt.s32.totalorder %s156, 63
        %s158 = scalar_select %p157, %s156, 63
        %s159 = smul.addr %s158, 4
        %s160 = scalar_lea.vmem %s0, %s159
        %s161 = smul.u32 32, %s10
      $region32: #{xblock_forward.6} parent=27 // pred_fallthru
        _
    $region28: #{xblock_forward.6} parent=5 // pred_fallthru
      _
    %p162 = scmp.le.s32.totalorder 1, %s10
    %p163 = scmp.lt.s32.totalorder %s10, 3
    %p164 = pnand %p162, %p163
    %p165 = pneg %p164
    // Predicated region
    $region33: #{xblock_forward.6} parent=5 // pred_check
      _
    $region34: #{xblock_forward.6} parent=5 // pred_check_branch
      %167 = sbr.rel (%p164) target = $region36
    $region35: #{xblock_forward.6} parent=5 // pred_region
      %s168 = ssub.s32 %s10, 1
      %s169 = smul.u32 32, %s15
      %p170 = scmp.lt.s32.totalorder %s169, 63
      %s171 = scalar_select %p170, %s169, 63
      %s172 = smul.addr %s171, 4
      %s173 = scalar_lea.vmem %s0, %s172
      %p174 = pneg %p36
      %p175 = pneg %p33
      %p176 = pneg %p57
      %p177 = pneg %p54
      %p178 = pneg %p78
      %p179 = pneg %p75
      %p180 = pneg %p99
      %p181 = pneg %p96
      %p182 = pneg %p125
      %p183 = pneg %p122
      %s184 = smul.u32 32, %s15
      %p185 = scmp.lt.s32.totalorder %s184, 63
      %s186 = scalar_select %p185, %s184, 63
      %s187 = smul.addr %s186, 4
      %s188 = scalar_lea.vmem %s4, %s187
      %s189 = smul.u32 32, %s15
      %p190 = scmp.lt.s32.totalorder %s189, 63
      %s191 = scalar_select %p190, %s189, 63
      %s192 = smul.addr %s191, 4
      %s193 = scalar_lea.vmem %s0, %s192
      %s194 = smul.u32 32, %s15
      %s195 = smul.u32 32, %s15
      %p196 = scmp.lt.s32.totalorder %s195, 63
      %s197 = scalar_select %p196, %s195, 63
      %s198 = smul.addr %s197, 4
      %s199 = scalar_lea.vmem %s4, %s198
      %s200 = smul.u32 32, %s15
      %v202 = vld [vmem:[%s193] sm:$0xf]
      %v203 = vld [vmem:[%s193 + $0x4] sm:$0xf]
      %v204 = vld [vmem:[%s193 + $0x8] sm:$0xf]
      %v205 = vld [vmem:[%s193 + $0xc] sm:$0xf]
      %v206 = vld [vmem:[%s193 + $0x10] sm:$0xf]
      %v207 = vld [vmem:[%s193 + $0x14] sm:$0xf]
      %v208 = vld [vmem:[%s193 + $0x18] sm:$0xf]
      %v209 = vld [vmem:[%s193 + $0x1c] sm:$0xf]
      %v210 = vld [vmem:[%s193 + $0x20] sm:$0xf]
      %v211 = vld [vmem:[%s193 + $0x24] sm:$0xf]
      %v212 = vld [vmem:[%s193 + $0x28] sm:$0xf]
      %v213 = vld [vmem:[%s193 + $0x2c] sm:$0xf]
      %v214 = vld [vmem:[%s193 + $0x30] sm:$0xf]
      %v215 = vld [vmem:[%s193 + $0x34] sm:$0xf]
      %v216 = vld [vmem:[%s193 + $0x38] sm:$0xf]
      %v217 = vld [vmem:[%s193 + $0x3c] sm:$0xf]
      %v218 = vld [vmem:[%s193 + $0x40] sm:$0xf]
      %v219 = vld [vmem:[%s193 + $0x44] sm:$0xf]
      %v220 = vld [vmem:[%s193 + $0x48] sm:$0xf]
      %v221 = vld [vmem:[%s193 + $0x4c] sm:$0xf]
      %v222 = vld [vmem:[%s193 + $0x50] sm:$0xf]
      %v223 = vld [vmem:[%s193 + $0x54] sm:$0xf]
      %v224 = vld [vmem:[%s193 + $0x58] sm:$0xf]
      %v225 = vld [vmem:[%s193 + $0x5c] sm:$0xf]
      %v226 = vld [vmem:[%s193 + $0x60] sm:$0xf]
      %v227 = vld [vmem:[%s193 + $0x64] sm:$0xf]
      %v228 = vld [vmem:[%s193 + $0x68] sm:$0xf]
      %v229 = vld [vmem:[%s193 + $0x6c] sm:$0xf]
      %v230 = vld [vmem:[%s193 + $0x70] sm:$0xf]
      %v231 = vld [vmem:[%s193 + $0x74] sm:$0xf]
      %v232 = vld [vmem:[%s193 + $0x78] sm:$0xf]
      %v233 = vld [vmem:[%s193 + $0x7c] sm:$0xf]
      %v234 = vld [vmem:[%s1] sm:$0x3]
      %v267 = vunpack.c.l.b16 %v202
      %v268 = vunpack.c.l.b16 %v203
      %v269 = vunpack.c.l.b16 %v204
      %v270 = vunpack.c.l.b16 %v205
      %v271 = vunpack.c.l.b16 %v206
      %v272 = vunpack.c.l.b16 %v207
      %v273 = vunpack.c.l.b16 %v208
      %v274 = vunpack.c.l.b16 %v209
      %v275 = vunpack.c.l.b16 %v210
      %v276 = vunpack.c.l.b16 %v211
      %v277 = vunpack.c.l.b16 %v212
      %v278 = vunpack.c.l.b16 %v213
      %v279 = vunpack.c.l.b16 %v214
      %v280 = vunpack.c.l.b16 %v215
      %v281 = vunpack.c.l.b16 %v216
      %v282 = vunpack.c.l.b16 %v217
      %v283 = vunpack.c.l.b16 %v218
      %v284 = vunpack.c.l.b16 %v219
      %v285 = vunpack.c.l.b16 %v220
      %v286 = vunpack.c.l.b16 %v221
      %v287 = vunpack.c.l.b16 %v222
      %v288 = vunpack.c.l.b16 %v223
      %v289 = vunpack.c.l.b16 %v224
      %v290 = vunpack.c.l.b16 %v225
      %v291 = vunpack.c.l.b16 %v226
      %v292 = vunpack.c.l.b16 %v227
      %v293 = vunpack.c.l.b16 %v228
      %v294 = vunpack.c.l.b16 %v229
      %v295 = vunpack.c.l.b16 %v230
      %v296 = vunpack.c.l.b16 %v231
      %v297 = vunpack.c.l.b16 %v232
      %v298 = vunpack.c.l.b16 %v233
      %v299 = vpack.c.b16 %v268, %v267
      %v300 = vpack.c.b16 %v270, %v269
      %v301 = vpack.c.b16 %v272, %v271
      %v302 = vpack.c.b16 %v274, %v273
      %v303 = vpack.c.b16 %v276, %v275
      %v304 = vpack.c.b16 %v278, %v277
      %v305 = vpack.c.b16 %v280, %v279
      %v306 = vpack.c.b16 %v282, %v281
      %v307 = vpack.c.b16 %v284, %v283
      %v308 = vpack.c.b16 %v286, %v285
      %v309 = vpack.c.b16 %v288, %v287
      %v310 = vpack.c.b16 %v290, %v289
      %v311 = vpack.c.b16 %v292, %v291
      %v312 = vpack.c.b16 %v294, %v293
      %v313 = vpack.c.b16 %v296, %v295
      %v314 = vpack.c.b16 %v298, %v297
      %vm315 = vcmask 31744
      %v317 = vsel %vm315, %v299, 0
      %v320 = vsel %vm315, %v300, 0
      %v323 = vsel %vm315, %v301, 0
      %v326 = vsel %vm315, %v302, 0
      %v329 = vsel %vm315, %v303, 0
      %v332 = vsel %vm315, %v304, 0
      %v335 = vsel %vm315, %v305, 0
      %v338 = vsel %vm315, %v306, 0
      %v341 = vsel %vm315, %v307, 0
      %v344 = vsel %vm315, %v308, 0
      %v347 = vsel %vm315, %v309, 0
      %v350 = vsel %vm315, %v310, 0
      %v353 = vsel %vm315, %v311, 0
      %v356 = vsel %vm315, %v312, 0
      %v359 = vsel %vm315, %v313, 0
      %v362 = vsel %vm315, %v314, 0
      %vm364 = vcmask 1041408
      %v366 = vsel %vm364, %v234, 0
      %368 = vmatprep.subr.bf16.mxu0 0
      %369 = vmatpush1.bf16.msra.mxu0 0
      %370 = vmatprep.subr.bf16.mxu0 0
      %371 = vmatpush1.bf16.msra.mxu0 0
      %372 = vmatprep.subr.bf16.mxu0 0
      %373 = vmatpush1.bf16.msra.mxu0 0
      %374 = vmatprep.subr.bf16.mxu0 0
      %375 = vmatpush1.bf16.msra.mxu0 0
      %376 = vmatprep.subr.bf16.mxu0 0
      %377 = vmatpush1.bf16.msra.mxu0 0
      %378 = vmatprep.subr.bf16.mxu0 0
      %379 = vmatpush1.bf16.msra.mxu0 0
      %380 = vmatprep.subr.bf16.mxu0 0
      %381 = vmatpush1.bf16.msra.mxu0 0
      %382 = vmatprep.subr.bf16.mxu0 0
      %383 = vmatpush1.bf16.msra.mxu0 %v366
      %384 = vmatprep.subr.bf16.mxu0 0
      %385 = vmatpush2.bf16.msra.mxu0 0
      %386 = vmatprep.subr.bf16.mxu0 0
      %387 = vmatpush2.bf16.msra.mxu0 0
      %388 = vmatprep.subr.bf16.mxu0 0
      %389 = vmatpush2.bf16.msra.mxu0 0
      %390 = vmatprep.subr.bf16.mxu0 0
      %391 = vmatpush2.bf16.msra.mxu0 0
      %392 = vmatprep.subr.bf16.mxu0 0
      %393 = vmatpush2.bf16.msra.mxu0 0
      %394 = vmatprep.subr.bf16.mxu0 0
      %395 = vmatpush2.bf16.msra.mxu0 0
      %396 = vmatprep.subr.bf16.mxu0 0
      %397 = vmatpush2.bf16.msra.mxu0 0
      %398 = vmatprep.subr.bf16.mxu0 0
      %399 = vmatpush2.bf16.msra.mxu0 0
      %400 = vmatprep.mubr.bf16.mxu0 0
      %401 = vmatmul.mubr.bf16.gmra.mxu0 %v317
      %v402 = vpop.f32.mrf.mxu0
      %v403 = vadd.f32 0.0, %v402
      %v404 = vpop.f32.mrf.mxu0
      %v405 = vpop.f32.mrf.mxu0
      %v406 = vadd.f32 0.0, %v405
      %v407 = vpop.f32.mrf.mxu0
      %408 = vmatprep.mubr.bf16.mxu0 0
      %409 = vmatmul.mubr.bf16.gmra.mxu0 %v320
      %v410 = vpop.f32.mrf.mxu0
      %v411 = vadd.f32 0.0, %v410
      %v412 = vpop.f32.mrf.mxu0
      %v413 = vpop.f32.mrf.mxu0
      %v414 = vadd.f32 0.0, %v413
      %v415 = vpop.f32.mrf.mxu0
      %416 = vmatprep.mubr.bf16.mxu0 0
      %417 = vmatmul.mubr.bf16.gmra.mxu0 %v323
      %v418 = vpop.f32.mrf.mxu0
      %v419 = vadd.f32 0.0, %v418
      %v420 = vpop.f32.mrf.mxu0
      %v421 = vpop.f32.mrf.mxu0
      %v422 = vadd.f32 0.0, %v421
      %v423 = vpop.f32.mrf.mxu0
      %424 = vmatprep.mubr.bf16.mxu0 0
      %425 = vmatmul.mubr.bf16.gmra.mxu0 %v326
      %v426 = vpop.f32.mrf.mxu0
      %v427 = vadd.f32 0.0, %v426
      %v428 = vpop.f32.mrf.mxu0
      %v429 = vpop.f32.mrf.mxu0
      %v430 = vadd.f32 0.0, %v429
      %v431 = vpop.f32.mrf.mxu0
      %432 = vmatprep.mubr.bf16.mxu0 0
      %433 = vmatmul.mubr.bf16.gmra.mxu0 %v329
      %v434 = vpop.f32.mrf.mxu0
      %v435 = vadd.f32 0.0, %v434
      %v436 = vpop.f32.mrf.mxu0
      %v437 = vpop.f32.mrf.mxu0
      %v438 = vadd.f32 0.0, %v437
      %v439 = vpop.f32.mrf.mxu0
      %440 = vmatprep.mubr.bf16.mxu0 0
      %441 = vmatmul.mubr.bf16.gmra.mxu0 %v332
      %v442 = vpop.f32.mrf.mxu0
      %v443 = vadd.f32 0.0, %v442
      %v444 = vpop.f32.mrf.mxu0
      %v445 = vpop.f32.mrf.mxu0
      %v446 = vadd.f32 0.0, %v445
      %v447 = vpop.f32.mrf.mxu0
      %448 = vmatprep.mubr.bf16.mxu0 0
      %449 = vmatmul.mubr.bf16.gmra.mxu0 %v335
      %v450 = vpop.f32.mrf.mxu0
      %v451 = vadd.f32 0.0, %v450
      %v452 = vpop.f32.mrf.mxu0
      %v453 = vpop.f32.mrf.mxu0
      %v454 = vadd.f32 0.0, %v453
      %v455 = vpop.f32.mrf.mxu0
      %456 = vmatprep.mubr.bf16.mxu0 0
      %457 = vmatmul.mubr.bf16.gmra.mxu0 %v338
      %v458 = vpop.f32.mrf.mxu0
      %v459 = vadd.f32 0.0, %v458
      %v460 = vpop.f32.mrf.mxu0
      %v461 = vpop.f32.mrf.mxu0
      %v462 = vadd.f32 0.0, %v461
      %v463 = vpop.f32.mrf.mxu0
      %464 = vmatprep.mubr.bf16.mxu0 0
      %465 = vmatmul.mubr.bf16.gmra.mxu0 %v341
      %v466 = vpop.f32.mrf.mxu0
      %v467 = vadd.f32 0.0, %v466
      %v468 = vpop.f32.mrf.mxu0
      %v469 = vpop.f32.mrf.mxu0
      %v470 = vadd.f32 0.0, %v469
      %v471 = vpop.f32.mrf.mxu0
      %472 = vmatprep.mubr.bf16.mxu0 0
      %473 = vmatmul.mubr.bf16.gmra.mxu0 %v344
      %v474 = vpop.f32.mrf.mxu0
      %v475 = vadd.f32 0.0, %v474
      %v476 = vpop.f32.mrf.mxu0
      %v477 = vpop.f32.mrf.mxu0
      %v478 = vadd.f32 0.0, %v477
      %v479 = vpop.f32.mrf.mxu0
      %480 = vmatprep.mubr.bf16.mxu0 0
      %481 = vmatmul.mubr.bf16.gmra.mxu0 %v347
      %v482 = vpop.f32.mrf.mxu0
      %v483 = vadd.f32 0.0, %v482
      %v484 = vpop.f32.mrf.mxu0
      %v485 = vpop.f32.mrf.mxu0
      %v486 = vadd.f32 0.0, %v485
      %v487 = vpop.f32.mrf.mxu0
      %488 = vmatprep.mubr.bf16.mxu0 0
      %489 = vmatmul.mubr.bf16.gmra.mxu0 %v350
      %v490 = vpop.f32.mrf.mxu0
      %v491 = vadd.f32 0.0, %v490
      %v492 = vpop.f32.mrf.mxu0
      %v493 = vpop.f32.mrf.mxu0
      %v494 = vadd.f32 0.0, %v493
      %v495 = vpop.f32.mrf.mxu0
      %496 = vmatprep.mubr.bf16.mxu0 0
      %497 = vmatmul.mubr.bf16.gmra.mxu0 %v353
      %v498 = vpop.f32.mrf.mxu0
      %v499 = vadd.f32 0.0, %v498
      %v500 = vpop.f32.mrf.mxu0
      %v501 = vpop.f32.mrf.mxu0
      %v502 = vadd.f32 0.0, %v501
      %v503 = vpop.f32.mrf.mxu0
      %504 = vmatprep.mubr.bf16.mxu0 0
      %505 = vmatmul.mubr.bf16.gmra.mxu0 %v356
      %v506 = vpop.f32.mrf.mxu0
      %v507 = vadd.f32 0.0, %v506
      %v508 = vpop.f32.mrf.mxu0
      %v509 = vpop.f32.mrf.mxu0
      %v510 = vadd.f32 0.0, %v509
      %v511 = vpop.f32.mrf.mxu0
      %512 = vmatprep.mubr.bf16.mxu0 0
      %513 = vmatmul.mubr.bf16.gmra.mxu0 %v359
      %v514 = vpop.f32.mrf.mxu0
      %v515 = vadd.f32 0.0, %v514
      %v516 = vpop.f32.mrf.mxu0
      %v517 = vpop.f32.mrf.mxu0
      %v518 = vadd.f32 0.0, %v517
      %v519 = vpop.f32.mrf.mxu0
      %520 = vmatprep.mubr.bf16.mxu0 0
      %521 = vmatmul.mubr.bf16.gmra.mxu0 %v362
      %v522 = vpop.f32.mrf.mxu0
      %v523 = vadd.f32 0.0, %v522
      %v524 = vpop.f32.mrf.mxu0
      %v525 = vpop.f32.mrf.mxu0
      %v526 = vadd.f32 0.0, %v525
      %v527 = vpop.f32.mrf.mxu0
      %528 = vdwg.mxu0
      %v529 = vld [vmem:[%s2] sm:$0x1]
      %v531 = vlaneseq
      %v532 = vshrl.u32 %v531, 7
      %v533 = vsub.s32 0, %v532
      %v534 = vrot.slane %v529, %v533
      %v536 = vmul.f32 %v403, %v534
      %v537 = vmul.f32 %v406, %v534
      %v538 = vmul.f32 %v411, %v534
      %v539 = vmul.f32 %v414, %v534
      %v540 = vmul.f32 %v419, %v534
      %v541 = vmul.f32 %v422, %v534
      %v542 = vmul.f32 %v427, %v534
      %v543 = vmul.f32 %v430, %v534
      %v544 = vmul.f32 %v435, %v534
      %v545 = vmul.f32 %v438, %v534
      %v546 = vmul.f32 %v443, %v534
      %v547 = vmul.f32 %v446, %v534
      %v548 = vmul.f32 %v451, %v534
      %v549 = vmul.f32 %v454, %v534
      %v550 = vmul.f32 %v459, %v534
      %v551 = vmul.f32 %v462, %v534
      %v552 = vmul.f32 %v467, %v534
      %v553 = vmul.f32 %v470, %v534
      %v554 = vmul.f32 %v475, %v534
      %v555 = vmul.f32 %v478, %v534
      %v556 = vmul.f32 %v483, %v534
      %v557 = vmul.f32 %v486, %v534
      %v558 = vmul.f32 %v491, %v534
      %v559 = vmul.f32 %v494, %v534
      %v560 = vmul.f32 %v499, %v534
      %v561 = vmul.f32 %v502, %v534
      %v562 = vmul.f32 %v507, %v534
      %v563 = vmul.f32 %v510, %v534
      %v564 = vmul.f32 %v515, %v534
      %v565 = vmul.f32 %v518, %v534
      %v566 = vmul.f32 %v523, %v534
      %v567 = vmul.f32 %v526, %v534
      %v568 = vld [vmem:[%s3] sm:$0x1]
      %v570 = vlaneseq
      %v571 = vshrl.u32 %v570, 7
      %v572 = vsub.s32 0, %v571
      %v573 = vrot.slane %v568, %v572
      %v575 = vadd.f32 %v536, %v573
      %v576 = vadd.f32 %v537, %v573
      %v577 = vadd.f32 %v538, %v573
      %v578 = vadd.f32 %v539, %v573
      %v579 = vadd.f32 %v540, %v573
      %v580 = vadd.f32 %v541, %v573
      %v581 = vadd.f32 %v542, %v573
      %v582 = vadd.f32 %v543, %v573
      %v583 = vadd.f32 %v544, %v573
      %v584 = vadd.f32 %v545, %v573
      %v585 = vadd.f32 %v546, %v573
      %v586 = vadd.f32 %v547, %v573
      %v587 = vadd.f32 %v548, %v573
      %v588 = vadd.f32 %v549, %v573
      %v589 = vadd.f32 %v550, %v573
      %v590 = vadd.f32 %v551, %v573
      %v591 = vadd.f32 %v552, %v573
      %v592 = vadd.f32 %v553, %v573
      %v593 = vadd.f32 %v554, %v573
      %v594 = vadd.f32 %v555, %v573
      %v595 = vadd.f32 %v556, %v573
      %v596 = vadd.f32 %v557, %v573
      %v597 = vadd.f32 %v558, %v573
      %v598 = vadd.f32 %v559, %v573
      %v599 = vadd.f32 %v560, %v573
      %v600 = vadd.f32 %v561, %v573
      %v601 = vadd.f32 %v562, %v573
      %v602 = vadd.f32 %v563, %v573
      %v603 = vadd.f32 %v564, %v573
      %v604 = vadd.f32 %v565, %v573
      %v605 = vadd.f32 %v566, %v573
      %v606 = vadd.f32 %v567, %v573
      %v607 = vmax.f32 %v575, 0.0
      %v608 = vmax.f32 %v576, 0.0
      %v609 = vmax.f32 %v577, 0.0
      %v610 = vmax.f32 %v578, 0.0
      %v611 = vmax.f32 %v579, 0.0
      %v612 = vmax.f32 %v580, 0.0
      %v613 = vmax.f32 %v581, 0.0
      %v614 = vmax.f32 %v582, 0.0
      %v615 = vmax.f32 %v583, 0.0
      %v616 = vmax.f32 %v584, 0.0
      %v617 = vmax.f32 %v585, 0.0
      %v618 = vmax.f32 %v586, 0.0
      %v619 = vmax.f32 %v587, 0.0
      %v620 = vmax.f32 %v588, 0.0
      %v621 = vmax.f32 %v589, 0.0
      %v622 = vmax.f32 %v590, 0.0
      %v623 = vmax.f32 %v591, 0.0
      %v624 = vmax.f32 %v592, 0.0
      %v625 = vmax.f32 %v593, 0.0
      %v626 = vmax.f32 %v594, 0.0
      %v627 = vmax.f32 %v595, 0.0
      %v628 = vmax.f32 %v596, 0.0
      %v629 = vmax.f32 %v597, 0.0
      %v630 = vmax.f32 %v598, 0.0
      %v631 = vmax.f32 %v599, 0.0
      %v632 = vmax.f32 %v600, 0.0
      %v633 = vmax.f32 %v601, 0.0
      %v634 = vmax.f32 %v602, 0.0
      %v635 = vmax.f32 %v603, 0.0
      %v636 = vmax.f32 %v604, 0.0
      %v637 = vmax.f32 %v605, 0.0
      %v638 = vmax.f32 %v606, 0.0
      %v639 = vpack.c.bf16 %v608, %v607
      %v640 = vpack.c.bf16 %v610, %v609
      %v641 = vpack.c.bf16 %v612, %v611
      %v642 = vpack.c.bf16 %v614, %v613
      %v643 = vpack.c.bf16 %v616, %v615
      %v644 = vpack.c.bf16 %v618, %v617
      %v645 = vpack.c.bf16 %v620, %v619
      %v646 = vpack.c.bf16 %v622, %v621
      %v647 = vpack.c.bf16 %v624, %v623
      %v648 = vpack.c.bf16 %v626, %v625
      %v649 = vpack.c.bf16 %v628, %v627
      %v650 = vpack.c.bf16 %v630, %v629
      %v651 = vpack.c.bf16 %v632, %v631
      %v652 = vpack.c.bf16 %v634, %v633
      %v653 = vpack.c.bf16 %v636, %v635
      %v654 = vpack.c.bf16 %v638, %v637
      %v671 = vunpack.c.l.b16 %v639
      %v672 = vunpack.c.h.b16 %v639
      %v673 = vunpack.c.l.b16 %v640
      %v674 = vunpack.c.h.b16 %v640
      %v675 = vunpack.c.l.b16 %v641
      %v676 = vunpack.c.h.b16 %v641
      %v677 = vunpack.c.l.b16 %v642
      %v678 = vunpack.c.h.b16 %v642
      %v679 = vunpack.c.l.b16 %v643
      %v680 = vunpack.c.h.b16 %v643
      %v681 = vunpack.c.l.b16 %v644
      %v682 = vunpack.c.h.b16 %v644
      %v683 = vunpack.c.l.b16 %v645
      %v684 = vunpack.c.h.b16 %v645
      %v685 = vunpack.c.l.b16 %v646
      %v686 = vunpack.c.h.b16 %v646
      %v687 = vunpack.c.l.b16 %v647
      %v688 = vunpack.c.h.b16 %v647
      %v689 = vunpack.c.l.b16 %v648
      %v690 = vunpack.c.h.b16 %v648
      %v691 = vunpack.c.l.b16 %v649
      %v692 = vunpack.c.h.b16 %v649
      %v693 = vunpack.c.l.b16 %v650
      %v694 = vunpack.c.h.b16 %v650
      %v695 = vunpack.c.l.b16 %v651
      %v696 = vunpack.c.h.b16 %v651
      %v697 = vunpack.c.l.b16 %v652
      %v698 = vunpack.c.h.b16 %v652
      %v699 = vunpack.c.l.b16 %v653
      %v700 = vunpack.c.h.b16 %v653
      %v701 = vunpack.c.l.b16 %v654
      %v702 = vunpack.c.h.b16 %v654
      %v703 = vpack.c.b16 %v671, %v671
      %v704 = vpack.c.b16 %v672, %v672
      %v705 = vpack.c.b16 %v673, %v673
      %v706 = vpack.c.b16 %v674, %v674
      %v707 = vpack.c.b16 %v675, %v675
      %v708 = vpack.c.b16 %v676, %v676
      %v709 = vpack.c.b16 %v677, %v677
      %v710 = vpack.c.b16 %v678, %v678
      %v711 = vpack.c.b16 %v679, %v679
      %v712 = vpack.c.b16 %v680, %v680
      %v713 = vpack.c.b16 %v681, %v681
      %v714 = vpack.c.b16 %v682, %v682
      %v715 = vpack.c.b16 %v683, %v683
      %v716 = vpack.c.b16 %v684, %v684
      %v717 = vpack.c.b16 %v685, %v685
      %v718 = vpack.c.b16 %v686, %v686
      %v719 = vpack.c.b16 %v687, %v687
      %v720 = vpack.c.b16 %v688, %v688
      %v721 = vpack.c.b16 %v689, %v689
      %v722 = vpack.c.b16 %v690, %v690
      %v723 = vpack.c.b16 %v691, %v691
      %v724 = vpack.c.b16 %v692, %v692
      %v725 = vpack.c.b16 %v693, %v693
      %v726 = vpack.c.b16 %v694, %v694
      %v727 = vpack.c.b16 %v695, %v695
      %v728 = vpack.c.b16 %v696, %v696
      %v729 = vpack.c.b16 %v697, %v697
      %v730 = vpack.c.b16 %v698, %v698
      %v731 = vpack.c.b16 %v699, %v699
      %v732 = vpack.c.b16 %v700, %v700
      %v733 = vpack.c.b16 %v701, %v701
      %v734 = vpack.c.b16 %v702, %v702
      %vm767 = vcmask 27648
      %768 = vst.msk [vmem:[%s199] sm:$0xf] %vm767, %v703
      %769 = vst.msk [vmem:[%s199 + $0x4] sm:$0xf] %vm767, %v704
      %770 = vst.msk [vmem:[%s199 + $0x8] sm:$0xf] %vm767, %v705
      %771 = vst.msk [vmem:[%s199 + $0xc] sm:$0xf] %vm767, %v706
      %772 = vst.msk [vmem:[%s199 + $0x10] sm:$0xf] %vm767, %v707
      %773 = vst.msk [vmem:[%s199 + $0x14] sm:$0xf] %vm767, %v708
      %774 = vst.msk [vmem:[%s199 + $0x18] sm:$0xf] %vm767, %v709
      %775 = vst.msk [vmem:[%s199 + $0x1c] sm:$0xf] %vm767, %v710
      %776 = vst.msk [vmem:[%s199 + $0x20] sm:$0xf] %vm767, %v711
      %777 = vst.msk [vmem:[%s199 + $0x24] sm:$0xf] %vm767, %v712
      %778 = vst.msk [vmem:[%s199 + $0x28] sm:$0xf] %vm767, %v713
      %779 = vst.msk [vmem:[%s199 + $0x2c] sm:$0xf] %vm767, %v714
      %780 = vst.msk [vmem:[%s199 + $0x30] sm:$0xf] %vm767, %v715
      %781 = vst.msk [vmem:[%s199 + $0x34] sm:$0xf] %vm767, %v716
      %782 = vst.msk [vmem:[%s199 + $0x38] sm:$0xf] %vm767, %v717
      %783 = vst.msk [vmem:[%s199 + $0x3c] sm:$0xf] %vm767, %v718
      %784 = vst.msk [vmem:[%s199 + $0x40] sm:$0xf] %vm767, %v719
      %785 = vst.msk [vmem:[%s199 + $0x44] sm:$0xf] %vm767, %v720
      %786 = vst.msk [vmem:[%s199 + $0x48] sm:$0xf] %vm767, %v721
      %787 = vst.msk [vmem:[%s199 + $0x4c] sm:$0xf] %vm767, %v722
      %788 = vst.msk [vmem:[%s199 + $0x50] sm:$0xf] %vm767, %v723
      %789 = vst.msk [vmem:[%s199 + $0x54] sm:$0xf] %vm767, %v724
      %790 = vst.msk [vmem:[%s199 + $0x58] sm:$0xf] %vm767, %v725
      %791 = vst.msk [vmem:[%s199 + $0x5c] sm:$0xf] %vm767, %v726
      %792 = vst.msk [vmem:[%s199 + $0x60] sm:$0xf] %vm767, %v727
      %793 = vst.msk [vmem:[%s199 + $0x64] sm:$0xf] %vm767, %v728
      %794 = vst.msk [vmem:[%s199 + $0x68] sm:$0xf] %vm767, %v729
      %795 = vst.msk [vmem:[%s199 + $0x6c] sm:$0xf] %vm767, %v730
      %796 = vst.msk [vmem:[%s199 + $0x70] sm:$0xf] %vm767, %v731
      %797 = vst.msk [vmem:[%s199 + $0x74] sm:$0xf] %vm767, %v732
      %798 = vst.msk [vmem:[%s199 + $0x78] sm:$0xf] %vm767, %v733
      %799 = vst.msk [vmem:[%s199 + $0x7c] sm:$0xf] %vm767, %v734
      %s800 = smul.u32 32, %s15
      %p801 = scmp.lt.s32.totalorder %s800, 63
      %s802 = scalar_select %p801, %s800, 63
      %s803 = smul.addr %s802, 4
      %s804 = scalar_lea.vmem %s4, %s803
      // Predicated region
      $region37: #{xblock_forward.6} parent=35 // pred_check
        %p805 = pneg %p122
      $region38: #{xblock_forward.6} parent=35 // pred_check_branch
        %807 = sbr.rel (%p805) target = $region40
      $region39: #{xblock_forward.6} parent=35 // pred_region
        %s808 = smul.u32 32, %s15
      $region40: #{xblock_forward.6} parent=35 // pred_fallthru
        _
    $region36: #{xblock_forward.6} parent=5 // pred_fallthru
      _
    %p809 = scmp.le.s32.totalorder 2, %s10
    // Predicated region
    $region41: #{xblock_forward.6} parent=5 // pred_check
      %p810 = pneg %p809
    $region42: #{xblock_forward.6} parent=5 // pred_check_branch
      %812 = sbr.rel (%p810) target = $region44
    $region43: #{xblock_forward.6} parent=5 // pred_region
      %s813 = ssub.s32 %s10, 2
      // Predicated region
      $region45: #{xblock_forward.6} parent=43 // pred_check
        %p814 = pneg %p128
      $region46: #{xblock_forward.6} parent=43 // pred_check_branch
        %816 = sbr.rel (%p814) target = $region48
      $region47: #{xblock_forward.6} parent=43 // pred_region
        %s817 = smul.u32 32, %s16
        %p818 = scmp.lt.s32.totalorder %s817, 63
        %s819 = scalar_select %p818, %s817, 63
        %s820 = smul.addr %s819, 4
        %s821 = scalar_lea.vmem %s4, %s820
      $region48: #{xblock_forward.6} parent=43 // pred_fallthru
        _
    $region44: #{xblock_forward.6} parent=5 // pred_fallthru
      _
  $region6: #{xblock_forward.6} parent=0 // loop_footer
    %s14 = sadd.s32 1, %s10
  $region7: #{xblock_forward.6} parent=0 // loop_footer_branch
    %9 = sbr.rel target = $region3
  $region8: #{xblock_forward.6} parent=0 // loop_exit
    _

// kernel: xblock_forward.7
$region0: #{xblock_forward.7}
  #allocation0 [shape = 'u32[]', space=smem, size = 0x4, offset = 0x4, fixed_abs, tag = 'smem constant byte address 0x4 - core index']
  #allocation1 [shape = 'u32[144,128]{1,0:T(1,128)}', space=vmem, size = 0x12000, scoped, tag = 'internal scratch']
  %s0 = inlined_call_operand.vmem [shape: bf16[2,18,2,9,4], index: 0, kind: input, shape index: {}, may-alias: {0,1,2}]
  %s1 = inlined_call_operand.vmem [shape: bf16[2,18,2,9,4], index: 1, kind: input, shape index: {}, may-alias: {0,1,2}]
  %s2 = inlined_call_operand.vmem [shape: bf16[2,18,2,9,4], index: 2, kind: input, shape index: {}, may-alias: {0,1,2}]
  %s3 = inlined_call_operand.vmem [shape: bf16[3,3,2,2,2], index: 3, kind: input, shape index: {}]
  %s4 = inlined_call_operand.vmem [shape: bf16[2,8,8,4], index: 4, kind: output, shape index: {0}]
  %s5 = inlined_call_operand.vmem [shape: f32[2,8,2,4], index: 5, kind: output, shape index: {1}]
  %6 = xla_tuple %s4, %s5
  %s7 = sld [smem:[#allocation0]]
  $region57: #{xblock_forward.7} parent=0
    _
  %s9 = ssub.s32 1, %s7
  %s10 = scalar_select 0, %s9, %s7
  loop: start=0, step=1, limit=18
  $region2: #{xblock_forward.7} parent=0 // loop_pre_header
    _
  $region3: #{xblock_forward.7} parent=0 // loop_header
    %s12 = sphi 0, %s16
    %p13 = scmp.ge.s32.totalorder %s12, 18
    %s19 = sphi 0, %s31
    %s20 = sphi 0, %s27
    %s21 = sphi 0, %s19
    %s22 = sphi 0, %s20
    %s23 = sphi 0, %s21
    %s24 = sphi 0, %s22
    %s38 = sphi 0, %s40
    %s41 = sphi 0, %s38
    %s42 = sphi 0, %s41
    %s58 = sphi 0, %s42
    %s70 = sphi 0, %s72
    %s73 = sphi 0, %s70
    %s74 = sphi 0, %s73
    %s90 = sphi 0, %s74
    %s102 = sphi 0, %s104
    %s105 = sphi 0, %s102
    %s106 = sphi 0, %s105
    %s122 = sphi 0, %s106
    %s126 = sphi 0, %s126
    %s128 = sphi 0, %s126
    %s129 = sphi 0, %s128
    %s143 = sphi 0, %s129
    %s151 = sphi 0, %s153
    %s154 = sphi 0, %s151
    %s155 = sphi 0, %s154
    %s171 = sphi 0, %s155
    %s179 = sphi 0, %s181
    %s182 = sphi 0, %s179
    %s183 = sphi 0, %s182
    %s199 = sphi 0, %s183
  $region4: #{xblock_forward.7} parent=0 // loop_header_branch
    %15 = sbr.rel (%p13) target = $region8
  $region5: #{xblock_forward.7} parent=0 // loop_body
    %s17 = ssub.s32 %s12, 1
    %s18 = ssub.s32 %s12, 2
    %s25 = sadd.s32 1, %s20
    %p26 = scmp.ge.s32.totalorder %s25, 8
    %s27 = scalar_select %p26, 0, %s25
    %s28 = sadd.s32 1, %s19
    %s29 = scalar_select %p26, %s28, %s19
    %p30 = scmp.ge.s32.totalorder %s29, 2
    %s31 = scalar_select %p30, 0, %s29
    %s32 = smul.u32 %s20, 2
    %s33 = smul.u32 %s27, 2
    %s34 = ssub.s32 %s19, %s31
    %s35 = ssub.s32 %s32, %s33
    %s36 = sor.u32 %s34, %s35
    %p37 = scmp.eq.s32.totalorder %s36, 0
    %s39 = sadd.s32 %s38, 1
    %s40 = scalar_select %p37, %s38, %s39
    %p43 = pneg %p37
    %p44 = scmp.eq.s32.totalorder %s12, 15
    %p45 = por %p43, %p44
    %p46 = scmp.ne.s32.totalorder %s38, %s41
    %p47 = scmp.eq.s32.totalorder %s12, 0
    %p48 = por %p46, %p47
    %p49 = scmp.ne.s32.totalorder %s38, %s41
    %p50 = scmp.eq.s32.totalorder %s17, 15
    %p51 = por %p49, %p50
    %p52 = scmp.ne.s32.totalorder %s41, %s42
    %p53 = scmp.eq.s32.totalorder %s17, 0
    %p54 = por %p52, %p53
    %p55 = scmp.ne.s32.totalorder %s41, %s42
    %p56 = scmp.eq.s32.totalorder %s18, 15
    %p57 = por %p55, %p56
    %p59 = scmp.ne.s32.totalorder %s42, %s58
    %p60 = scmp.eq.s32.totalorder %s18, 0
    %p61 = por %p59, %p60
    %s62 = smul.u32 %s20, 2
    %s63 = sadd.s32 %s62, 1
    %s64 = smul.u32 %s27, 2
    %s65 = sadd.s32 %s64, 1
    %s66 = ssub.s32 %s19, %s31
    %s67 = ssub.s32 %s63, %s65
    %s68 = sor.u32 %s66, %s67
    %p69 = scmp.eq.s32.totalorder %s68, 0
    %s71 = sadd.s32 %s70, 1
    %s72 = scalar_select %p69, %s70, %s71
    %p75 = pneg %p69
    %p76 = scmp.eq.s32.totalorder %s12, 15
    %p77 = por %p75, %p76
    %p78 = scmp.ne.s32.totalorder %s70, %s73
    %p79 = scmp.eq.s32.totalorder %s12, 0
    %p80 = por %p78, %p79
    %p81 = scmp.ne.s32.totalorder %s70, %s73
    %p82 = scmp.eq.s32.totalorder %s17, 15
    %p83 = por %p81, %p82
    %p84 = scmp.ne.s32.totalorder %s73, %s74
    %p85 = scmp.eq.s32.totalorder %s17, 0
    %p86 = por %p84, %p85
    %p87 = scmp.ne.s32.totalorder %s73, %s74
    %p88 = scmp.eq.s32.totalorder %s18, 15
    %p89 = por %p87, %p88
    %p91 = scmp.ne.s32.totalorder %s74, %s90
    %p92 = scmp.eq.s32.totalorder %s18, 0
    %p93 = por %p91, %p92
    %s94 = smul.u32 %s20, 2
    %s95 = sadd.s32 %s94, 2
    %s96 = smul.u32 %s27, 2
    %s97 = sadd.s32 %s96, 2
    %s98 = ssub.s32 %s19, %s31
    %s99 = ssub.s32 %s95, %s97
    %s100 = sor.u32 %s98, %s99
    %p101 = scmp.eq.s32.totalorder %s100, 0
    %s103 = sadd.s32 %s102, 1
    %s104 = scalar_select %p101, %s102, %s103
    %p107 = pneg %p101
    %p108 = scmp.eq.s32.totalorder %s12, 15
    %p109 = por %p107, %p108
    %p110 = scmp.ne.s32.totalorder %s102, %s105
    %p111 = scmp.eq.s32.totalorder %s12, 0
    %p112 = por %p110, %p111
    %p113 = scmp.ne.s32.totalorder %s102, %s105
    %p114 = scmp.eq.s32.totalorder %s17, 15
    %p115 = por %p113, %p114
    %p116 = scmp.ne.s32.totalorder %s105, %s106
    %p117 = scmp.eq.s32.totalorder %s17, 0
    %p118 = por %p116, %p117
    %p119 = scmp.ne.s32.totalorder %s105, %s106
    %p120 = scmp.eq.s32.totalorder %s18, 15
    %p121 = por %p119, %p120
    %p123 = scmp.ne.s32.totalorder %s106, %s122
    %p124 = scmp.eq.s32.totalorder %s18, 0
    %p125 = por %p123, %p124
    %s127 = sadd.s32 %s126, 1
    %p130 = scmp.eq.s32.totalorder %s12, 15
    %p131 = scmp.ne.s32.totalorder %s126, %s128
    %p132 = scmp.eq.s32.totalorder %s12, 0
    %p133 = por %p131, %p132
    %p134 = scmp.ne.s32.totalorder %s126, %s128
    %p135 = scmp.eq.s32.totalorder %s17, 15
    %p136 = por %p134, %p135
    %p137 = scmp.ne.s32.totalorder %s128, %s129
    %p138 = scmp.eq.s32.totalorder %s17, 0
    %p139 = por %p137, %p138
    %p140 = scmp.ne.s32.totalorder %s128, %s129
    %p141 = scmp.eq.s32.totalorder %s18, 15
    %p142 = por %p140, %p141
    %p144 = scmp.ne.s32.totalorder %s129, %s143
    %p145 = scmp.eq.s32.totalorder %s18, 0
    %p146 = por %p144, %p145
    %s147 = ssub.s32 %s19, %s31
    %s148 = ssub.s32 %s20, %s27
    %s149 = sor.u32 %s147, %s148
    %p150 = scmp.eq.s32.totalorder %s149, 0
    %s152 = sadd.s32 %s151, 1
    %s153 = scalar_select %p150, %s151, %s152
    %p156 = pneg %p150
    %p157 = scmp.eq.s32.totalorder %s12, 15
    %p158 = por %p156, %p157
    %p159 = scmp.ne.s32.totalorder %s151, %s154
    %p160 = scmp.eq.s32.totalorder %s12, 0
    %p161 = por %p159, %p160
    %p162 = scmp.ne.s32.totalorder %s151, %s154
    %p163 = scmp.eq.s32.totalorder %s17, 15
    %p164 = por %p162, %p163
    %p165 = scmp.ne.s32.totalorder %s154, %s155
    %p166 = scmp.eq.s32.totalorder %s17, 0
    %p167 = por %p165, %p166
    %p168 = scmp.ne.s32.totalorder %s154, %s155
    %p169 = scmp.eq.s32.totalorder %s18, 15
    %p170 = por %p168, %p169
    %p172 = scmp.ne.s32.totalorder %s155, %s171
    %p173 = scmp.eq.s32.totalorder %s18, 0
    %p174 = por %p172, %p173
    %s175 = ssub.s32 %s19, %s31
    %s176 = ssub.s32 %s20, %s27
    %s177 = sor.u32 %s175, %s176
    %p178 = scmp.eq.s32.totalorder %s177, 0
    %s180 = sadd.s32 %s179, 1
    %s181 = scalar_select %p178, %s179, %s180
    %p184 = pneg %p178
    %p185 = scmp.eq.s32.totalorder %s12, 15
    %p186 = por %p184, %p185
    %p187 = scmp.ne.s32.totalorder %s179, %s182
    %p188 = scmp.eq.s32.totalorder %s12, 0
    %p189 = por %p187, %p188
    %p190 = scmp.ne.s32.totalorder %s179, %s182
    %p191 = scmp.eq.s32.totalorder %s17, 15
    %p192 = por %p190, %p191
    %p193 = scmp.ne.s32.totalorder %s182, %s183
    %p194 = scmp.eq.s32.totalorder %s17, 0
    %p195 = por %p193, %p194
    %p196 = scmp.ne.s32.totalorder %s182, %s183
    %p197 = scmp.eq.s32.totalorder %s18, 15
    %p198 = por %p196, %p197
    %p200 = scmp.ne.s32.totalorder %s183, %s199
    %p201 = scmp.eq.s32.totalorder %s18, 0
    %p202 = por %p200, %p201
    %p203 = scmp.le.s32.totalorder 1, %s12
    %p204 = scmp.lt.s32.totalorder %s12, 17
    %p205 = pnand %p203, %p204
    %p206 = pneg %p205
    // Predicated region
    $region9: #{xblock_forward.7} parent=5 // pred_check
      _
    $region10: #{xblock_forward.7} parent=5 // pred_check_branch
      %208 = sbr.rel (%p205) target = $region12
    $region11: #{xblock_forward.7} parent=5 // pred_region
      %s209 = ssub.s32 %s12, 1
      // Predicated region
      $region13: #{xblock_forward.7} parent=11 // pred_check
        %p210 = pneg %p139
      $region14: #{xblock_forward.7} parent=11 // pred_check_branch
        %212 = sbr.rel (%p210) target = $region16
      $region15: #{xblock_forward.7} parent=11 // pred_region
        _
      $region16: #{xblock_forward.7} parent=11 // pred_fallthru
        _
    $region12: #{xblock_forward.7} parent=5 // pred_fallthru
      _
    %p213 = scmp.lt.s32.totalorder %s12, 16
    // Predicated region
    $region17: #{xblock_forward.7} parent=5 // pred_check
      %p214 = pneg %p213
    $region18: #{xblock_forward.7} parent=5 // pred_check_branch
      %216 = sbr.rel (%p214) target = $region20
    $region19: #{xblock_forward.7} parent=5 // pred_region
      // Predicated region
      $region21: #{xblock_forward.7} parent=19 // pred_check
        %p217 = pneg %p48
      $region22: #{xblock_forward.7} parent=19 // pred_check_branch
        %219 = sbr.rel (%p217) target = $region24
      $region23: #{xblock_forward.7} parent=19 // pred_region
        %s220 = smul.u32 %s20, 2
        %p221 = scmp.lt.s32.totalorder %s19, 1
        %s222 = scalar_select %p221, %s19, 1
        %p223 = scmp.lt.s32.totalorder %s220, 17
        %s224 = scalar_select %p223, %s220, 17
        %s225 = smul.addr %s224, 4
        %s226 = smul.addr %s222, 72
        %s227 = sadd.s32 %s225, %s226
        %s228 = smul.addr %s227, 4
        %s229 = scalar_lea.vmem %s0, %s228
        %s230 = smul.u32 %s20, 2
      $region24: #{xblock_forward.7} parent=19 // pred_fallthru
        _
      // Predicated region
      $region25: #{xblock_forward.7} parent=19 // pred_check
        %p231 = pneg %p80
      $region26: #{xblock_forward.7} parent=19 // pred_check_branch
        %233 = sbr.rel (%p231) target = $region28
      $region27: #{xblock_forward.7} parent=19 // pred_region
        %s234 = smul.u32 %s20, 2
        %s235 = sadd.s32 %s234, 1
        %p236 = scmp.lt.s32.totalorder %s19, 1
        %s237 = scalar_select %p236, %s19, 1
        %p238 = scmp.lt.s32.totalorder %s235, 17
        %s239 = scalar_select %p238, %s235, 17
        %s240 = smul.addr %s239, 4
        %s241 = smul.addr %s237, 72
        %s242 = sadd.s32 %s240, %s241
        %s243 = smul.addr %s242, 4
        %s244 = scalar_lea.vmem %s1, %s243
        %s245 = smul.u32 %s20, 2
        %s246 = sadd.s32 %s245, 1
      $region28: #{xblock_forward.7} parent=19 // pred_fallthru
        _
      // Predicated region
      $region29: #{xblock_forward.7} parent=19 // pred_check
        %p247 = pneg %p112
      $region30: #{xblock_forward.7} parent=19 // pred_check_branch
        %249 = sbr.rel (%p247) target = $region32
      $region31: #{xblock_forward.7} parent=19 // pred_region
        %s250 = smul.u32 %s20, 2
        %s251 = sadd.s32 %s250, 2
        %p252 = scmp.lt.s32.totalorder %s19, 1
        %s253 = scalar_select %p252, %s19, 1
        %p254 = scmp.lt.s32.totalorder %s251, 17
        %s255 = scalar_select %p254, %s251, 17
        %s256 = smul.addr %s255, 4
        %s257 = smul.addr %s253, 72
        %s258 = sadd.s32 %s256, %s257
        %s259 = smul.addr %s258, 4
        %s260 = scalar_lea.vmem %s2, %s259
        %s261 = smul.u32 %s20, 2
        %s262 = sadd.s32 %s261, 2
      $region32: #{xblock_forward.7} parent=19 // pred_fallthru
        _
    $region20: #{xblock_forward.7} parent=5 // pred_fallthru
      _
    %p263 = scmp.le.s32.totalorder 1, %s12
    %p264 = scmp.lt.s32.totalorder %s12, 17
    %p265 = pnand %p263, %p264
    %p266 = pneg %p265
    // Predicated region
    $region33: #{xblock_forward.7} parent=5 // pred_check
      _
    $region34: #{xblock_forward.7} parent=5 // pred_check_branch
      %268 = sbr.rel (%p265) target = $region36
    $region35: #{xblock_forward.7} parent=5 // pred_region
      %s269 = ssub.s32 %s12, 1
      %s270 = smul.u32 %s22, 2
      %p271 = scmp.lt.s32.totalorder %s21, 1
      %s272 = scalar_select %p271, %s21, 1
      %p273 = scmp.lt.s32.totalorder %s270, 17
      %s274 = scalar_select %p273, %s270, 17
      %s275 = smul.addr %s274, 4
      %s276 = smul.addr %s272, 72
      %s277 = sadd.s32 %s275, %s276
      %s278 = smul.addr %s277, 4
      %s279 = scalar_lea.vmem %s0, %s278
      %p280 = pneg %p54
      %p281 = pneg %p51
      %s282 = smul.u32 %s22, 2
      %s283 = sadd.s32 %s282, 1
      %p284 = scmp.lt.s32.totalorder %s21, 1
      %s285 = scalar_select %p284, %s21, 1
      %p286 = scmp.lt.s32.totalorder %s283, 17
      %s287 = scalar_select %p286, %s283, 17
      %s288 = smul.addr %s287, 4
      %s289 = smul.addr %s285, 72
      %s290 = sadd.s32 %s288, %s289
      %s291 = smul.addr %s290, 4
      %s292 = scalar_lea.vmem %s1, %s291
      %p293 = pneg %p86
      %p294 = pneg %p83
      %s295 = smul.u32 %s22, 2
      %s296 = sadd.s32 %s295, 2
      %p297 = scmp.lt.s32.totalorder %s21, 1
      %s298 = scalar_select %p297, %s21, 1
      %p299 = scmp.lt.s32.totalorder %s296, 17
      %s300 = scalar_select %p299, %s296, 17
      %s301 = smul.addr %s300, 4
      %s302 = smul.addr %s298, 72
      %s303 = sadd.s32 %s301, %s302
      %s304 = smul.addr %s303, 4
      %s305 = scalar_lea.vmem %s2, %s304
      %p306 = pneg %p118
      %p307 = pneg %p115
      %p308 = pneg %p139
      %p309 = pneg %p136
      %p310 = pneg %p167
      %p311 = pneg %p164
      %p312 = scmp.lt.s32.totalorder %s21, 1
      %s313 = scalar_select %p312, %s21, 1
      %p314 = scmp.lt.s32.totalorder %s22, 7
      %s315 = scalar_select %p314, %s22, 7
      %s316 = smul.addr %s313, 8
      %s317 = sadd.s32 %s315, %s316
      %s318 = smul.addr %s317, 4
      %s319 = scalar_lea.vmem %s4, %s318
      %p320 = pneg %p195
      %p321 = pneg %p192
      %p322 = scmp.lt.s32.totalorder %s21, 1
      %s323 = scalar_select %p322, %s21, 1
      %p324 = scmp.lt.s32.totalorder %s22, 7
      %s325 = scalar_select %p324, %s22, 7
      %s326 = smul.addr %s323, 8
      %s327 = sadd.s32 %s325, %s326
      %s328 = smul.addr %s327, 2
      %s329 = scalar_lea.vmem %s5, %s328
      %s330 = smul.u32 %s22, 2
      %p331 = scmp.lt.s32.totalorder %s21, 1
      %s332 = scalar_select %p331, %s21, 1
      %p333 = scmp.lt.s32.totalorder %s330, 17
      %s334 = scalar_select %p333, %s330, 17
      %s335 = smul.addr %s334, 4
      %s336 = smul.addr %s332, 72
      %s337 = sadd.s32 %s335, %s336
      %s338 = smul.addr %s337, 4
      %s339 = scalar_lea.vmem %s0, %s338
      %s340 = smul.u32 %s22, 2
      %s341 = smul.u32 %s22, 2
      %s342 = sadd.s32 %s341, 1
      %p343 = scmp.lt.s32.totalorder %s21, 1
      %s344 = scalar_select %p343, %s21, 1
      %p345 = scmp.lt.s32.totalorder %s342, 17
      %s346 = scalar_select %p345, %s342, 17
      %s347 = smul.addr %s346, 4
      %s348 = smul.addr %s344, 72
      %s349 = sadd.s32 %s347, %s348
      %s350 = smul.addr %s349, 4
      %s351 = scalar_lea.vmem %s1, %s350
      %s352 = smul.u32 %s22, 2
      %s353 = sadd.s32 %s352, 1
      %s354 = smul.u32 %s22, 2
      %s355 = sadd.s32 %s354, 2
      %p356 = scmp.lt.s32.totalorder %s21, 1
      %s357 = scalar_select %p356, %s21, 1
      %p358 = scmp.lt.s32.totalorder %s355, 17
      %s359 = scalar_select %p358, %s355, 17
      %s360 = smul.addr %s359, 4
      %s361 = smul.addr %s357, 72
      %s362 = sadd.s32 %s360, %s361
      %s363 = smul.addr %s362, 4
      %s364 = scalar_lea.vmem %s2, %s363
      %s365 = smul.u32 %s22, 2
      %s366 = sadd.s32 %s365, 2
      %p367 = scmp.lt.s32.totalorder %s21, 1
      %s368 = scalar_select %p367, %s21, 1
      %p369 = scmp.lt.s32.totalorder %s22, 7
      %s370 = scalar_select %p369, %s22, 7
      %s371 = smul.addr %s368, 8
      %s372 = sadd.s32 %s370, %s371
      %s373 = smul.addr %s372, 4
      %s374 = scalar_lea.vmem %s4, %s373
      %p375 = scmp.lt.s32.totalorder %s21, 1
      %s376 = scalar_select %p375, %s21, 1
      %p377 = scmp.lt.s32.totalorder %s22, 7
      %s378 = scalar_select %p377, %s22, 7
      %s379 = smul.addr %s376, 8
      %s380 = sadd.s32 %s378, %s379
      %s381 = smul.addr %s380, 2
      %s382 = scalar_lea.vmem %s5, %s381
      %v384 = vld [vmem:[%s339] sm:$0xf]
      %v385 = vld [vmem:[%s3] sm:$0x1]
      %s386 = scalar_lea.vmem %s3, 1
      %v387 = vld [vmem:[%s386] sm:$0x1]
      %s388 = scalar_lea.vmem %s339, 8
      %v389 = vld [vmem:[%s388] sm:$0xf]
      %s390 = scalar_lea.vmem %s3, 2
      %v391 = vld [vmem:[%s390] sm:$0x1]
      %vm392 = vcmask 15360
      %v394 = vsel %vm392, %v389, 0
      %vm396 = vcmask 1040384
      %v398 = vsel %vm396, %v391, 0
      %400 = vmatprep.subr.bf16.mxu0 0
      %401 = vmatpush1.bf16.msra.mxu0 0
      %402 = vmatprep.subr.bf16.mxu0 0
      %403 = vmatpush1.bf16.msra.mxu0 0
      %404 = vmatprep.subr.bf16.mxu0 0
      %405 = vmatpush1.bf16.msra.mxu0 0
      %406 = vmatprep.subr.bf16.mxu0 0
      %407 = vmatpush1.bf16.msra.mxu0 0
      %408 = vmatprep.subr.bf16.mxu0 0
      %409 = vmatpush1.bf16.msra.mxu0 0
      %410 = vmatprep.subr.bf16.mxu0 0
      %411 = vmatpush1.bf16.msra.mxu0 0
      %412 = vmatprep.subr.bf16.mxu0 0
      %413 = vmatpush1.bf16.msra.mxu0 0
      %414 = vmatprep.subr.bf16.mxu0 0
      %415 = vmatpush1.bf16.msra.mxu0 %v398
      %416 = vmatprep.subr.bf16.mxu0 0
      %417 = vmatpush2.bf16.msra.mxu0 0
      %418 = vmatprep.subr.bf16.mxu0 0
      %419 = vmatpush2.bf16.msra.mxu0 0
      %420 = vmatprep.subr.bf16.mxu0 0
      %421 = vmatpush2.bf16.msra.mxu0 0
      %422 = vmatprep.subr.bf16.mxu0 0
      %423 = vmatpush2.bf16.msra.mxu0 0
      %424 = vmatprep.subr.bf16.mxu0 0
      %425 = vmatpush2.bf16.msra.mxu0 0
      %426 = vmatprep.subr.bf16.mxu0 0
      %427 = vmatpush2.bf16.msra.mxu0 0
      %428 = vmatprep.subr.bf16.mxu0 0
      %429 = vmatpush2.bf16.msra.mxu0 0
      %430 = vmatprep.subr.bf16.mxu0 0
      %431 = vmatpush2.bf16.msra.mxu0 0
      %432 = vmatprep.mubr.bf16.mxu0 0
      %433 = vmatmul.mubr.bf16.gmra.mxu0 %v394
      %v434 = vpop.f32.mrf.mxu0
      %v435 = vadd.f32 0.0, %v434
      %v436 = vpop.f32.mrf.mxu0
      %v437 = vpop.f32.mrf.mxu0
      %v438 = vpop.f32.mrf.mxu0
      %439 = vdwg.mxu0
      %v441 = vsel %vm392, %v384, 0
      %v444 = vsel %vm396, %v385, 0
      %446 = vmatprep.subr.bf16.mxu0 0
      %447 = vmatpush1.bf16.msra.mxu0 0
      %448 = vmatprep.subr.bf16.mxu0 0
      %449 = vmatpush1.bf16.msra.mxu0 0
      %450 = vmatprep.subr.bf16.mxu0 0
      %451 = vmatpush1.bf16.msra.mxu0 0
      %452 = vmatprep.subr.bf16.mxu0 0
      %453 = vmatpush1.bf16.msra.mxu0 0
      %454 = vmatprep.subr.bf16.mxu0 0
      %455 = vmatpush1.bf16.msra.mxu0 0
      %456 = vmatprep.subr.bf16.mxu0 0
      %457 = vmatpush1.bf16.msra.mxu0 0
      %458 = vmatprep.subr.bf16.mxu0 0
      %459 = vmatpush1.bf16.msra.mxu0 0
      %460 = vmatprep.subr.bf16.mxu0 0
      %461 = vmatpush1.bf16.msra.mxu0 %v444
      %462 = vmatprep.subr.bf16.mxu0 0
      %463 = vmatpush2.bf16.msra.mxu0 0
      %464 = vmatprep.subr.bf16.mxu0 0
      %465 = vmatpush2.bf16.msra.mxu0 0
      %466 = vmatprep.subr.bf16.mxu0 0
      %467 = vmatpush2.bf16.msra.mxu0 0
      %468 = vmatprep.subr.bf16.mxu0 0
      %469 = vmatpush2.bf16.msra.mxu0 0
      %470 = vmatprep.subr.bf16.mxu0 0
      %471 = vmatpush2.bf16.msra.mxu0 0
      %472 = vmatprep.subr.bf16.mxu0 0
      %473 = vmatpush2.bf16.msra.mxu0 0
      %474 = vmatprep.subr.bf16.mxu0 0
      %475 = vmatpush2.bf16.msra.mxu0 0
      %476 = vmatprep.subr.bf16.mxu0 0
      %477 = vmatpush2.bf16.msra.mxu0 0
      %478 = vmatprep.mubr.bf16.mxu0 0
      %479 = vmatmul.mubr.bf16.gmra.mxu0 %v441
      %v480 = vpop.f32.mrf.mxu0
      %v481 = vadd.f32 %v435, %v480
      %v482 = vpop.f32.mrf.mxu0
      %v483 = vpop.f32.mrf.mxu0
      %v484 = vpop.f32.mrf.mxu0
      %485 = vdwg.mxu0
      %s486 = scalar_lea.vmem %s3, 3
      %v487 = vld [vmem:[%s486] sm:$0x1]
      %v489 = vunpack.c.l.b16 %v389
      %v490 = vpack.c.b16 %v489, %v489
      %491 = vrot.lane.b32.xlu0 %v490, 126
      %v492 = vpop.permute.xlu0 %491
      %v494 = vsel %vm392, %v492, 0
      %v497 = vsel %vm396, %v487, 0
      %499 = vmatprep.subr.bf16.mxu0 0
      %500 = vmatpush1.bf16.msra.mxu0 0
      %501 = vmatprep.subr.bf16.mxu0 0
      %502 = vmatpush1.bf16.msra.mxu0 0
      %503 = vmatprep.subr.bf16.mxu0 0
      %504 = vmatpush1.bf16.msra.mxu0 0
      %505 = vmatprep.subr.bf16.mxu0 0
      %506 = vmatpush1.bf16.msra.mxu0 0
      %507 = vmatprep.subr.bf16.mxu0 0
      %508 = vmatpush1.bf16.msra.mxu0 0
      %509 = vmatprep.subr.bf16.mxu0 0
      %510 = vmatpush1.bf16.msra.mxu0 0
      %511 = vmatprep.subr.bf16.mxu0 0
      %512 = vmatpush1.bf16.msra.mxu0 0
      %513 = vmatprep.subr.bf16.mxu0 0
      %514 = vmatpush1.bf16.msra.mxu0 %v497
      %515 = vmatprep.subr.bf16.mxu0 0
      %516 = vmatpush2.bf16.msra.mxu0 0
      %517 = vmatprep.subr.bf16.mxu0 0
      %518 = vmatpush2.bf16.msra.mxu0 0
      %519 = vmatprep.subr.bf16.mxu0 0
      %520 = vmatpush2.bf16.msra.mxu0 0
      %521 = vmatprep.subr.bf16.mxu0 0
      %522 = vmatpush2.bf16.msra.mxu0 0
      %523 = vmatprep.subr.bf16.mxu0 0
      %524 = vmatpush2.bf16.msra.mxu0 0
      %525 = vmatprep.subr.bf16.mxu0 0
      %526 = vmatpush2.bf16.msra.mxu0 0
      %527 = vmatprep.subr.bf16.mxu0 0
      %528 = vmatpush2.bf16.msra.mxu0 0
      %529 = vmatprep.subr.bf16.mxu0 0
      %530 = vmatpush2.bf16.msra.mxu0 0
      %531 = vmatprep.mubr.bf16.mxu0 0
      %532 = vmatmul.mubr.bf16.gmra.mxu0 %v494
      %v533 = vpop.f32.mrf.mxu0
      %v534 = vadd.f32 0.0, %v533
      %v535 = vpop.f32.mrf.mxu0
      %v536 = vpop.f32.mrf.mxu0
      %v537 = vpop.f32.mrf.mxu0
      %538 = vdwg.mxu0
      %v540 = vunpack.c.l.b16 %v384
      %v541 = vpack.c.b16 %v540, %v540
      %542 = vrot.lane.b32.xlu0 %v541, 126
      %v543 = vpop.permute.xlu0 %542
      %v545 = vsel %vm392, %v543, 0
      %v548 = vsel %vm396, %v387, 0
      %550 = vmatprep.subr.bf16.mxu0 0
      %551 = vmatpush1.bf16.msra.mxu0 0
      %552 = vmatprep.subr.bf16.mxu0 0
      %553 = vmatpush1.bf16.msra.mxu0 0
      %554 = vmatprep.subr.bf16.mxu0 0
      %555 = vmatpush1.bf16.msra.mxu0 0
      %556 = vmatprep.subr.bf16.mxu0 0
      %557 = vmatpush1.bf16.msra.mxu0 0
      %558 = vmatprep.subr.bf16.mxu0 0
      %559 = vmatpush1.bf16.msra.mxu0 0
      %560 = vmatprep.subr.bf16.mxu0 0
      %561 = vmatpush1.bf16.msra.mxu0 0
      %562 = vmatprep.subr.bf16.mxu0 0
      %563 = vmatpush1.bf16.msra.mxu0 0
      %564 = vmatprep.subr.bf16.mxu0 0
      %565 = vmatpush1.bf16.msra.mxu0 %v548
      %566 = vmatprep.subr.bf16.mxu0 0
      %567 = vmatpush2.bf16.msra.mxu0 0
      %568 = vmatprep.subr.bf16.mxu0 0
      %569 = vmatpush2.bf16.msra.mxu0 0
      %570 = vmatprep.subr.bf16.mxu0 0
      %571 = vmatpush2.bf16.msra.mxu0 0
      %572 = vmatprep.subr.bf16.mxu0 0
      %573 = vmatpush2.bf16.msra.mxu0 0
      %574 = vmatprep.subr.bf16.mxu0 0
      %575 = vmatpush2.bf16.msra.mxu0 0
      %576 = vmatprep.subr.bf16.mxu0 0
      %577 = vmatpush2.bf16.msra.mxu0 0
      %578 = vmatprep.subr.bf16.mxu0 0
      %579 = vmatpush2.bf16.msra.mxu0 0
      %580 = vmatprep.subr.bf16.mxu0 0
      %581 = vmatpush2.bf16.msra.mxu0 0
      %582 = vmatprep.mubr.bf16.mxu0 0
      %583 = vmatmul.mubr.bf16.gmra.mxu0 %v545
      %v584 = vpop.f32.mrf.mxu0
      %v585 = vadd.f32 %v534, %v584
      %v586 = vpop.f32.mrf.mxu0
      %v587 = vpop.f32.mrf.mxu0
      %v588 = vpop.f32.mrf.mxu0
      %589 = vdwg.mxu0
      %v590 = vld [vmem:[%s339] sm:$0xf]
      %v591 = vld [vmem:[%s339 + $0x4] sm:$0x1]
      %s592 = scalar_lea.vmem %s3, 4
      %v593 = vld [vmem:[%s592] sm:$0x1]
      %v596 = vunpack.c.l.b16 %v590
      %v597 = vunpack.c.l.b16 %v591
      %v598 = vpack.c.b16 %v597, %v596
      %v600 = vshrl.u32 %v598, 16
      %v602 = vshll.u32 %v598, 16
      %v604 = vrot.slane %v602, 1
      %v605 = vor.u32 %v600, %v604
      %v607 = vsel %vm392, %v605, 0
      %v610 = vsel %vm396, %v593, 0
      %612 = vmatprep.subr.bf16.mxu0 0
      %613 = vmatpush1.bf16.msra.mxu0 0
      %614 = vmatprep.subr.bf16.mxu0 0
      %615 = vmatpush1.bf16.msra.mxu0 0
      %616 = vmatprep.subr.bf16.mxu0 0
      %617 = vmatpush1.bf16.msra.mxu0 0
      %618 = vmatprep.subr.bf16.mxu0 0
      %619 = vmatpush1.bf16.msra.mxu0 0
      %620 = vmatprep.subr.bf16.mxu0 0
      %621 = vmatpush1.bf16.msra.mxu0 0
      %622 = vmatprep.subr.bf16.mxu0 0
      %623 = vmatpush1.bf16.msra.mxu0 0
      %624 = vmatprep.subr.bf16.mxu0 0
      %625 = vmatpush1.bf16.msra.mxu0 0
      %626 = vmatprep.subr.bf16.mxu0 0
      %627 = vmatpush1.bf16.msra.mxu0 %v610
      %628 = vmatprep.subr.bf16.mxu0 0
      %629 = vmatpush2.bf16.msra.mxu0 0
      %630 = vmatprep.subr.bf16.mxu0 0
      %631 = vmatpush2.bf16.msra.mxu0 0
      %632 = vmatprep.subr.bf16.mxu0 0
      %633 = vmatpush2.bf16.msra.mxu0 0
      %634 = vmatprep.subr.bf16.mxu0 0
      %635 = vmatpush2.bf16.msra.mxu0 0
      %636 = vmatprep.subr.bf16.mxu0 0
      %637 = vmatpush2.bf16.msra.mxu0 0
      %638 = vmatprep.subr.bf16.mxu0 0
      %639 = vmatpush2.bf16.msra.mxu0 0
      %640 = vmatprep.subr.bf16.mxu0 0
      %641 = vmatpush2.bf16.msra.mxu0 0
      %642 = vmatprep.subr.bf16.mxu0 0
      %643 = vmatpush2.bf16.msra.mxu0 0
      %644 = vmatprep.mubr.bf16.mxu0 0
      %645 = vmatmul.mubr.bf16.gmra.mxu0 %v607
      %v646 = vpop.f32.mrf.mxu0
      %v647 = vadd.f32 0.0, %v646
      %v648 = vpop.f32.mrf.mxu0
      %v649 = vpop.f32.mrf.mxu0
      %v650 = vpop.f32.mrf.mxu0
      %651 = vdwg.mxu0
      %v652 = vadd.f32 %v481, %v647
      %s653 = scalar_lea.vmem %s3, 5
      %v654 = vld [vmem:[%s653] sm:$0x1]
      %655 = vrot.lane.b32.xlu0 %v605, 126
      %v656 = vpop.permute.xlu0 %655
      %v658 = vsel %vm392, %v656, 0
      %v661 = vsel %vm396, %v654, 0
      %663 = vmatprep.subr.bf16.mxu0 0
      %664 = vmatpush1.bf16.msra.mxu0 0
      %665 = vmatprep.subr.bf16.mxu0 0
      %666 = vmatpush1.bf16.msra.mxu0 0
      %667 = vmatprep.subr.bf16.mxu0 0
      %668 = vmatpush1.bf16.msra.mxu0 0
      %669 = vmatprep.subr.bf16.mxu0 0
      %670 = vmatpush1.bf16.msra.mxu0 0
      %671 = vmatprep.subr.bf16.mxu0 0
      %672 = vmatpush1.bf16.msra.mxu0 0
      %673 = vmatprep.subr.bf16.mxu0 0
      %674 = vmatpush1.bf16.msra.mxu0 0
      %675 = vmatprep.subr.bf16.mxu0 0
      %676 = vmatpush1.bf16.msra.mxu0 0
      %677 = vmatprep.subr.bf16.mxu0 0
      %678 = vmatpush1.bf16.msra.mxu0 %v661
      %679 = vmatprep.subr.bf16.mxu0 0
      %680 = vmatpush2.bf16.msra.mxu0 0
      %681 = vmatprep.subr.bf16.mxu0 0
      %682 = vmatpush2.bf16.msra.mxu0 0
      %683 = vmatprep.subr.bf16.mxu0 0
      %684 = vmatpush2.bf16.msra.mxu0 0
      %685 = vmatprep.subr.bf16.mxu0 0
      %686 = vmatpush2.bf16.msra.mxu0 0
      %687 = vmatprep.subr.bf16.mxu0 0
      %688 = vmatpush2.bf16.msra.mxu0 0
      %689 = vmatprep.subr.bf16.mxu0 0
      %690 = vmatpush2.bf16.msra.mxu0 0
      %691 = vmatprep.subr.bf16.mxu0 0
      %692 = vmatpush2.bf16.msra.mxu0 0
      %693 = vmatprep.subr.bf16.mxu0 0
      %694 = vmatpush2.bf16.msra.mxu0 0
      %695 = vmatprep.mubr.bf16.mxu0 0
      %696 = vmatmul.mubr.bf16.gmra.mxu0 %v658
      %v697 = vpop.f32.mrf.mxu0
      %v698 = vadd.f32 0.0, %v697
      %v699 = vpop.f32.mrf.mxu0
      %v700 = vpop.f32.mrf.mxu0
      %v701 = vpop.f32.mrf.mxu0
      %702 = vdwg.mxu0
      %v703 = vadd.f32 %v585, %v698
      %v704 = vld [vmem:[%s351] sm:$0xf]
      %s705 = scalar_lea.vmem %s3, 6
      %v706 = vld [vmem:[%s705] sm:$0x1]
      %v708 = vsel %vm392, %v704, 0
      %v711 = vsel %vm396, %v706, 0
      %713 = vmatprep.subr.bf16.mxu0 0
      %714 = vmatpush1.bf16.msra.mxu0 0
      %715 = vmatprep.subr.bf16.mxu0 0
      %716 = vmatpush1.bf16.msra.mxu0 0
      %717 = vmatprep.subr.bf16.mxu0 0
      %718 = vmatpush1.bf16.msra.mxu0 0
      %719 = vmatprep.subr.bf16.mxu0 0
      %720 = vmatpush1.bf16.msra.mxu0 0
      %721 = vmatprep.subr.bf16.mxu0 0
      %722 = vmatpush1.bf16.msra.mxu0 0
      %723 = vmatprep.subr.bf16.mxu0 0
      %724 = vmatpush1.bf16.msra.mxu0 0
      %725 = vmatprep.subr.bf16.mxu0 0
      %726 = vmatpush1.bf16.msra.mxu0 0
      %727 = vmatprep.subr.bf16.mxu0 0
      %728 = vmatpush1.bf16.msra.mxu0 %v711
      %729 = vmatprep.subr.bf16.mxu0 0
      %730 = vmatpush2.bf16.msra.mxu0 0
      %731 = vmatprep.subr.bf16.mxu0 0
      %732 = vmatpush2.bf16.msra.mxu0 0
      %733 = vmatprep.subr.bf16.mxu0 0
      %734 = vmatpush2.bf16.msra.mxu0 0
      %735 = vmatprep.subr.bf16.mxu0 0
      %736 = vmatpush2.bf16.msra.mxu0 0
      %737 = vmatprep.subr.bf16.mxu0 0
      %738 = vmatpush2.bf16.msra.mxu0 0
      %739 = vmatprep.subr.bf16.mxu0 0
      %740 = vmatpush2.bf16.msra.mxu0 0
      %741 = vmatprep.subr.bf16.mxu0 0
      %742 = vmatpush2.bf16.msra.mxu0 0
      %743 = vmatprep.subr.bf16.mxu0 0
      %744 = vmatpush2.bf16.msra.mxu0 0
      %745 = vmatprep.mubr.bf16.mxu0 0
      %746 = vmatmul.mubr.bf16.gmra.mxu0 %v708
      %v747 = vpop.f32.mrf.mxu0
      %v748 = vadd.f32 0.0, %v747
      %v749 = vpop.f32.mrf.mxu0
      %v750 = vpop.f32.mrf.mxu0
      %v751 = vpop.f32.mrf.mxu0
      %752 = vdwg.mxu0
      %v753 = vadd.f32 %v652, %v748
      %s754 = scalar_lea.vmem %s3, 7
      %v755 = vld [vmem:[%s754] sm:$0x1]
      %v757 = vunpack.c.l.b16 %v704
      %v758 = vpack.c.b16 %v757, %v757
      %759 = vrot.lane.b32.xlu0 %v758, 126
      %v760 = vpop.permute.xlu0 %759
      %v762 = vsel %vm392, %v760, 0
      %v765 = vsel %vm396, %v755, 0
      %767 = vmatprep.subr.bf16.mxu0 0
      %768 = vmatpush1.bf16.msra.mxu0 0
      %769 = vmatprep.subr.bf16.mxu0 0
      %770 = vmatpush1.bf16.msra.mxu0 0
      %771 = vmatprep.subr.bf16.mxu0 0
      %772 = vmatpush1.bf16.msra.mxu0 0
      %773 = vmatprep.subr.bf16.mxu0 0
      %774 = vmatpush1.bf16.msra.mxu0 0
      %775 = vmatprep.subr.bf16.mxu0 0
      %776 = vmatpush1.bf16.msra.mxu0 0
      %777 = vmatprep.subr.bf16.mxu0 0
      %778 = vmatpush1.bf16.msra.mxu0 0
      %779 = vmatprep.subr.bf16.mxu0 0
      %780 = vmatpush1.bf16.msra.mxu0 0
      %781 = vmatprep.subr.bf16.mxu0 0
      %782 = vmatpush1.bf16.msra.mxu0 %v765
      %783 = vmatprep.subr.bf16.mxu0 0
      %784 = vmatpush2.bf16.msra.mxu0 0
      %785 = vmatprep.subr.bf16.mxu0 0
      %786 = vmatpush2.bf16.msra.mxu0 0
      %787 = vmatprep.subr.bf16.mxu0 0
      %788 = vmatpush2.bf16.msra.mxu0 0
      %789 = vmatprep.subr.bf16.mxu0 0
      %790 = vmatpush2.bf16.msra.mxu0 0
      %791 = vmatprep.subr.bf16.mxu0 0
      %792 = vmatpush2.bf16.msra.mxu0 0
      %793 = vmatprep.subr.bf16.mxu0 0
      %794 = vmatpush2.bf16.msra.mxu0 0
      %795 = vmatprep.subr.bf16.mxu0 0
      %796 = vmatpush2.bf16.msra.mxu0 0
      %797 = vmatprep.subr.bf16.mxu0 0
      %798 = vmatpush2.bf16.msra.mxu0 0
      %799 = vmatprep.mubr.bf16.mxu0 0
      %800 = vmatmul.mubr.bf16.gmra.mxu0 %v762
      %v801 = vpop.f32.mrf.mxu0
      %v802 = vadd.f32 0.0, %v801
      %v803 = vpop.f32.mrf.mxu0
      %v804 = vpop.f32.mrf.mxu0
      %v805 = vpop.f32.mrf.mxu0
      %806 = vdwg.mxu0
      %v807 = vadd.f32 %v703, %v802
      %s808 = scalar_lea.vmem %s351, 8
      %v809 = vld [vmem:[%s808] sm:$0xf]
      %s810 = scalar_lea.vmem %s3, 8
      %v811 = vld [vmem:[%s810] sm:$0x1]
      %v813 = vsel %vm392, %v809, 0
      %v816 = vsel %vm396, %v811, 0
      %818 = vmatprep.subr.bf16.mxu0 0
      %819 = vmatpush1.bf16.msra.mxu0 0
      %820 = vmatprep.subr.bf16.mxu0 0
      %821 = vmatpush1.bf16.msra.mxu0 0
      %822 = vmatprep.subr.bf16.mxu0 0
      %823 = vmatpush1.bf16.msra.mxu0 0
      %824 = vmatprep.subr.bf16.mxu0 0
      %825 = vmatpush1.bf16.msra.mxu0 0
      %826 = vmatprep.subr.bf16.mxu0 0
      %827 = vmatpush1.bf16.msra.mxu0 0
      %828 = vmatprep.subr.bf16.mxu0 0
      %829 = vmatpush1.bf16.msra.mxu0 0
      %830 = vmatprep.subr.bf16.mxu0 0
      %831 = vmatpush1.bf16.msra.mxu0 0
      %832 = vmatprep.subr.bf16.mxu0 0
      %833 = vmatpush1.bf16.msra.mxu0 %v816
      %834 = vmatprep.subr.bf16.mxu0 0
      %835 = vmatpush2.bf16.msra.mxu0 0
      %836 = vmatprep.subr.bf16.mxu0 0
      %837 = vmatpush2.bf16.msra.mxu0 0
      %838 = vmatprep.subr.bf16.mxu0 0
      %839 = vmatpush2.bf16.msra.mxu0 0
      %840 = vmatprep.subr.bf16.mxu0 0
      %841 = vmatpush2.bf16.msra.mxu0 0
      %842 = vmatprep.subr.bf16.mxu0 0
      %843 = vmatpush2.bf16.msra.mxu0 0
      %844 = vmatprep.subr.bf16.mxu0 0
      %845 = vmatpush2.bf16.msra.mxu0 0
      %846 = vmatprep.subr.bf16.mxu0 0
      %847 = vmatpush2.bf16.msra.mxu0 0
      %848 = vmatprep.subr.bf16.mxu0 0
      %849 = vmatpush2.bf16.msra.mxu0 0
      %850 = vmatprep.mubr.bf16.mxu0 0
      %851 = vmatmul.mubr.bf16.gmra.mxu0 %v813
      %v852 = vpop.f32.mrf.mxu0
      %v853 = vadd.f32 0.0, %v852
      %v854 = vpop.f32.mrf.mxu0
      %v855 = vpop.f32.mrf.mxu0
      %v856 = vpop.f32.mrf.mxu0
      %857 = vdwg.mxu0
      %v858 = vadd.f32 %v753, %v853
      %s859 = scalar_lea.vmem %s3, 9
      %v860 = vld [vmem:[%s859] sm:$0x1]
      %v862 = vunpack.c.l.b16 %v809
      %v863 = vpack.c.b16 %v862, %v862
      %864 = vrot.lane.b32.xlu0 %v863, 126
      %v865 = vpop.permute.xlu0 %864
      %v867 = vsel %vm392, %v865, 0
      %v870 = vsel %vm396, %v860, 0
      %872 = vmatprep.subr.bf16.mxu0 0
      %873 = vmatpush1.bf16.msra.mxu0 0
      %874 = vmatprep.subr.bf16.mxu0 0
      %875 = vmatpush1.bf16.msra.mxu0 0
      %876 = vmatprep.subr.bf16.mxu0 0
      %877 = vmatpush1.bf16.msra.mxu0 0
      %878 = vmatprep.subr.bf16.mxu0 0
      %879 = vmatpush1.bf16.msra.mxu0 0
      %880 = vmatprep.subr.bf16.mxu0 0
      %881 = vmatpush1.bf16.msra.mxu0 0
      %882 = vmatprep.subr.bf16.mxu0 0
      %883 = vmatpush1.bf16.msra.mxu0 0
      %884 = vmatprep.subr.bf16.mxu0 0
      %885 = vmatpush1.bf16.msra.mxu0 0
      %886 = vmatprep.subr.bf16.mxu0 0
      %887 = vmatpush1.bf16.msra.mxu0 %v870
      %888 = vmatprep.subr.bf16.mxu0 0
      %889 = vmatpush2.bf16.msra.mxu0 0
      %890 = vmatprep.subr.bf16.mxu0 0
      %891 = vmatpush2.bf16.msra.mxu0 0
      %892 = vmatprep.subr.bf16.mxu0 0
      %893 = vmatpush2.bf16.msra.mxu0 0
      %894 = vmatprep.subr.bf16.mxu0 0
      %895 = vmatpush2.bf16.msra.mxu0 0
      %896 = vmatprep.subr.bf16.mxu0 0
      %897 = vmatpush2.bf16.msra.mxu0 0
      %898 = vmatprep.subr.bf16.mxu0 0
      %899 = vmatpush2.bf16.msra.mxu0 0
      %900 = vmatprep.subr.bf16.mxu0 0
      %901 = vmatpush2.bf16.msra.mxu0 0
      %902 = vmatprep.subr.bf16.mxu0 0
      %903 = vmatpush2.bf16.msra.mxu0 0
      %904 = vmatprep.mubr.bf16.mxu0 0
      %905 = vmatmul.mubr.bf16.gmra.mxu0 %v867
      %v906 = vpop.f32.mrf.mxu0
      %v907 = vadd.f32 0.0, %v906
      %v908 = vpop.f32.mrf.mxu0
      %v909 = vpop.f32.mrf.mxu0
      %v910 = vpop.f32.mrf.mxu0
      %911 = vdwg.mxu0
      %v912 = vadd.f32 %v807, %v907
      %v913 = vld [vmem:[%s351] sm:$0xf]
      %v914 = vld [vmem:[%s351 + $0x4] sm:$0x1]
      %s915 = scalar_lea.vmem %s3, 10
      %v916 = vld [vmem:[%s915] sm:$0x1]
      %v919 = vunpack.c.l.b16 %v913
      %v920 = vunpack.c.l.b16 %v914
      %v921 = vpack.c.b16 %v920, %v919
      %v923 = vshrl.u32 %v921, 16
      %v925 = vshll.u32 %v921, 16
      %v927 = vrot.slane %v925, 1
      %v928 = vor.u32 %v923, %v927
      %v930 = vsel %vm392, %v928, 0
      %v933 = vsel %vm396, %v916, 0
      %935 = vmatprep.subr.bf16.mxu0 0
      %936 = vmatpush1.bf16.msra.mxu0 0
      %937 = vmatprep.subr.bf16.mxu0 0
      %938 = vmatpush1.bf16.msra.mxu0 0
      %939 = vmatprep.subr.bf16.mxu0 0
      %940 = vmatpush1.bf16.msra.mxu0 0
      %941 = vmatprep.subr.bf16.mxu0 0
      %942 = vmatpush1.bf16.msra.mxu0 0
      %943 = vmatprep.subr.bf16.mxu0 0
      %944 = vmatpush1.bf16.msra.mxu0 0
      %945 = vmatprep.subr.bf16.mxu0 0
      %946 = vmatpush1.bf16.msra.mxu0 0
      %947 = vmatprep.subr.bf16.mxu0 0
      %948 = vmatpush1.bf16.msra.mxu0 0
      %949 = vmatprep.subr.bf16.mxu0 0
      %950 = vmatpush1.bf16.msra.mxu0 %v933
      %951 = vmatprep.subr.bf16.mxu0 0
      %952 = vmatpush2.bf16.msra.mxu0 0
      %953 = vmatprep.subr.bf16.mxu0 0
      %954 = vmatpush2.bf16.msra.mxu0 0
      %955 = vmatprep.subr.bf16.mxu0 0
      %956 = vmatpush2.bf16.msra.mxu0 0
      %957 = vmatprep.subr.bf16.mxu0 0
      %958 = vmatpush2.bf16.msra.mxu0 0
      %959 = vmatprep.subr.bf16.mxu0 0
      %960 = vmatpush2.bf16.msra.mxu0 0
      %961 = vmatprep.subr.bf16.mxu0 0
      %962 = vmatpush2.bf16.msra.mxu0 0
      %963 = vmatprep.subr.bf16.mxu0 0
      %964 = vmatpush2.bf16.msra.mxu0 0
      %965 = vmatprep.subr.bf16.mxu0 0
      %966 = vmatpush2.bf16.msra.mxu0 0
      %967 = vmatprep.mubr.bf16.mxu0 0
      %968 = vmatmul.mubr.bf16.gmra.mxu0 %v930
      %v969 = vpop.f32.mrf.mxu0
      %v970 = vadd.f32 0.0, %v969
      %v971 = vpop.f32.mrf.mxu0
      %v972 = vpop.f32.mrf.mxu0
      %v973 = vpop.f32.mrf.mxu0
      %974 = vdwg.mxu0
      %v975 = vadd.f32 %v858, %v970
      %s976 = scalar_lea.vmem %s3, 11
      %v977 = vld [vmem:[%s976] sm:$0x1]
      %978 = vrot.lane.b32.xlu0 %v928, 126
      %v979 = vpop.permute.xlu0 %978
      %v981 = vsel %vm392, %v979, 0
      %v984 = vsel %vm396, %v977, 0
      %986 = vmatprep.subr.bf16.mxu0 0
      %987 = vmatpush1.bf16.msra.mxu0 0
      %988 = vmatprep.subr.bf16.mxu0 0
      %989 = vmatpush1.bf16.msra.mxu0 0
      %990 = vmatprep.subr.bf16.mxu0 0
      %991 = vmatpush1.bf16.msra.mxu0 0
      %992 = vmatprep.subr.bf16.mxu0 0
      %993 = vmatpush1.bf16.msra.mxu0 0
      %994 = vmatprep.subr.bf16.mxu0 0
      %995 = vmatpush1.bf16.msra.mxu0 0
      %996 = vmatprep.subr.bf16.mxu0 0
      %997 = vmatpush1.bf16.msra.mxu0 0
      %998 = vmatprep.subr.bf16.mxu0 0
      %999 = vmatpush1.bf16.msra.mxu0 0
      %1000 = vmatprep.subr.bf16.mxu0 0
      %1001 = vmatpush1.bf16.msra.mxu0 %v984
      %1002 = vmatprep.subr.bf16.mxu0 0
      %1003 = vmatpush2.bf16.msra.mxu0 0
      %1004 = vmatprep.subr.bf16.mxu0 0
      %1005 = vmatpush2.bf16.msra.mxu0 0
      %1006 = vmatprep.subr.bf16.mxu0 0
      %1007 = vmatpush2.bf16.msra.mxu0 0
      %1008 = vmatprep.subr.bf16.mxu0 0
      %1009 = vmatpush2.bf16.msra.mxu0 0
      %1010 = vmatprep.subr.bf16.mxu0 0
      %1011 = vmatpush2.bf16.msra.mxu0 0
      %1012 = vmatprep.subr.bf16.mxu0 0
      %1013 = vmatpush2.bf16.msra.mxu0 0
      %1014 = vmatprep.subr.bf16.mxu0 0
      %1015 = vmatpush2.bf16.msra.mxu0 0
      %1016 = vmatprep.subr.bf16.mxu0 0
      %1017 = vmatpush2.bf16.msra.mxu0 0
      %1018 = vmatprep.mubr.bf16.mxu0 0
      %1019 = vmatmul.mubr.bf16.gmra.mxu0 %v981
      %v1020 = vpop.f32.mrf.mxu0
      %v1021 = vadd.f32 0.0, %v1020
      %v1022 = vpop.f32.mrf.mxu0
      %v1023 = vpop.f32.mrf.mxu0
      %v1024 = vpop.f32.mrf.mxu0
      %1025 = vdwg.mxu0
      %v1026 = vadd.f32 %v912, %v1021
      %v1027 = vld [vmem:[%s364] sm:$0xf]
      %s1028 = scalar_lea.vmem %s3, 12
      %v1029 = vld [vmem:[%s1028] sm:$0x1]
      %v1031 = vsel %vm392, %v1027, 0
      %v1034 = vsel %vm396, %v1029, 0
      %1036 = vmatprep.subr.bf16.mxu0 0
      %1037 = vmatpush1.bf16.msra.mxu0 0
      %1038 = vmatprep.subr.bf16.mxu0 0
      %1039 = vmatpush1.bf16.msra.mxu0 0
      %1040 = vmatprep.subr.bf16.mxu0 0
      %1041 = vmatpush1.bf16.msra.mxu0 0
      %1042 = vmatprep.subr.bf16.mxu0 0
      %1043 = vmatpush1.bf16.msra.mxu0 0
      %1044 = vmatprep.subr.bf16.mxu0 0
      %1045 = vmatpush1.bf16.msra.mxu0 0
      %1046 = vmatprep.subr.bf16.mxu0 0
      %1047 = vmatpush1.bf16.msra.mxu0 0
      %1048 = vmatprep.subr.bf16.mxu0 0
      %1049 = vmatpush1.bf16.msra.mxu0 0
      %1050 = vmatprep.subr.bf16.mxu0 0
      %1051 = vmatpush1.bf16.msra.mxu0 %v1034
      %1052 = vmatprep.subr.bf16.mxu0 0
      %1053 = vmatpush2.bf16.msra.mxu0 0
      %1054 = vmatprep.subr.bf16.mxu0 0
      %1055 = vmatpush2.bf16.msra.mxu0 0
      %1056 = vmatprep.subr.bf16.mxu0 0
      %1057 = vmatpush2.bf16.msra.mxu0 0
      %1058 = vmatprep.subr.bf16.mxu0 0
      %1059 = vmatpush2.bf16.msra.mxu0 0
      %1060 = vmatprep.subr.bf16.mxu0 0
      %1061 = vmatpush2.bf16.msra.mxu0 0
      %1062 = vmatprep.subr.bf16.mxu0 0
      %1063 = vmatpush2.bf16.msra.mxu0 0
      %1064 = vmatprep.subr.bf16.mxu0 0
      %1065 = vmatpush2.bf16.msra.mxu0 0
      %1066 = vmatprep.subr.bf16.mxu0 0
      %1067 = vmatpush2.bf16.msra.mxu0 0
      %1068 = vmatprep.mubr.bf16.mxu0 0
      %1069 = vmatmul.mubr.bf16.gmra.mxu0 %v1031
      %v1070 = vpop.f32.mrf.mxu0
      %v1071 = vadd.f32 0.0, %v1070
      %v1072 = vpop.f32.mrf.mxu0
      %v1073 = vpop.f32.mrf.mxu0
      %v1074 = vpop.f32.mrf.mxu0
      %1075 = vdwg.mxu0
      %v1076 = vadd.f32 %v975, %v1071
      %s1077 = scalar_lea.vmem %s3, 13
      %v1078 = vld [vmem:[%s1077] sm:$0x1]
      %v1080 = vunpack.c.l.b16 %v1027
      %v1081 = vpack.c.b16 %v1080, %v1080
      %1082 = vrot.lane.b32.xlu0 %v1081, 126
      %v1083 = vpop.permute.xlu0 %1082
      %v1085 = vsel %vm392, %v1083, 0
      %v1088 = vsel %vm396, %v1078, 0
      %1090 = vmatprep.subr.bf16.mxu0 0
      %1091 = vmatpush1.bf16.msra.mxu0 0
      %1092 = vmatprep.subr.bf16.mxu0 0
      %1093 = vmatpush1.bf16.msra.mxu0 0
      %1094 = vmatprep.subr.bf16.mxu0 0
      %1095 = vmatpush1.bf16.msra.mxu0 0
      %1096 = vmatprep.subr.bf16.mxu0 0
      %1097 = vmatpush1.bf16.msra.mxu0 0
      %1098 = vmatprep.subr.bf16.mxu0 0
      %1099 = vmatpush1.bf16.msra.mxu0 0
      %1100 = vmatprep.subr.bf16.mxu0 0
      %1101 = vmatpush1.bf16.msra.mxu0 0
      %1102 = vmatprep.subr.bf16.mxu0 0
      %1103 = vmatpush1.bf16.msra.mxu0 0
      %1104 = vmatprep.subr.bf16.mxu0 0
      %1105 = vmatpush1.bf16.msra.mxu0 %v1088
      %1106 = vmatprep.subr.bf16.mxu0 0
      %1107 = vmatpush2.bf16.msra.mxu0 0
      %1108 = vmatprep.subr.bf16.mxu0 0
      %1109 = vmatpush2.bf16.msra.mxu0 0
      %1110 = vmatprep.subr.bf16.mxu0 0
      %1111 = vmatpush2.bf16.msra.mxu0 0
      %1112 = vmatprep.subr.bf16.mxu0 0
      %1113 = vmatpush2.bf16.msra.mxu0 0
      %1114 = vmatprep.subr.bf16.mxu0 0
      %1115 = vmatpush2.bf16.msra.mxu0 0
      %1116 = vmatprep.subr.bf16.mxu0 0
      %1117 = vmatpush2.bf16.msra.mxu0 0
      %1118 = vmatprep.subr.bf16.mxu0 0
      %1119 = vmatpush2.bf16.msra.mxu0 0
      %1120 = vmatprep.subr.bf16.mxu0 0
      %1121 = vmatpush2.bf16.msra.mxu0 0
      %1122 = vmatprep.mubr.bf16.mxu0 0
      %1123 = vmatmul.mubr.bf16.gmra.mxu0 %v1085
      %v1124 = vpop.f32.mrf.mxu0
      %v1125 = vadd.f32 0.0, %v1124
      %v1126 = vpop.f32.mrf.mxu0
      %v1127 = vpop.f32.mrf.mxu0
      %v1128 = vpop.f32.mrf.mxu0
      %1129 = vdwg.mxu0
      %v1130 = vadd.f32 %v1026, %v1125
      %s1131 = scalar_lea.vmem %s364, 8
      %v1132 = vld [vmem:[%s1131] sm:$0xf]
      %s1133 = scalar_lea.vmem %s3, 14
      %v1134 = vld [vmem:[%s1133] sm:$0x1]
      %v1136 = vsel %vm392, %v1132, 0
      %v1139 = vsel %vm396, %v1134, 0
      %1141 = vmatprep.subr.bf16.mxu0 0
      %1142 = vmatpush1.bf16.msra.mxu0 0
      %1143 = vmatprep.subr.bf16.mxu0 0
      %1144 = vmatpush1.bf16.msra.mxu0 0
      %1145 = vmatprep.subr.bf16.mxu0 0
      %1146 = vmatpush1.bf16.msra.mxu0 0
      %1147 = vmatprep.subr.bf16.mxu0 0
      %1148 = vmatpush1.bf16.msra.mxu0 0
      %1149 = vmatprep.subr.bf16.mxu0 0
      %1150 = vmatpush1.bf16.msra.mxu0 0
      %1151 = vmatprep.subr.bf16.mxu0 0
      %1152 = vmatpush1.bf16.msra.mxu0 0
      %1153 = vmatprep.subr.bf16.mxu0 0
      %1154 = vmatpush1.bf16.msra.mxu0 0
      %1155 = vmatprep.subr.bf16.mxu0 0
      %1156 = vmatpush1.bf16.msra.mxu0 %v1139
      %1157 = vmatprep.subr.bf16.mxu0 0
      %1158 = vmatpush2.bf16.msra.mxu0 0
      %1159 = vmatprep.subr.bf16.mxu0 0
      %1160 = vmatpush2.bf16.msra.mxu0 0
      %1161 = vmatprep.subr.bf16.mxu0 0
      %1162 = vmatpush2.bf16.msra.mxu0 0
      %1163 = vmatprep.subr.bf16.mxu0 0
      %1164 = vmatpush2.bf16.msra.mxu0 0
      %1165 = vmatprep.subr.bf16.mxu0 0
      %1166 = vmatpush2.bf16.msra.mxu0 0
      %1167 = vmatprep.subr.bf16.mxu0 0
      %1168 = vmatpush2.bf16.msra.mxu0 0
      %1169 = vmatprep.subr.bf16.mxu0 0
      %1170 = vmatpush2.bf16.msra.mxu0 0
      %1171 = vmatprep.subr.bf16.mxu0 0
      %1172 = vmatpush2.bf16.msra.mxu0 0
      %1173 = vmatprep.mubr.bf16.mxu0 0
      %1174 = vmatmul.mubr.bf16.gmra.mxu0 %v1136
      %v1175 = vpop.f32.mrf.mxu0
      %v1176 = vadd.f32 0.0, %v1175
      %v1177 = vpop.f32.mrf.mxu0
      %v1178 = vpop.f32.mrf.mxu0
      %v1179 = vpop.f32.mrf.mxu0
      %1180 = vdwg.mxu0
      %v1181 = vadd.f32 %v1076, %v1176
      %s1182 = scalar_lea.vmem %s3, 15
      %v1183 = vld [vmem:[%s1182] sm:$0x1]
      %v1185 = vunpack.c.l.b16 %v1132
      %v1186 = vpack.c.b16 %v1185, %v1185
      %1187 = vrot.lane.b32.xlu0 %v1186, 126
      %v1188 = vpop.permute.xlu0 %1187
      %v1190 = vsel %vm392, %v1188, 0
      %v1193 = vsel %vm396, %v1183, 0
      %1195 = vmatprep.subr.bf16.mxu0 0
      %1196 = vmatpush1.bf16.msra.mxu0 0
      %1197 = vmatprep.subr.bf16.mxu0 0
      %1198 = vmatpush1.bf16.msra.mxu0 0
      %1199 = vmatprep.subr.bf16.mxu0 0
      %1200 = vmatpush1.bf16.msra.mxu0 0
      %1201 = vmatprep.subr.bf16.mxu0 0
      %1202 = vmatpush1.bf16.msra.mxu0 0
      %1203 = vmatprep.subr.bf16.mxu0 0
      %1204 = vmatpush1.bf16.msra.mxu0 0
      %1205 = vmatprep.subr.bf16.mxu0 0
      %1206 = vmatpush1.bf16.msra.mxu0 0
      %1207 = vmatprep.subr.bf16.mxu0 0
      %1208 = vmatpush1.bf16.msra.mxu0 0
      %1209 = vmatprep.subr.bf16.mxu0 0
      %1210 = vmatpush1.bf16.msra.mxu0 %v1193
      %1211 = vmatprep.subr.bf16.mxu0 0
      %1212 = vmatpush2.bf16.msra.mxu0 0
      %1213 = vmatprep.subr.bf16.mxu0 0
      %1214 = vmatpush2.bf16.msra.mxu0 0
      %1215 = vmatprep.subr.bf16.mxu0 0
      %1216 = vmatpush2.bf16.msra.mxu0 0
      %1217 = vmatprep.subr.bf16.mxu0 0
      %1218 = vmatpush2.bf16.msra.mxu0 0
      %1219 = vmatprep.subr.bf16.mxu0 0
      %1220 = vmatpush2.bf16.msra.mxu0 0
      %1221 = vmatprep.subr.bf16.mxu0 0
      %1222 = vmatpush2.bf16.msra.mxu0 0
      %1223 = vmatprep.subr.bf16.mxu0 0
      %1224 = vmatpush2.bf16.msra.mxu0 0
      %1225 = vmatprep.subr.bf16.mxu0 0
      %1226 = vmatpush2.bf16.msra.mxu0 0
      %1227 = vmatprep.mubr.bf16.mxu0 0
      %1228 = vmatmul.mubr.bf16.gmra.mxu0 %v1190
      %v1229 = vpop.f32.mrf.mxu0
      %v1230 = vadd.f32 0.0, %v1229
      %v1231 = vpop.f32.mrf.mxu0
      %v1232 = vpop.f32.mrf.mxu0
      %v1233 = vpop.f32.mrf.mxu0
      %1234 = vdwg.mxu0
      %v1235 = vadd.f32 %v1130, %v1230
      %v1236 = vld [vmem:[%s364] sm:$0xf]
      %v1237 = vld [vmem:[%s364 + $0x4] sm:$0x1]
      %s1238 = scalar_lea.vmem %s3, 16
      %v1239 = vld [vmem:[%s1238] sm:$0x1]
      %v1242 = vunpack.c.l.b16 %v1236
      %v1243 = vunpack.c.l.b16 %v1237
      %v1244 = vpack.c.b16 %v1243, %v1242
      %v1246 = vshrl.u32 %v1244, 16
      %v1248 = vshll.u32 %v1244, 16
      %v1250 = vrot.slane %v1248, 1
      %v1251 = vor.u32 %v1246, %v1250
      %v1253 = vsel %vm392, %v1251, 0
      %v1256 = vsel %vm396, %v1239, 0
      %1258 = vmatprep.subr.bf16.mxu0 0
      %1259 = vmatpush1.bf16.msra.mxu0 0
      %1260 = vmatprep.subr.bf16.mxu0 0
      %1261 = vmatpush1.bf16.msra.mxu0 0
      %1262 = vmatprep.subr.bf16.mxu0 0
      %1263 = vmatpush1.bf16.msra.mxu0 0
      %1264 = vmatprep.subr.bf16.mxu0 0
      %1265 = vmatpush1.bf16.msra.mxu0 0
      %1266 = vmatprep.subr.bf16.mxu0 0
      %1267 = vmatpush1.bf16.msra.mxu0 0
      %1268 = vmatprep.subr.bf16.mxu0 0
      %1269 = vmatpush1.bf16.msra.mxu0 0
      %1270 = vmatprep.subr.bf16.mxu0 0
      %1271 = vmatpush1.bf16.msra.mxu0 0
      %1272 = vmatprep.subr.bf16.mxu0 0
      %1273 = vmatpush1.bf16.msra.mxu0 %v1256
      %1274 = vmatprep.subr.bf16.mxu0 0
      %1275 = vmatpush2.bf16.msra.mxu0 0
      %1276 = vmatprep.subr.bf16.mxu0 0
      %1277 = vmatpush2.bf16.msra.mxu0 0
      %1278 = vmatprep.subr.bf16.mxu0 0
      %1279 = vmatpush2.bf16.msra.mxu0 0
      %1280 = vmatprep.subr.bf16.mxu0 0
      %1281 = vmatpush2.bf16.msra.mxu0 0
      %1282 = vmatprep.subr.bf16.mxu0 0
      %1283 = vmatpush2.bf16.msra.mxu0 0
      %1284 = vmatprep.subr.bf16.mxu0 0
      %1285 = vmatpush2.bf16.msra.mxu0 0
      %1286 = vmatprep.subr.bf16.mxu0 0
      %1287 = vmatpush2.bf16.msra.mxu0 0
      %1288 = vmatprep.subr.bf16.mxu0 0
      %1289 = vmatpush2.bf16.msra.mxu0 0
      %1290 = vmatprep.mubr.bf16.mxu0 0
      %1291 = vmatmul.mubr.bf16.gmra.mxu0 %v1253
      %v1292 = vpop.f32.mrf.mxu0
      %v1293 = vadd.f32 0.0, %v1292
      %v1294 = vpop.f32.mrf.mxu0
      %v1295 = vpop.f32.mrf.mxu0
      %v1296 = vpop.f32.mrf.mxu0
      %1297 = vdwg.mxu0
      %v1298 = vadd.f32 %v1181, %v1293
      %s1299 = scalar_lea.vmem %s3, 17
      %v1300 = vld [vmem:[%s1299] sm:$0x1]
      %1301 = vrot.lane.b32.xlu0 %v1251, 126
      %v1302 = vpop.permute.xlu0 %1301
      %v1304 = vsel %vm392, %v1302, 0
      %v1307 = vsel %vm396, %v1300, 0
      %1309 = vmatprep.subr.bf16.mxu0 0
      %1310 = vmatpush1.bf16.msra.mxu0 0
      %1311 = vmatprep.subr.bf16.mxu0 0
      %1312 = vmatpush1.bf16.msra.mxu0 0
      %1313 = vmatprep.subr.bf16.mxu0 0
      %1314 = vmatpush1.bf16.msra.mxu0 0
      %1315 = vmatprep.subr.bf16.mxu0 0
      %1316 = vmatpush1.bf16.msra.mxu0 0
      %1317 = vmatprep.subr.bf16.mxu0 0
      %1318 = vmatpush1.bf16.msra.mxu0 0
      %1319 = vmatprep.subr.bf16.mxu0 0
      %1320 = vmatpush1.bf16.msra.mxu0 0
      %1321 = vmatprep.subr.bf16.mxu0 0
      %1322 = vmatpush1.bf16.msra.mxu0 0
      %1323 = vmatprep.subr.bf16.mxu0 0
      %1324 = vmatpush1.bf16.msra.mxu0 %v1307
      %1325 = vmatprep.subr.bf16.mxu0 0
      %1326 = vmatpush2.bf16.msra.mxu0 0
      %1327 = vmatprep.subr.bf16.mxu0 0
      %1328 = vmatpush2.bf16.msra.mxu0 0
      %1329 = vmatprep.subr.bf16.mxu0 0
      %1330 = vmatpush2.bf16.msra.mxu0 0
      %1331 = vmatprep.subr.bf16.mxu0 0
      %1332 = vmatpush2.bf16.msra.mxu0 0
      %1333 = vmatprep.subr.bf16.mxu0 0
      %1334 = vmatpush2.bf16.msra.mxu0 0
      %1335 = vmatprep.subr.bf16.mxu0 0
      %1336 = vmatpush2.bf16.msra.mxu0 0
      %1337 = vmatprep.subr.bf16.mxu0 0
      %1338 = vmatpush2.bf16.msra.mxu0 0
      %1339 = vmatprep.subr.bf16.mxu0 0
      %1340 = vmatpush2.bf16.msra.mxu0 0
      %1341 = vmatprep.mubr.bf16.mxu0 0
      %1342 = vmatmul.mubr.bf16.gmra.mxu0 %v1304
      %v1343 = vpop.f32.mrf.mxu0
      %v1344 = vadd.f32 0.0, %v1343
      %v1345 = vpop.f32.mrf.mxu0
      %v1346 = vpop.f32.mrf.mxu0
      %v1347 = vpop.f32.mrf.mxu0
      %1348 = vdwg.mxu0
      %v1349 = vadd.f32 %v1235, %v1344
      %1351 = vrot.lane.b32.xlu0 %v1349, 2
      %v1352 = vpop.permute.xlu0 %1351
      %v1354 = vsel %vm392, %v1298, %v1352
      %v1355 = vpack.c.bf16 %v1354, %v1354
      %vm1356 = vcmask 27648
      %1357 = vst.msk [vmem:[%s374] sm:$0xf] %vm1356, %v1355
      %v1358 = vunpack.c.l.bf16 %v1355
      %vm1359 = vcmask 31744
      %v1360 = vsel %vm1359, %v1358, 0.0
      %v1361 = vrot.slane %v1360, 4
      %v1362 = vadd.f32 %v1360, %v1361
      %v1363 = vrot.slane %v1362, 2
      %v1364 = vadd.f32 %v1362, %v1363
      %v1365 = vrot.slane %v1364, 1
      %v1366 = vadd.f32 %v1364, %v1365
      %v1367 = vmul.f32 %v1358, %v1358
      %v1368 = vsel %vm1359, %v1367, 0.0
      %v1369 = vrot.slane %v1368, 4
      %v1370 = vadd.f32 %v1368, %v1369
      %v1371 = vrot.slane %v1370, 2
      %v1372 = vadd.f32 %v1370, %v1371
      %v1373 = vrot.slane %v1372, 1
      %v1374 = vadd.f32 %v1372, %v1373
      %v1375 = vsel %vm396, %v1366, %v1374
      %vm1376 = vcmask 25600
      %1377 = vst.msk [vmem:[%s382] sm:$0x3] %vm1376, %v1375
      %p1378 = scmp.lt.s32.totalorder %s21, 1
      %s1379 = scalar_select %p1378, %s21, 1
      %p1380 = scmp.lt.s32.totalorder %s22, 7
      %s1381 = scalar_select %p1380, %s22, 7
      %s1382 = smul.addr %s1379, 8
      %s1383 = sadd.s32 %s1381, %s1382
      %s1384 = smul.addr %s1383, 4
      %s1385 = scalar_lea.vmem %s4, %s1384
      %p1386 = scmp.lt.s32.totalorder %s21, 1
      %s1387 = scalar_select %p1386, %s21, 1
      %p1388 = scmp.lt.s32.totalorder %s22, 7
      %s1389 = scalar_select %p1388, %s22, 7
      %s1390 = smul.addr %s1387, 8
      %s1391 = sadd.s32 %s1389, %s1390
      %s1392 = smul.addr %s1391, 2
      %s1393 = scalar_lea.vmem %s5, %s1392
      // Predicated region
      $region37: #{xblock_forward.7} parent=35 // pred_check
        %p1394 = pneg %p164
      $region38: #{xblock_forward.7} parent=35 // pred_check_branch
        %1396 = sbr.rel (%p1394) target = $region40
      $region39: #{xblock_forward.7} parent=35 // pred_region
        _
      $region40: #{xblock_forward.7} parent=35 // pred_fallthru
        _
      // Predicated region
      $region41: #{xblock_forward.7} parent=35 // pred_check
        %p1397 = pneg %p192
      $region42: #{xblock_forward.7} parent=35 // pred_check_branch
        %1399 = sbr.rel (%p1397) target = $region44
      $region43: #{xblock_forward.7} parent=35 // pred_region
        _
      $region44: #{xblock_forward.7} parent=35 // pred_fallthru
        _
    $region36: #{xblock_forward.7} parent=5 // pred_fallthru
      _
    %p1400 = scmp.le.s32.totalorder 2, %s12
    // Predicated region
    $region45: #{xblock_forward.7} parent=5 // pred_check
      %p1401 = pneg %p1400
    $region46: #{xblock_forward.7} parent=5 // pred_check_branch
      %1403 = sbr.rel (%p1401) target = $region48
    $region47: #{xblock_forward.7} parent=5 // pred_region
      %s1404 = ssub.s32 %s12, 2
      // Predicated region
      $region49: #{xblock_forward.7} parent=47 // pred_check
        %p1405 = pneg %p170
      $region50: #{xblock_forward.7} parent=47 // pred_check_branch
        %1407 = sbr.rel (%p1405) target = $region52
      $region51: #{xblock_forward.7} parent=47 // pred_region
        %p1408 = scmp.lt.s32.totalorder %s23, 1
        %s1409 = scalar_select %p1408, %s23, 1
        %p1410 = scmp.lt.s32.totalorder %s24, 7
        %s1411 = scalar_select %p1410, %s24, 7
        %s1412 = smul.addr %s1409, 8
        %s1413 = sadd.s32 %s1411, %s1412
        %s1414 = smul.addr %s1413, 4
        %s1415 = scalar_lea.vmem %s4, %s1414
      $region52: #{xblock_forward.7} parent=47 // pred_fallthru
        _
      // Predicated region
      $region53: #{xblock_forward.7} parent=47 // pred_check
        %p1416 = pneg %p198
      $region54: #{xblock_forward.7} parent=47 // pred_check_branch
        %1418 = sbr.rel (%p1416) target = $region56
      $region55: #{xblock_forward.7} parent=47 // pred_region
        %p1419 = scmp.lt.s32.totalorder %s23, 1
        %s1420 = scalar_select %p1419, %s23, 1
        %p1421 = scmp.lt.s32.totalorder %s24, 7
        %s1422 = scalar_select %p1421, %s24, 7
        %s1423 = smul.addr %s1420, 8
        %s1424 = sadd.s32 %s1422, %s1423
        %s1425 = smul.addr %s1424, 2
        %s1426 = scalar_lea.vmem %s5, %s1425
      $region56: #{xblock_forward.7} parent=47 // pred_fallthru
        _
    $region48: #{xblock_forward.7} parent=5 // pred_fallthru
      _
  $region6: #{xblock_forward.7} parent=0 // loop_footer
    %s16 = sadd.s32 1, %s12
  $region7: #{xblock_forward.7} parent=0 // loop_footer_branch
    %11 = sbr.rel target = $region3
  $region8: #{xblock_forward.7} parent=0 // loop_exit
    _

// kernel: xblock_forward.9
$region0: #{xblock_forward.9}
  #allocation0 [shape = 'u32[]', space=smem, size = 0x4, offset = 0x4, fixed_abs, tag = 'smem constant byte address 0x4 - core index']
  #allocation1 [shape = 'u32[144,128]{1,0:T(1,128)}', space=vmem, size = 0x12000, scoped, tag = 'internal scratch']
  %s0 = inlined_call_operand.vmem [shape: bf16[128,8], index: 0, kind: input, shape index: {}]
  %s1 = inlined_call_operand.vmem [shape: f32[1,8], index: 1, kind: input, shape index: {}]
  %s2 = inlined_call_operand.vmem [shape: f32[1,8], index: 2, kind: input, shape index: {}]
  %s3 = inlined_call_operand.vmem [shape: bf16[128,8], index: 3, kind: input, shape index: {}]
  %s4 = inlined_call_operand.vmem [shape: f32[1,8], index: 4, kind: input, shape index: {}]
  %s5 = inlined_call_operand.vmem [shape: f32[1,8], index: 5, kind: input, shape index: {}]
  %s6 = inlined_call_operand.vmem [shape: f32[128,8], index: 6, kind: output, shape index: {}]
  %s7 = sld [smem:[#allocation0]]
  $region34: #{xblock_forward.9} parent=0
    _
  %s9 = ssub.s32 1, %s7
  %s10 = scalar_select 0, %s9, %s7
  // Predicated region
  $region2: #{xblock_forward.9} parent=0 // pred_check
    _
  $region3: #{xblock_forward.9} parent=0 // pred_check_branch
    %12 = sbr.rel (0) target = $region5
  $region4: #{xblock_forward.9} parent=0 // pred_region
    _
  $region5: #{xblock_forward.9} parent=0 // pred_fallthru
    _
  // Predicated region
  $region6: #{xblock_forward.9} parent=0 // pred_check
    _
  $region7: #{xblock_forward.9} parent=0 // pred_check_branch
    %14 = sbr.rel (0) target = $region9
  $region8: #{xblock_forward.9} parent=0 // pred_region
    _
  $region9: #{xblock_forward.9} parent=0 // pred_fallthru
    _
  // Predicated region
  $region10: #{xblock_forward.9} parent=0 // pred_check
    _
  $region11: #{xblock_forward.9} parent=0 // pred_check_branch
    %16 = sbr.rel (0) target = $region13
  $region12: #{xblock_forward.9} parent=0 // pred_region
    _
  $region13: #{xblock_forward.9} parent=0 // pred_fallthru
    _
  // Predicated region
  $region14: #{xblock_forward.9} parent=0 // pred_check
    _
  $region15: #{xblock_forward.9} parent=0 // pred_check_branch
    %18 = sbr.rel (0) target = $region17
  $region16: #{xblock_forward.9} parent=0 // pred_region
    _
  $region17: #{xblock_forward.9} parent=0 // pred_fallthru
    _
  // Predicated region
  $region18: #{xblock_forward.9} parent=0 // pred_check
    _
  $region19: #{xblock_forward.9} parent=0 // pred_check_branch
    %20 = sbr.rel (0) target = $region21
  $region20: #{xblock_forward.9} parent=0 // pred_region
    _
  $region21: #{xblock_forward.9} parent=0 // pred_fallthru
    _
  // Predicated region
  $region22: #{xblock_forward.9} parent=0 // pred_check
    _
  $region23: #{xblock_forward.9} parent=0 // pred_check_branch
    %22 = sbr.rel (0) target = $region25
  $region24: #{xblock_forward.9} parent=0 // pred_region
    _
  $region25: #{xblock_forward.9} parent=0 // pred_fallthru
    _
  %v23 = vld [vmem:[%s0] sm:$0xf]
  %v24 = vld [vmem:[%s0 + $0x4] sm:$0xf]
  %v25 = vld [vmem:[%s0 + $0x8] sm:$0xf]
  %v26 = vld [vmem:[%s0 + $0xc] sm:$0xf]
  %v27 = vld [vmem:[%s0 + $0x10] sm:$0xf]
  %v28 = vld [vmem:[%s0 + $0x14] sm:$0xf]
  %v29 = vld [vmem:[%s0 + $0x18] sm:$0xf]
  %v30 = vld [vmem:[%s0 + $0x1c] sm:$0xf]
  %v31 = vld [vmem:[%s0 + $0x20] sm:$0xf]
  %v32 = vld [vmem:[%s0 + $0x24] sm:$0xf]
  %v33 = vld [vmem:[%s0 + $0x28] sm:$0xf]
  %v34 = vld [vmem:[%s0 + $0x2c] sm:$0xf]
  %v35 = vld [vmem:[%s0 + $0x30] sm:$0xf]
  %v36 = vld [vmem:[%s0 + $0x34] sm:$0xf]
  %v37 = vld [vmem:[%s0 + $0x38] sm:$0xf]
  %v38 = vld [vmem:[%s0 + $0x3c] sm:$0xf]
  %v39 = vunpack.c.l.bf16 %v23
  %v40 = vunpack.c.l.bf16 %v24
  %v41 = vunpack.c.l.bf16 %v25
  %v42 = vunpack.c.l.bf16 %v26
  %v43 = vunpack.c.l.bf16 %v27
  %v44 = vunpack.c.l.bf16 %v28
  %v45 = vunpack.c.l.bf16 %v29
  %v46 = vunpack.c.l.bf16 %v30
  %v47 = vunpack.c.l.bf16 %v31
  %v48 = vunpack.c.l.bf16 %v32
  %v49 = vunpack.c.l.bf16 %v33
  %v50 = vunpack.c.l.bf16 %v34
  %v51 = vunpack.c.l.bf16 %v35
  %v52 = vunpack.c.l.bf16 %v36
  %v53 = vunpack.c.l.bf16 %v37
  %v54 = vunpack.c.l.bf16 %v38
  %v55 = vld [vmem:[%s1] sm:$0x1]
  %v57 = vlaneseq
  %v58 = vshrl.u32 %v57, 7
  %v59 = vsub.s32 0, %v58
  %v60 = vrot.slane %v55, %v59
  %v62 = vmul.f32 %v39, %v60
  %v63 = vmul.f32 %v40, %v60
  %v64 = vmul.f32 %v41, %v60
  %v65 = vmul.f32 %v42, %v60
  %v66 = vmul.f32 %v43, %v60
  %v67 = vmul.f32 %v44, %v60
  %v68 = vmul.f32 %v45, %v60
  %v69 = vmul.f32 %v46, %v60
  %v70 = vmul.f32 %v47, %v60
  %v71 = vmul.f32 %v48, %v60
  %v72 = vmul.f32 %v49, %v60
  %v73 = vmul.f32 %v50, %v60
  %v74 = vmul.f32 %v51, %v60
  %v75 = vmul.f32 %v52, %v60
  %v76 = vmul.f32 %v53, %v60
  %v77 = vmul.f32 %v54, %v60
  %v78 = vld [vmem:[%s2] sm:$0x1]
  %v80 = vlaneseq
  %v81 = vshrl.u32 %v80, 7
  %v82 = vsub.s32 0, %v81
  %v83 = vrot.slane %v78, %v82
  %v85 = vadd.f32 %v62, %v83
  %v86 = vadd.f32 %v63, %v83
  %v87 = vadd.f32 %v64, %v83
  %v88 = vadd.f32 %v65, %v83
  %v89 = vadd.f32 %v66, %v83
  %v90 = vadd.f32 %v67, %v83
  %v91 = vadd.f32 %v68, %v83
  %v92 = vadd.f32 %v69, %v83
  %v93 = vadd.f32 %v70, %v83
  %v94 = vadd.f32 %v71, %v83
  %v95 = vadd.f32 %v72, %v83
  %v96 = vadd.f32 %v73, %v83
  %v97 = vadd.f32 %v74, %v83
  %v98 = vadd.f32 %v75, %v83
  %v99 = vadd.f32 %v76, %v83
  %v100 = vadd.f32 %v77, %v83
  %v101 = vld [vmem:[%s3] sm:$0xf]
  %v102 = vld [vmem:[%s3 + $0x4] sm:$0xf]
  %v103 = vld [vmem:[%s3 + $0x8] sm:$0xf]
  %v104 = vld [vmem:[%s3 + $0xc] sm:$0xf]
  %v105 = vld [vmem:[%s3 + $0x10] sm:$0xf]
  %v106 = vld [vmem:[%s3 + $0x14] sm:$0xf]
  %v107 = vld [vmem:[%s3 + $0x18] sm:$0xf]
  %v108 = vld [vmem:[%s3 + $0x1c] sm:$0xf]
  %v109 = vld [vmem:[%s3 + $0x20] sm:$0xf]
  %v110 = vld [vmem:[%s3 + $0x24] sm:$0xf]
  %v111 = vld [vmem:[%s3 + $0x28] sm:$0xf]
  %v112 = vld [vmem:[%s3 + $0x2c] sm:$0xf]
  %v113 = vld [vmem:[%s3 + $0x30] sm:$0xf]
  %v114 = vld [vmem:[%s3 + $0x34] sm:$0xf]
  %v115 = vld [vmem:[%s3 + $0x38] sm:$0xf]
  %v116 = vld [vmem:[%s3 + $0x3c] sm:$0xf]
  %v117 = vunpack.c.l.bf16 %v101
  %v118 = vunpack.c.l.bf16 %v102
  %v119 = vunpack.c.l.bf16 %v103
  %v120 = vunpack.c.l.bf16 %v104
  %v121 = vunpack.c.l.bf16 %v105
  %v122 = vunpack.c.l.bf16 %v106
  %v123 = vunpack.c.l.bf16 %v107
  %v124 = vunpack.c.l.bf16 %v108
  %v125 = vunpack.c.l.bf16 %v109
  %v126 = vunpack.c.l.bf16 %v110
  %v127 = vunpack.c.l.bf16 %v111
  %v128 = vunpack.c.l.bf16 %v112
  %v129 = vunpack.c.l.bf16 %v113
  %v130 = vunpack.c.l.bf16 %v114
  %v131 = vunpack.c.l.bf16 %v115
  %v132 = vunpack.c.l.bf16 %v116
  %v133 = vld [vmem:[%s4] sm:$0x1]
  %v135 = vlaneseq
  %v136 = vshrl.u32 %v135, 7
  %v137 = vsub.s32 0, %v136
  %v138 = vrot.slane %v133, %v137
  %v140 = vmul.f32 %v117, %v138
  %v141 = vmul.f32 %v118, %v138
  %v142 = vmul.f32 %v119, %v138
  %v143 = vmul.f32 %v120, %v138
  %v144 = vmul.f32 %v121, %v138
  %v145 = vmul.f32 %v122, %v138
  %v146 = vmul.f32 %v123, %v138
  %v147 = vmul.f32 %v124, %v138
  %v148 = vmul.f32 %v125, %v138
  %v149 = vmul.f32 %v126, %v138
  %v150 = vmul.f32 %v127, %v138
  %v151 = vmul.f32 %v128, %v138
  %v152 = vmul.f32 %v129, %v138
  %v153 = vmul.f32 %v130, %v138
  %v154 = vmul.f32 %v131, %v138
  %v155 = vmul.f32 %v132, %v138
  %v156 = vld [vmem:[%s5] sm:$0x1]
  %v158 = vlaneseq
  %v159 = vshrl.u32 %v158, 7
  %v160 = vsub.s32 0, %v159
  %v161 = vrot.slane %v156, %v160
  %v163 = vadd.f32 %v140, %v161
  %v164 = vadd.f32 %v141, %v161
  %v165 = vadd.f32 %v142, %v161
  %v166 = vadd.f32 %v143, %v161
  %v167 = vadd.f32 %v144, %v161
  %v168 = vadd.f32 %v145, %v161
  %v169 = vadd.f32 %v146, %v161
  %v170 = vadd.f32 %v147, %v161
  %v171 = vadd.f32 %v148, %v161
  %v172 = vadd.f32 %v149, %v161
  %v173 = vadd.f32 %v150, %v161
  %v174 = vadd.f32 %v151, %v161
  %v175 = vadd.f32 %v152, %v161
  %v176 = vadd.f32 %v153, %v161
  %v177 = vadd.f32 %v154, %v161
  %v178 = vadd.f32 %v155, %v161
  %v179 = vadd.f32 %v85, %v163
  %v180 = vadd.f32 %v86, %v164
  %v181 = vadd.f32 %v87, %v165
  %v182 = vadd.f32 %v88, %v166
  %v183 = vadd.f32 %v89, %v167
  %v184 = vadd.f32 %v90, %v168
  %v185 = vadd.f32 %v91, %v169
  %v186 = vadd.f32 %v92, %v170
  %v187 = vadd.f32 %v93, %v171
  %v188 = vadd.f32 %v94, %v172
  %v189 = vadd.f32 %v95, %v173
  %v190 = vadd.f32 %v96, %v174
  %v191 = vadd.f32 %v97, %v175
  %v192 = vadd.f32 %v98, %v176
  %v193 = vadd.f32 %v99, %v177
  %v194 = vadd.f32 %v100, %v178
  %v195 = vmax.f32 %v179, 0.0
  %v196 = vmax.f32 %v180, 0.0
  %v197 = vmax.f32 %v181, 0.0
  %v198 = vmax.f32 %v182, 0.0
  %v199 = vmax.f32 %v183, 0.0
  %v200 = vmax.f32 %v184, 0.0
  %v201 = vmax.f32 %v185, 0.0
  %v202 = vmax.f32 %v186, 0.0
  %v203 = vmax.f32 %v187, 0.0
  %v204 = vmax.f32 %v188, 0.0
  %v205 = vmax.f32 %v189, 0.0
  %v206 = vmax.f32 %v190, 0.0
  %v207 = vmax.f32 %v191, 0.0
  %v208 = vmax.f32 %v192, 0.0
  %v209 = vmax.f32 %v193, 0.0
  %v210 = vmax.f32 %v194, 0.0
  %vm211 = vcmask 64512
  %212 = vst.msk [vmem:[%s6] sm:$0xff] %vm211, %v195
  %213 = vst.msk [vmem:[%s6 + $0x8] sm:$0xff] %vm211, %v196
  %214 = vst.msk [vmem:[%s6 + $0x10] sm:$0xff] %vm211, %v197
  %215 = vst.msk [vmem:[%s6 + $0x18] sm:$0xff] %vm211, %v198
  %216 = vst.msk [vmem:[%s6 + $0x20] sm:$0xff] %vm211, %v199
  %217 = vst.msk [vmem:[%s6 + $0x28] sm:$0xff] %vm211, %v200
  %218 = vst.msk [vmem:[%s6 + $0x30] sm:$0xff] %vm211, %v201
  %219 = vst.msk [vmem:[%s6 + $0x38] sm:$0xff] %vm211, %v202
  %220 = vst.msk [vmem:[%s6 + $0x40] sm:$0xff] %vm211, %v203
  %221 = vst.msk [vmem:[%s6 + $0x48] sm:$0xff] %vm211, %v204
  %222 = vst.msk [vmem:[%s6 + $0x50] sm:$0xff] %vm211, %v205
  %223 = vst.msk [vmem:[%s6 + $0x58] sm:$0xff] %vm211, %v206
  %224 = vst.msk [vmem:[%s6 + $0x60] sm:$0xff] %vm211, %v207
  %225 = vst.msk [vmem:[%s6 + $0x68] sm:$0xff] %vm211, %v208
  %226 = vst.msk [vmem:[%s6 + $0x70] sm:$0xff] %vm211, %v209
  %227 = vst.msk [vmem:[%s6 + $0x78] sm:$0xff] %vm211, %v210
  // Predicated region
  $region26: #{xblock_forward.9} parent=0 // pred_check
    _
  $region27: #{xblock_forward.9} parent=0 // pred_check_branch
    %229 = sbr.rel (0) target = $region29
  $region28: #{xblock_forward.9} parent=0 // pred_region
    _
  $region29: #{xblock_forward.9} parent=0 // pred_fallthru
    _
  // Predicated region
  $region30: #{xblock_forward.9} parent=0 // pred_check
    _
  $region31: #{xblock_forward.9} parent=0 // pred_check_branch
    %231 = sbr.rel (0) target = $region33
  $region32: #{xblock_forward.9} parent=0 // pred_region
    _
  $region33: #{xblock_forward.9} parent=0 // pred_fallthru
    _

// kernel: xblock_forward.8
$region0: #{xblock_forward.8}
  #allocation0 [shape = 'u32[]', space=smem, size = 0x4, offset = 0x4, fixed_abs, tag = 'smem constant byte address 0x4 - core index']
  #allocation1 [shape = 'u32[144,128]{1,0:T(1,128)}', space=vmem, size = 0x12000, scoped, tag = 'internal scratch']
  %s0 = inlined_call_operand.vmem [shape: bf16[128,4], index: 0, kind: input, shape index: {}]
  %s1 = inlined_call_operand.vmem [shape: f32[1,4], index: 1, kind: input, shape index: {}]
  %s2 = inlined_call_operand.vmem [shape: f32[1,4], index: 2, kind: input, shape index: {}]
  %s3 = inlined_call_operand.vmem [shape: bf16[4,8], index: 3, kind: input, shape index: {}]
  %s4 = inlined_call_operand.vmem [shape: bf16[128,4], index: 4, kind: input, shape index: {}]
  %s5 = inlined_call_operand.vmem [shape: bf16[4,8], index: 5, kind: input, shape index: {}]
  %s6 = inlined_call_operand.vmem [shape: bf16[128,8], index: 6, kind: output, shape index: {0}]
  %s7 = inlined_call_operand.vmem [shape: bf16[128,8], index: 7, kind: output, shape index: {1}]
  %s8 = inlined_call_operand.vmem [shape: f32[1,2,8], index: 8, kind: output, shape index: {2}]
  %s9 = inlined_call_operand.vmem [shape: f32[1,2,8], index: 9, kind: output, shape index: {3}]
  %10 = xla_tuple %s6, %s7, %s8, %s9
  %s11 = sld [smem:[#allocation0]]
  $region58: #{xblock_forward.8} parent=0
    _
  %s13 = ssub.s32 1, %s11
  %s14 = scalar_select 0, %s13, %s11
  // Predicated region
  $region2: #{xblock_forward.8} parent=0 // pred_check
    _
  $region3: #{xblock_forward.8} parent=0 // pred_check_branch
    %16 = sbr.rel (0) target = $region5
  $region4: #{xblock_forward.8} parent=0 // pred_region
    _
  $region5: #{xblock_forward.8} parent=0 // pred_fallthru
    _
  // Predicated region
  $region6: #{xblock_forward.8} parent=0 // pred_check
    _
  $region7: #{xblock_forward.8} parent=0 // pred_check_branch
    %18 = sbr.rel (0) target = $region9
  $region8: #{xblock_forward.8} parent=0 // pred_region
    _
  $region9: #{xblock_forward.8} parent=0 // pred_fallthru
    _
  // Predicated region
  $region10: #{xblock_forward.8} parent=0 // pred_check
    _
  $region11: #{xblock_forward.8} parent=0 // pred_check_branch
    %20 = sbr.rel (0) target = $region13
  $region12: #{xblock_forward.8} parent=0 // pred_region
    _
  $region13: #{xblock_forward.8} parent=0 // pred_fallthru
    _
  // Predicated region
  $region14: #{xblock_forward.8} parent=0 // pred_check
    _
  $region15: #{xblock_forward.8} parent=0 // pred_check_branch
    %22 = sbr.rel (0) target = $region17
  $region16: #{xblock_forward.8} parent=0 // pred_region
    _
  $region17: #{xblock_forward.8} parent=0 // pred_fallthru
    _
  // Predicated region
  $region18: #{xblock_forward.8} parent=0 // pred_check
    _
  $region19: #{xblock_forward.8} parent=0 // pred_check_branch
    %24 = sbr.rel (0) target = $region21
  $region20: #{xblock_forward.8} parent=0 // pred_region
    _
  $region21: #{xblock_forward.8} parent=0 // pred_fallthru
    _
  // Predicated region
  $region22: #{xblock_forward.8} parent=0 // pred_check
    _
  $region23: #{xblock_forward.8} parent=0 // pred_check_branch
    %26 = sbr.rel (0) target = $region25
  $region24: #{xblock_forward.8} parent=0 // pred_region
    _
  $region25: #{xblock_forward.8} parent=0 // pred_fallthru
    _
  %v28 = vld [vmem:[%s0] sm:$0xf]
  %v29 = vld [vmem:[%s0 + $0x4] sm:$0xf]
  %v30 = vld [vmem:[%s0 + $0x8] sm:$0xf]
  %v31 = vld [vmem:[%s0 + $0xc] sm:$0xf]
  %v32 = vld [vmem:[%s0 + $0x10] sm:$0xf]
  %v33 = vld [vmem:[%s0 + $0x14] sm:$0xf]
  %v34 = vld [vmem:[%s0 + $0x18] sm:$0xf]
  %v35 = vld [vmem:[%s0 + $0x1c] sm:$0xf]
  %v36 = vld [vmem:[%s0 + $0x20] sm:$0xf]
  %v37 = vld [vmem:[%s0 + $0x24] sm:$0xf]
  %v38 = vld [vmem:[%s0 + $0x28] sm:$0xf]
  %v39 = vld [vmem:[%s0 + $0x2c] sm:$0xf]
  %v40 = vld [vmem:[%s0 + $0x30] sm:$0xf]
  %v41 = vld [vmem:[%s0 + $0x34] sm:$0xf]
  %v42 = vld [vmem:[%s0 + $0x38] sm:$0xf]
  %v43 = vld [vmem:[%s0 + $0x3c] sm:$0xf]
  %v44 = vunpack.c.l.bf16 %v28
  %v45 = vunpack.c.l.bf16 %v29
  %v46 = vunpack.c.l.bf16 %v30
  %v47 = vunpack.c.l.bf16 %v31
  %v48 = vunpack.c.l.bf16 %v32
  %v49 = vunpack.c.l.bf16 %v33
  %v50 = vunpack.c.l.bf16 %v34
  %v51 = vunpack.c.l.bf16 %v35
  %v52 = vunpack.c.l.bf16 %v36
  %v53 = vunpack.c.l.bf16 %v37
  %v54 = vunpack.c.l.bf16 %v38
  %v55 = vunpack.c.l.bf16 %v39
  %v56 = vunpack.c.l.bf16 %v40
  %v57 = vunpack.c.l.bf16 %v41
  %v58 = vunpack.c.l.bf16 %v42
  %v59 = vunpack.c.l.bf16 %v43
  %v60 = vld [vmem:[%s1] sm:$0x1]
  %v62 = vlaneseq
  %v63 = vshrl.u32 %v62, 7
  %v64 = vsub.s32 0, %v63
  %v65 = vrot.slane %v60, %v64
  %v67 = vmul.f32 %v44, %v65
  %v68 = vmul.f32 %v45, %v65
  %v69 = vmul.f32 %v46, %v65
  %v70 = vmul.f32 %v47, %v65
  %v71 = vmul.f32 %v48, %v65
  %v72 = vmul.f32 %v49, %v65
  %v73 = vmul.f32 %v50, %v65
  %v74 = vmul.f32 %v51, %v65
  %v75 = vmul.f32 %v52, %v65
  %v76 = vmul.f32 %v53, %v65
  %v77 = vmul.f32 %v54, %v65
  %v78 = vmul.f32 %v55, %v65
  %v79 = vmul.f32 %v56, %v65
  %v80 = vmul.f32 %v57, %v65
  %v81 = vmul.f32 %v58, %v65
  %v82 = vmul.f32 %v59, %v65
  %v83 = vld [vmem:[%s2] sm:$0x1]
  %v85 = vlaneseq
  %v86 = vshrl.u32 %v85, 7
  %v87 = vsub.s32 0, %v86
  %v88 = vrot.slane %v83, %v87
  %v90 = vadd.f32 %v67, %v88
  %v91 = vadd.f32 %v68, %v88
  %v92 = vadd.f32 %v69, %v88
  %v93 = vadd.f32 %v70, %v88
  %v94 = vadd.f32 %v71, %v88
  %v95 = vadd.f32 %v72, %v88
  %v96 = vadd.f32 %v73, %v88
  %v97 = vadd.f32 %v74, %v88
  %v98 = vadd.f32 %v75, %v88
  %v99 = vadd.f32 %v76, %v88
  %v100 = vadd.f32 %v77, %v88
  %v101 = vadd.f32 %v78, %v88
  %v102 = vadd.f32 %v79, %v88
  %v103 = vadd.f32 %v80, %v88
  %v104 = vadd.f32 %v81, %v88
  %v105 = vadd.f32 %v82, %v88
  %v106 = vmax.f32 %v90, 0.0
  %v107 = vmax.f32 %v91, 0.0
  %v108 = vmax.f32 %v92, 0.0
  %v109 = vmax.f32 %v93, 0.0
  %v110 = vmax.f32 %v94, 0.0
  %v111 = vmax.f32 %v95, 0.0
  %v112 = vmax.f32 %v96, 0.0
  %v113 = vmax.f32 %v97, 0.0
  %v114 = vmax.f32 %v98, 0.0
  %v115 = vmax.f32 %v99, 0.0
  %v116 = vmax.f32 %v100, 0.0
  %v117 = vmax.f32 %v101, 0.0
  %v118 = vmax.f32 %v102, 0.0
  %v119 = vmax.f32 %v103, 0.0
  %v120 = vmax.f32 %v104, 0.0
  %v121 = vmax.f32 %v105, 0.0
  %v122 = vpack.c.bf16 %v107, %v106
  %v123 = vpack.c.bf16 %v109, %v108
  %v124 = vpack.c.bf16 %v111, %v110
  %v125 = vpack.c.bf16 %v113, %v112
  %v126 = vpack.c.bf16 %v115, %v114
  %v127 = vpack.c.bf16 %v117, %v116
  %v128 = vpack.c.bf16 %v119, %v118
  %v129 = vpack.c.bf16 %v121, %v120
  %v130 = vld [vmem:[%s3] sm:$0x3]
  %vm131 = vcmask 31744
  %v133 = vsel %vm131, %v122, 0
  %v136 = vsel %vm131, %v123, 0
  %v139 = vsel %vm131, %v124, 0
  %v142 = vsel %vm131, %v125, 0
  %v145 = vsel %vm131, %v126, 0
  %v148 = vsel %vm131, %v127, 0
  %v151 = vsel %vm131, %v128, 0
  %v154 = vsel %vm131, %v129, 0
  %vm156 = vcmask 1041408
  %v158 = vsel %vm156, %v130, 0
  %160 = vmatprep.subr.bf16.mxu0 0
  %161 = vmatpush1.bf16.msra.mxu0 0
  %162 = vmatprep.subr.bf16.mxu0 0
  %163 = vmatpush1.bf16.msra.mxu0 0
  %164 = vmatprep.subr.bf16.mxu0 0
  %165 = vmatpush1.bf16.msra.mxu0 0
  %166 = vmatprep.subr.bf16.mxu0 0
  %167 = vmatpush1.bf16.msra.mxu0 0
  %168 = vmatprep.subr.bf16.mxu0 0
  %169 = vmatpush1.bf16.msra.mxu0 0
  %170 = vmatprep.subr.bf16.mxu0 0
  %171 = vmatpush1.bf16.msra.mxu0 0
  %172 = vmatprep.subr.bf16.mxu0 0
  %173 = vmatpush1.bf16.msra.mxu0 0
  %174 = vmatprep.subr.bf16.mxu0 0
  %175 = vmatpush1.bf16.msra.mxu0 %v158
  %176 = vmatprep.subr.bf16.mxu0 0
  %177 = vmatpush2.bf16.msra.mxu0 0
  %178 = vmatprep.subr.bf16.mxu0 0
  %179 = vmatpush2.bf16.msra.mxu0 0
  %180 = vmatprep.subr.bf16.mxu0 0
  %181 = vmatpush2.bf16.msra.mxu0 0
  %182 = vmatprep.subr.bf16.mxu0 0
  %183 = vmatpush2.bf16.msra.mxu0 0
  %184 = vmatprep.subr.bf16.mxu0 0
  %185 = vmatpush2.bf16.msra.mxu0 0
  %186 = vmatprep.subr.bf16.mxu0 0
  %187 = vmatpush2.bf16.msra.mxu0 0
  %188 = vmatprep.subr.bf16.mxu0 0
  %189 = vmatpush2.bf16.msra.mxu0 0
  %190 = vmatprep.subr.bf16.mxu0 0
  %191 = vmatpush2.bf16.msra.mxu0 0
  %192 = vmatprep.mubr.bf16.mxu0 0
  %193 = vmatmul.mubr.bf16.gmra.mxu0 %v133
  %v194 = vpop.f32.mrf.mxu0
  %v195 = vadd.f32 0.0, %v194
  %v196 = vpop.f32.mrf.mxu0
  %v197 = vpop.f32.mrf.mxu0
  %v198 = vadd.f32 0.0, %v197
  %v199 = vpop.f32.mrf.mxu0
  %200 = vmatprep.mubr.bf16.mxu0 0
  %201 = vmatmul.mubr.bf16.gmra.mxu0 %v136
  %v202 = vpop.f32.mrf.mxu0
  %v203 = vadd.f32 0.0, %v202
  %v204 = vpop.f32.mrf.mxu0
  %v205 = vpop.f32.mrf.mxu0
  %v206 = vadd.f32 0.0, %v205
  %v207 = vpop.f32.mrf.mxu0
  %208 = vmatprep.mubr.bf16.mxu0 0
  %209 = vmatmul.mubr.bf16.gmra.mxu0 %v139
  %v210 = vpop.f32.mrf.mxu0
  %v211 = vadd.f32 0.0, %v210
  %v212 = vpop.f32.mrf.mxu0
  %v213 = vpop.f32.mrf.mxu0
  %v214 = vadd.f32 0.0, %v213
  %v215 = vpop.f32.mrf.mxu0
  %216 = vmatprep.mubr.bf16.mxu0 0
  %217 = vmatmul.mubr.bf16.gmra.mxu0 %v142
  %v218 = vpop.f32.mrf.mxu0
  %v219 = vadd.f32 0.0, %v218
  %v220 = vpop.f32.mrf.mxu0
  %v221 = vpop.f32.mrf.mxu0
  %v222 = vadd.f32 0.0, %v221
  %v223 = vpop.f32.mrf.mxu0
  %224 = vmatprep.mubr.bf16.mxu0 0
  %225 = vmatmul.mubr.bf16.gmra.mxu0 %v145
  %v226 = vpop.f32.mrf.mxu0
  %v227 = vadd.f32 0.0, %v226
  %v228 = vpop.f32.mrf.mxu0
  %v229 = vpop.f32.mrf.mxu0
  %v230 = vadd.f32 0.0, %v229
  %v231 = vpop.f32.mrf.mxu0
  %232 = vmatprep.mubr.bf16.mxu0 0
  %233 = vmatmul.mubr.bf16.gmra.mxu0 %v148
  %v234 = vpop.f32.mrf.mxu0
  %v235 = vadd.f32 0.0, %v234
  %v236 = vpop.f32.mrf.mxu0
  %v237 = vpop.f32.mrf.mxu0
  %v238 = vadd.f32 0.0, %v237
  %v239 = vpop.f32.mrf.mxu0
  %240 = vmatprep.mubr.bf16.mxu0 0
  %241 = vmatmul.mubr.bf16.gmra.mxu0 %v151
  %v242 = vpop.f32.mrf.mxu0
  %v243 = vadd.f32 0.0, %v242
  %v244 = vpop.f32.mrf.mxu0
  %v245 = vpop.f32.mrf.mxu0
  %v246 = vadd.f32 0.0, %v245
  %v247 = vpop.f32.mrf.mxu0
  %248 = vmatprep.mubr.bf16.mxu0 0
  %249 = vmatmul.mubr.bf16.gmra.mxu0 %v154
  %v250 = vpop.f32.mrf.mxu0
  %v251 = vadd.f32 0.0, %v250
  %v252 = vpop.f32.mrf.mxu0
  %v253 = vpop.f32.mrf.mxu0
  %v254 = vadd.f32 0.0, %v253
  %v255 = vpop.f32.mrf.mxu0
  %256 = vdwg.mxu0
  %v257 = vpack.c.bf16 %v198, %v195
  %v258 = vpack.c.bf16 %v206, %v203
  %v259 = vpack.c.bf16 %v214, %v211
  %v260 = vpack.c.bf16 %v222, %v219
  %v261 = vpack.c.bf16 %v230, %v227
  %v262 = vpack.c.bf16 %v238, %v235
  %v263 = vpack.c.bf16 %v246, %v243
  %v264 = vpack.c.bf16 %v254, %v251
  %v273 = vunpack.c.l.b16 %v257
  %v274 = vunpack.c.h.b16 %v257
  %v275 = vunpack.c.l.b16 %v258
  %v276 = vunpack.c.h.b16 %v258
  %v277 = vunpack.c.l.b16 %v259
  %v278 = vunpack.c.h.b16 %v259
  %v279 = vunpack.c.l.b16 %v260
  %v280 = vunpack.c.h.b16 %v260
  %v281 = vunpack.c.l.b16 %v261
  %v282 = vunpack.c.h.b16 %v261
  %v283 = vunpack.c.l.b16 %v262
  %v284 = vunpack.c.h.b16 %v262
  %v285 = vunpack.c.l.b16 %v263
  %v286 = vunpack.c.h.b16 %v263
  %v287 = vunpack.c.l.b16 %v264
  %v288 = vunpack.c.h.b16 %v264
  %v289 = vpack.c.b16 %v273, %v273
  %v290 = vpack.c.b16 %v274, %v274
  %v291 = vpack.c.b16 %v275, %v275
  %v292 = vpack.c.b16 %v276, %v276
  %v293 = vpack.c.b16 %v277, %v277
  %v294 = vpack.c.b16 %v278, %v278
  %v295 = vpack.c.b16 %v279, %v279
  %v296 = vpack.c.b16 %v280, %v280
  %v297 = vpack.c.b16 %v281, %v281
  %v298 = vpack.c.b16 %v282, %v282
  %v299 = vpack.c.b16 %v283, %v283
  %v300 = vpack.c.b16 %v284, %v284
  %v301 = vpack.c.b16 %v285, %v285
  %v302 = vpack.c.b16 %v286, %v286
  %v303 = vpack.c.b16 %v287, %v287
  %v304 = vpack.c.b16 %v288, %v288
  %vm321 = vcmask 60416
  %322 = vst.msk [vmem:[%s6] sm:$0xf] %vm321, %v289
  %323 = vst.msk [vmem:[%s6 + $0x4] sm:$0xf] %vm321, %v290
  %324 = vst.msk [vmem:[%s6 + $0x8] sm:$0xf] %vm321, %v291
  %325 = vst.msk [vmem:[%s6 + $0xc] sm:$0xf] %vm321, %v292
  %326 = vst.msk [vmem:[%s6 + $0x10] sm:$0xf] %vm321, %v293
  %327 = vst.msk [vmem:[%s6 + $0x14] sm:$0xf] %vm321, %v294
  %328 = vst.msk [vmem:[%s6 + $0x18] sm:$0xf] %vm321, %v295
  %329 = vst.msk [vmem:[%s6 + $0x1c] sm:$0xf] %vm321, %v296
  %330 = vst.msk [vmem:[%s6 + $0x20] sm:$0xf] %vm321, %v297
  %331 = vst.msk [vmem:[%s6 + $0x24] sm:$0xf] %vm321, %v298
  %332 = vst.msk [vmem:[%s6 + $0x28] sm:$0xf] %vm321, %v299
  %333 = vst.msk [vmem:[%s6 + $0x2c] sm:$0xf] %vm321, %v300
  %334 = vst.msk [vmem:[%s6 + $0x30] sm:$0xf] %vm321, %v301
  %335 = vst.msk [vmem:[%s6 + $0x34] sm:$0xf] %vm321, %v302
  %336 = vst.msk [vmem:[%s6 + $0x38] sm:$0xf] %vm321, %v303
  %337 = vst.msk [vmem:[%s6 + $0x3c] sm:$0xf] %vm321, %v304
  %v338 = vunpack.c.l.bf16 %v257
  %v339 = vunpack.c.h.bf16 %v257
  %v340 = vunpack.c.l.bf16 %v258
  %v341 = vunpack.c.h.bf16 %v258
  %v342 = vunpack.c.l.bf16 %v259
  %v343 = vunpack.c.h.bf16 %v259
  %v344 = vunpack.c.l.bf16 %v260
  %v345 = vunpack.c.h.bf16 %v260
  %v346 = vunpack.c.l.bf16 %v261
  %v347 = vunpack.c.h.bf16 %v261
  %v348 = vunpack.c.l.bf16 %v262
  %v349 = vunpack.c.h.bf16 %v262
  %v350 = vunpack.c.l.bf16 %v263
  %v351 = vunpack.c.h.bf16 %v263
  %v352 = vunpack.c.l.bf16 %v264
  %v353 = vunpack.c.h.bf16 %v264
  %vm354 = vcmask 64512
  %v355 = vsel %vm354, %v338, 0.0
  %v356 = vsel %vm354, %v339, 0.0
  %v357 = vadd.f32 %v355, %v356
  %v358 = vsel %vm354, %v340, 0.0
  %v359 = vadd.f32 %v357, %v358
  %v360 = vsel %vm354, %v341, 0.0
  %v361 = vadd.f32 %v359, %v360
  %v362 = vsel %vm354, %v342, 0.0
  %v363 = vadd.f32 %v361, %v362
  %v364 = vsel %vm354, %v343, 0.0
  %v365 = vadd.f32 %v363, %v364
  %v366 = vsel %vm354, %v344, 0.0
  %v367 = vadd.f32 %v365, %v366
  %v368 = vsel %vm354, %v345, 0.0
  %v369 = vadd.f32 %v367, %v368
  %v370 = vsel %vm354, %v346, 0.0
  %v371 = vadd.f32 %v369, %v370
  %v372 = vsel %vm354, %v347, 0.0
  %v373 = vadd.f32 %v371, %v372
  %v374 = vsel %vm354, %v348, 0.0
  %v375 = vadd.f32 %v373, %v374
  %v376 = vsel %vm354, %v349, 0.0
  %v377 = vadd.f32 %v375, %v376
  %v378 = vsel %vm354, %v350, 0.0
  %v379 = vadd.f32 %v377, %v378
  %v380 = vsel %vm354, %v351, 0.0
  %v381 = vadd.f32 %v379, %v380
  %v382 = vsel %vm354, %v352, 0.0
  %v383 = vadd.f32 %v381, %v382
  %v384 = vsel %vm354, %v353, 0.0
  %v385 = vadd.f32 %v383, %v384
  %v386 = vrot.slane %v385, 4
  %v387 = vadd.f32 %v385, %v386
  %v388 = vrot.slane %v387, 2
  %v389 = vadd.f32 %v387, %v388
  %v390 = vrot.slane %v389, 1
  %v391 = vadd.f32 %v389, %v390
  %v392 = vmul.f32 %v338, %v338
  %v393 = vmul.f32 %v339, %v339
  %v394 = vmul.f32 %v340, %v340
  %v395 = vmul.f32 %v341, %v341
  %v396 = vmul.f32 %v342, %v342
  %v397 = vmul.f32 %v343, %v343
  %v398 = vmul.f32 %v344, %v344
  %v399 = vmul.f32 %v345, %v345
  %v400 = vmul.f32 %v346, %v346
  %v401 = vmul.f32 %v347, %v347
  %v402 = vmul.f32 %v348, %v348
  %v403 = vmul.f32 %v349, %v349
  %v404 = vmul.f32 %v350, %v350
  %v405 = vmul.f32 %v351, %v351
  %v406 = vmul.f32 %v352, %v352
  %v407 = vmul.f32 %v353, %v353
  %v408 = vsel %vm354, %v392, 0.0
  %v409 = vsel %vm354, %v393, 0.0
  %v410 = vadd.f32 %v408, %v409
  %v411 = vsel %vm354, %v394, 0.0
  %v412 = vadd.f32 %v410, %v411
  %v413 = vsel %vm354, %v395, 0.0
  %v414 = vadd.f32 %v412, %v413
  %v415 = vsel %vm354, %v396, 0.0
  %v416 = vadd.f32 %v414, %v415
  %v417 = vsel %vm354, %v397, 0.0
  %v418 = vadd.f32 %v416, %v417
  %v419 = vsel %vm354, %v398, 0.0
  %v420 = vadd.f32 %v418, %v419
  %v421 = vsel %vm354, %v399, 0.0
  %v422 = vadd.f32 %v420, %v421
  %v423 = vsel %vm354, %v400, 0.0
  %v424 = vadd.f32 %v422, %v423
  %v425 = vsel %vm354, %v401, 0.0
  %v426 = vadd.f32 %v424, %v425
  %v427 = vsel %vm354, %v402, 0.0
  %v428 = vadd.f32 %v426, %v427
  %v429 = vsel %vm354, %v403, 0.0
  %v430 = vadd.f32 %v428, %v429
  %v431 = vsel %vm354, %v404, 0.0
  %v432 = vadd.f32 %v430, %v431
  %v433 = vsel %vm354, %v405, 0.0
  %v434 = vadd.f32 %v432, %v433
  %v435 = vsel %vm354, %v406, 0.0
  %v436 = vadd.f32 %v434, %v435
  %v437 = vsel %vm354, %v407, 0.0
  %v438 = vadd.f32 %v436, %v437
  %v439 = vrot.slane %v438, 4
  %v440 = vadd.f32 %v438, %v439
  %v441 = vrot.slane %v440, 2
  %v442 = vadd.f32 %v440, %v441
  %v443 = vrot.slane %v442, 1
  %v444 = vadd.f32 %v442, %v443
  %vm445 = vcmask 1040384
  %v446 = vsel %vm445, %v391, %v444
  %vm447 = vcmask 58368
  %448 = vst.msk [vmem:[%s8] sm:$0x3] %vm447, %v446
  %v449 = vld [vmem:[%s4] sm:$0xf]
  %v450 = vld [vmem:[%s4 + $0x4] sm:$0xf]
  %v451 = vld [vmem:[%s4 + $0x8] sm:$0xf]
  %v452 = vld [vmem:[%s4 + $0xc] sm:$0xf]
  %v453 = vld [vmem:[%s4 + $0x10] sm:$0xf]
  %v454 = vld [vmem:[%s4 + $0x14] sm:$0xf]
  %v455 = vld [vmem:[%s4 + $0x18] sm:$0xf]
  %v456 = vld [vmem:[%s4 + $0x1c] sm:$0xf]
  %v457 = vld [vmem:[%s4 + $0x20] sm:$0xf]
  %v458 = vld [vmem:[%s4 + $0x24] sm:$0xf]
  %v459 = vld [vmem:[%s4 + $0x28] sm:$0xf]
  %v460 = vld [vmem:[%s4 + $0x2c] sm:$0xf]
  %v461 = vld [vmem:[%s4 + $0x30] sm:$0xf]
  %v462 = vld [vmem:[%s4 + $0x34] sm:$0xf]
  %v463 = vld [vmem:[%s4 + $0x38] sm:$0xf]
  %v464 = vld [vmem:[%s4 + $0x3c] sm:$0xf]
  %v465 = vld [vmem:[%s5] sm:$0x3]
  %v482 = vunpack.c.l.b16 %v449
  %v483 = vunpack.c.l.b16 %v450
  %v484 = vunpack.c.l.b16 %v451
  %v485 = vunpack.c.l.b16 %v452
  %v486 = vunpack.c.l.b16 %v453
  %v487 = vunpack.c.l.b16 %v454
  %v488 = vunpack.c.l.b16 %v455
  %v489 = vunpack.c.l.b16 %v456
  %v490 = vunpack.c.l.b16 %v457
  %v491 = vunpack.c.l.b16 %v458
  %v492 = vunpack.c.l.b16 %v459
  %v493 = vunpack.c.l.b16 %v460
  %v494 = vunpack.c.l.b16 %v461
  %v495 = vunpack.c.l.b16 %v462
  %v496 = vunpack.c.l.b16 %v463
  %v497 = vunpack.c.l.b16 %v464
  %v498 = vpack.c.b16 %v483, %v482
  %v499 = vpack.c.b16 %v485, %v484
  %v500 = vpack.c.b16 %v487, %v486
  %v501 = vpack.c.b16 %v489, %v488
  %v502 = vpack.c.b16 %v491, %v490
  %v503 = vpack.c.b16 %v493, %v492
  %v504 = vpack.c.b16 %v495, %v494
  %v505 = vpack.c.b16 %v497, %v496
  %v507 = vsel %vm131, %v498, 0
  %v510 = vsel %vm131, %v499, 0
  %v513 = vsel %vm131, %v500, 0
  %v516 = vsel %vm131, %v501, 0
  %v519 = vsel %vm131, %v502, 0
  %v522 = vsel %vm131, %v503, 0
  %v525 = vsel %vm131, %v504, 0
  %v528 = vsel %vm131, %v505, 0
  %v531 = vsel %vm156, %v465, 0
  %533 = vmatprep.subr.bf16.mxu0 0
  %534 = vmatpush1.bf16.msra.mxu0 0
  %535 = vmatprep.subr.bf16.mxu0 0
  %536 = vmatpush1.bf16.msra.mxu0 0
  %537 = vmatprep.subr.bf16.mxu0 0
  %538 = vmatpush1.bf16.msra.mxu0 0
  %539 = vmatprep.subr.bf16.mxu0 0
  %540 = vmatpush1.bf16.msra.mxu0 0
  %541 = vmatprep.subr.bf16.mxu0 0
  %542 = vmatpush1.bf16.msra.mxu0 0
  %543 = vmatprep.subr.bf16.mxu0 0
  %544 = vmatpush1.bf16.msra.mxu0 0
  %545 = vmatprep.subr.bf16.mxu0 0
  %546 = vmatpush1.bf16.msra.mxu0 0
  %547 = vmatprep.subr.bf16.mxu0 0
  %548 = vmatpush1.bf16.msra.mxu0 %v531
  %549 = vmatprep.subr.bf16.mxu0 0
  %550 = vmatpush2.bf16.msra.mxu0 0
  %551 = vmatprep.subr.bf16.mxu0 0
  %552 = vmatpush2.bf16.msra.mxu0 0
  %553 = vmatprep.subr.bf16.mxu0 0
  %554 = vmatpush2.bf16.msra.mxu0 0
  %555 = vmatprep.subr.bf16.mxu0 0
  %556 = vmatpush2.bf16.msra.mxu0 0
  %557 = vmatprep.subr.bf16.mxu0 0
  %558 = vmatpush2.bf16.msra.mxu0 0
  %559 = vmatprep.subr.bf16.mxu0 0
  %560 = vmatpush2.bf16.msra.mxu0 0
  %561 = vmatprep.subr.bf16.mxu0 0
  %562 = vmatpush2.bf16.msra.mxu0 0
  %563 = vmatprep.subr.bf16.mxu0 0
  %564 = vmatpush2.bf16.msra.mxu0 0
  %565 = vmatprep.mubr.bf16.mxu0 0
  %566 = vmatmul.mubr.bf16.gmra.mxu0 %v507
  %v567 = vpop.f32.mrf.mxu0
  %v568 = vadd.f32 0.0, %v567
  %v569 = vpop.f32.mrf.mxu0
  %v570 = vpop.f32.mrf.mxu0
  %v571 = vadd.f32 0.0, %v570
  %v572 = vpop.f32.mrf.mxu0
  %573 = vmatprep.mubr.bf16.mxu0 0
  %574 = vmatmul.mubr.bf16.gmra.mxu0 %v510
  %v575 = vpop.f32.mrf.mxu0
  %v576 = vadd.f32 0.0, %v575
  %v577 = vpop.f32.mrf.mxu0
  %v578 = vpop.f32.mrf.mxu0
  %v579 = vadd.f32 0.0, %v578
  %v580 = vpop.f32.mrf.mxu0
  %581 = vmatprep.mubr.bf16.mxu0 0
  %582 = vmatmul.mubr.bf16.gmra.mxu0 %v513
  %v583 = vpop.f32.mrf.mxu0
  %v584 = vadd.f32 0.0, %v583
  %v585 = vpop.f32.mrf.mxu0
  %v586 = vpop.f32.mrf.mxu0
  %v587 = vadd.f32 0.0, %v586
  %v588 = vpop.f32.mrf.mxu0
  %589 = vmatprep.mubr.bf16.mxu0 0
  %590 = vmatmul.mubr.bf16.gmra.mxu0 %v516
  %v591 = vpop.f32.mrf.mxu0
  %v592 = vadd.f32 0.0, %v591
  %v593 = vpop.f32.mrf.mxu0
  %v594 = vpop.f32.mrf.mxu0
  %v595 = vadd.f32 0.0, %v594
  %v596 = vpop.f32.mrf.mxu0
  %597 = vmatprep.mubr.bf16.mxu0 0
  %598 = vmatmul.mubr.bf16.gmra.mxu0 %v519
  %v599 = vpop.f32.mrf.mxu0
  %v600 = vadd.f32 0.0, %v599
  %v601 = vpop.f32.mrf.mxu0
  %v602 = vpop.f32.mrf.mxu0
  %v603 = vadd.f32 0.0, %v602
  %v604 = vpop.f32.mrf.mxu0
  %605 = vmatprep.mubr.bf16.mxu0 0
  %606 = vmatmul.mubr.bf16.gmra.mxu0 %v522
  %v607 = vpop.f32.mrf.mxu0
  %v608 = vadd.f32 0.0, %v607
  %v609 = vpop.f32.mrf.mxu0
  %v610 = vpop.f32.mrf.mxu0
  %v611 = vadd.f32 0.0, %v610
  %v612 = vpop.f32.mrf.mxu0
  %613 = vmatprep.mubr.bf16.mxu0 0
  %614 = vmatmul.mubr.bf16.gmra.mxu0 %v525
  %v615 = vpop.f32.mrf.mxu0
  %v616 = vadd.f32 0.0, %v615
  %v617 = vpop.f32.mrf.mxu0
  %v618 = vpop.f32.mrf.mxu0
  %v619 = vadd.f32 0.0, %v618
  %v620 = vpop.f32.mrf.mxu0
  %621 = vmatprep.mubr.bf16.mxu0 0
  %622 = vmatmul.mubr.bf16.gmra.mxu0 %v528
  %v623 = vpop.f32.mrf.mxu0
  %v624 = vadd.f32 0.0, %v623
  %v625 = vpop.f32.mrf.mxu0
  %v626 = vpop.f32.mrf.mxu0
  %v627 = vadd.f32 0.0, %v626
  %v628 = vpop.f32.mrf.mxu0
  %629 = vdwg.mxu0
  %v630 = vpack.c.bf16 %v571, %v568
  %v631 = vpack.c.bf16 %v579, %v576
  %v632 = vpack.c.bf16 %v587, %v584
  %v633 = vpack.c.bf16 %v595, %v592
  %v634 = vpack.c.bf16 %v603, %v600
  %v635 = vpack.c.bf16 %v611, %v608
  %v636 = vpack.c.bf16 %v619, %v616
  %v637 = vpack.c.bf16 %v627, %v624
  %v646 = vunpack.c.l.b16 %v630
  %v647 = vunpack.c.h.b16 %v630
  %v648 = vunpack.c.l.b16 %v631
  %v649 = vunpack.c.h.b16 %v631
  %v650 = vunpack.c.l.b16 %v632
  %v651 = vunpack.c.h.b16 %v632
  %v652 = vunpack.c.l.b16 %v633
  %v653 = vunpack.c.h.b16 %v633
  %v654 = vunpack.c.l.b16 %v634
  %v655 = vunpack.c.h.b16 %v634
  %v656 = vunpack.c.l.b16 %v635
  %v657 = vunpack.c.h.b16 %v635
  %v658 = vunpack.c.l.b16 %v636
  %v659 = vunpack.c.h.b16 %v636
  %v660 = vunpack.c.l.b16 %v637
  %v661 = vunpack.c.h.b16 %v637
  %v662 = vpack.c.b16 %v646, %v646
  %v663 = vpack.c.b16 %v647, %v647
  %v664 = vpack.c.b16 %v648, %v648
  %v665 = vpack.c.b16 %v649, %v649
  %v666 = vpack.c.b16 %v650, %v650
  %v667 = vpack.c.b16 %v651, %v651
  %v668 = vpack.c.b16 %v652, %v652
  %v669 = vpack.c.b16 %v653, %v653
  %v670 = vpack.c.b16 %v654, %v654
  %v671 = vpack.c.b16 %v655, %v655
  %v672 = vpack.c.b16 %v656, %v656
  %v673 = vpack.c.b16 %v657, %v657
  %v674 = vpack.c.b16 %v658, %v658
  %v675 = vpack.c.b16 %v659, %v659
  %v676 = vpack.c.b16 %v660, %v660
  %v677 = vpack.c.b16 %v661, %v661
  %694 = vst.msk [vmem:[%s7] sm:$0xf] %vm321, %v662
  %695 = vst.msk [vmem:[%s7 + $0x4] sm:$0xf] %vm321, %v663
  %696 = vst.msk [vmem:[%s7 + $0x8] sm:$0xf] %vm321, %v664
  %697 = vst.msk [vmem:[%s7 + $0xc] sm:$0xf] %vm321, %v665
  %698 = vst.msk [vmem:[%s7 + $0x10] sm:$0xf] %vm321, %v666
  %699 = vst.msk [vmem:[%s7 + $0x14] sm:$0xf] %vm321, %v667
  %700 = vst.msk [vmem:[%s7 + $0x18] sm:$0xf] %vm321, %v668
  %701 = vst.msk [vmem:[%s7 + $0x1c] sm:$0xf] %vm321, %v669
  %702 = vst.msk [vmem:[%s7 + $0x20] sm:$0xf] %vm321, %v670
  %703 = vst.msk [vmem:[%s7 + $0x24] sm:$0xf] %vm321, %v671
  %704 = vst.msk [vmem:[%s7 + $0x28] sm:$0xf] %vm321, %v672
  %705 = vst.msk [vmem:[%s7 + $0x2c] sm:$0xf] %vm321, %v673
  %706 = vst.msk [vmem:[%s7 + $0x30] sm:$0xf] %vm321, %v674
  %707 = vst.msk [vmem:[%s7 + $0x34] sm:$0xf] %vm321, %v675
  %708 = vst.msk [vmem:[%s7 + $0x38] sm:$0xf] %vm321, %v676
  %709 = vst.msk [vmem:[%s7 + $0x3c] sm:$0xf] %vm321, %v677
  %v710 = vunpack.c.l.bf16 %v630
  %v711 = vunpack.c.h.bf16 %v630
  %v712 = vunpack.c.l.bf16 %v631
  %v713 = vunpack.c.h.bf16 %v631
  %v714 = vunpack.c.l.bf16 %v632
  %v715 = vunpack.c.h.bf16 %v632
  %v716 = vunpack.c.l.bf16 %v633
  %v717 = vunpack.c.h.bf16 %v633
  %v718 = vunpack.c.l.bf16 %v634
  %v719 = vunpack.c.h.bf16 %v634
  %v720 = vunpack.c.l.bf16 %v635
  %v721 = vunpack.c.h.bf16 %v635
  %v722 = vunpack.c.l.bf16 %v636
  %v723 = vunpack.c.h.bf16 %v636
  %v724 = vunpack.c.l.bf16 %v637
  %v725 = vunpack.c.h.bf16 %v637
  %v726 = vsel %vm354, %v710, 0.0
  %v727 = vsel %vm354, %v711, 0.0
  %v728 = vadd.f32 %v726, %v727
  %v729 = vsel %vm354, %v712, 0.0
  %v730 = vadd.f32 %v728, %v729
  %v731 = vsel %vm354, %v713, 0.0
  %v732 = vadd.f32 %v730, %v731
  %v733 = vsel %vm354, %v714, 0.0
  %v734 = vadd.f32 %v732, %v733
  %v735 = vsel %vm354, %v715, 0.0
  %v736 = vadd.f32 %v734, %v735
  %v737 = vsel %vm354, %v716, 0.0
  %v738 = vadd.f32 %v736, %v737
  %v739 = vsel %vm354, %v717, 0.0
  %v740 = vadd.f32 %v738, %v739
  %v741 = vsel %vm354, %v718, 0.0
  %v742 = vadd.f32 %v740, %v741
  %v743 = vsel %vm354, %v719, 0.0
  %v744 = vadd.f32 %v742, %v743
  %v745 = vsel %vm354, %v720, 0.0
  %v746 = vadd.f32 %v744, %v745
  %v747 = vsel %vm354, %v721, 0.0
  %v748 = vadd.f32 %v746, %v747
  %v749 = vsel %vm354, %v722, 0.0
  %v750 = vadd.f32 %v748, %v749
  %v751 = vsel %vm354, %v723, 0.0
  %v752 = vadd.f32 %v750, %v751
  %v753 = vsel %vm354, %v724, 0.0
  %v754 = vadd.f32 %v752, %v753
  %v755 = vsel %vm354, %v725, 0.0
  %v756 = vadd.f32 %v754, %v755
  %v757 = vrot.slane %v756, 4
  %v758 = vadd.f32 %v756, %v757
  %v759 = vrot.slane %v758, 2
  %v760 = vadd.f32 %v758, %v759
  %v761 = vrot.slane %v760, 1
  %v762 = vadd.f32 %v760, %v761
  %v763 = vmul.f32 %v710, %v710
  %v764 = vmul.f32 %v711, %v711
  %v765 = vmul.f32 %v712, %v712
  %v766 = vmul.f32 %v713, %v713
  %v767 = vmul.f32 %v714, %v714
  %v768 = vmul.f32 %v715, %v715
  %v769 = vmul.f32 %v716, %v716
  %v770 = vmul.f32 %v717, %v717
  %v771 = vmul.f32 %v718, %v718
  %v772 = vmul.f32 %v719, %v719
  %v773 = vmul.f32 %v720, %v720
  %v774 = vmul.f32 %v721, %v721
  %v775 = vmul.f32 %v722, %v722
  %v776 = vmul.f32 %v723, %v723
  %v777 = vmul.f32 %v724, %v724
  %v778 = vmul.f32 %v725, %v725
  %v779 = vsel %vm354, %v763, 0.0
  %v780 = vsel %vm354, %v764, 0.0
  %v781 = vadd.f32 %v779, %v780
  %v782 = vsel %vm354, %v765, 0.0
  %v783 = vadd.f32 %v781, %v782
  %v784 = vsel %vm354, %v766, 0.0
  %v785 = vadd.f32 %v783, %v784
  %v786 = vsel %vm354, %v767, 0.0
  %v787 = vadd.f32 %v785, %v786
  %v788 = vsel %vm354, %v768, 0.0
  %v789 = vadd.f32 %v787, %v788
  %v790 = vsel %vm354, %v769, 0.0
  %v791 = vadd.f32 %v789, %v790
  %v792 = vsel %vm354, %v770, 0.0
  %v793 = vadd.f32 %v791, %v792
  %v794 = vsel %vm354, %v771, 0.0
  %v795 = vadd.f32 %v793, %v794
  %v796 = vsel %vm354, %v772, 0.0
  %v797 = vadd.f32 %v795, %v796
  %v798 = vsel %vm354, %v773, 0.0
  %v799 = vadd.f32 %v797, %v798
  %v800 = vsel %vm354, %v774, 0.0
  %v801 = vadd.f32 %v799, %v800
  %v802 = vsel %vm354, %v775, 0.0
  %v803 = vadd.f32 %v801, %v802
  %v804 = vsel %vm354, %v776, 0.0
  %v805 = vadd.f32 %v803, %v804
  %v806 = vsel %vm354, %v777, 0.0
  %v807 = vadd.f32 %v805, %v806
  %v808 = vsel %vm354, %v778, 0.0
  %v809 = vadd.f32 %v807, %v808
  %v810 = vrot.slane %v809, 4
  %v811 = vadd.f32 %v809, %v810
  %v812 = vrot.slane %v811, 2
  %v813 = vadd.f32 %v811, %v812
  %v814 = vrot.slane %v813, 1
  %v815 = vadd.f32 %v813, %v814
  %v816 = vsel %vm445, %v762, %v815
  %817 = vst.msk [vmem:[%s9] sm:$0x3] %vm447, %v816
  // Predicated region
  $region26: #{xblock_forward.8} parent=0 // pred_check
    _
  $region27: #{xblock_forward.8} parent=0 // pred_check_branch
    %819 = sbr.rel (0) target = $region29
  $region28: #{xblock_forward.8} parent=0 // pred_region
    _
  $region29: #{xblock_forward.8} parent=0 // pred_fallthru
    _
  // Predicated region
  $region30: #{xblock_forward.8} parent=0 // pred_check
    _
  $region31: #{xblock_forward.8} parent=0 // pred_check_branch
    %821 = sbr.rel (0) target = $region33
  $region32: #{xblock_forward.8} parent=0 // pred_region
    _
  $region33: #{xblock_forward.8} parent=0 // pred_fallthru
    _
  // Predicated region
  $region34: #{xblock_forward.8} parent=0 // pred_check
    _
  $region35: #{xblock_forward.8} parent=0 // pred_check_branch
    %823 = sbr.rel (0) target = $region37
  $region36: #{xblock_forward.8} parent=0 // pred_region
    _
  $region37: #{xblock_forward.8} parent=0 // pred_fallthru
    _
  // Predicated region
  $region38: #{xblock_forward.8} parent=0 // pred_check
    _
  $region39: #{xblock_forward.8} parent=0 // pred_check_branch
    %825 = sbr.rel (0) target = $region41
  $region40: #{xblock_forward.8} parent=0 // pred_region
    _
  $region41: #{xblock_forward.8} parent=0 // pred_fallthru
    _
  // Predicated region
  $region42: #{xblock_forward.8} parent=0 // pred_check
    _
  $region43: #{xblock_forward.8} parent=0 // pred_check_branch
    %827 = sbr.rel (0) target = $region45
  $region44: #{xblock_forward.8} parent=0 // pred_region
    _
  $region45: #{xblock_forward.8} parent=0 // pred_fallthru
    _
  // Predicated region
  $region46: #{xblock_forward.8} parent=0 // pred_check
    _
  $region47: #{xblock_forward.8} parent=0 // pred_check_branch
    %829 = sbr.rel (0) target = $region49
  $region48: #{xblock_forward.8} parent=0 // pred_region
    _
  $region49: #{xblock_forward.8} parent=0 // pred_fallthru
    _
  // Predicated region
  $region50: #{xblock_forward.8} parent=0 // pred_check
    _
  $region51: #{xblock_forward.8} parent=0 // pred_check_branch
    %831 = sbr.rel (0) target = $region53
  $region52: #{xblock_forward.8} parent=0 // pred_region
    _
  $region53: #{xblock_forward.8} parent=0 // pred_fallthru
    _
  // Predicated region
  $region54: #{xblock_forward.8} parent=0 // pred_check
    _
  $region55: #{xblock_forward.8} parent=0 // pred_check_branch
    %833 = sbr.rel (0) target = $region57
  $region56: #{xblock_forward.8} parent=0 // pred_region
    _
  $region57: #{xblock_forward.8} parent=0 // pred_fallthru
    _

</llo_original>
